<compile_context>
chip_gen: v7x
topology: tpu7x:2x2x1
jax: 0.10.0
libtpu: 0.0.40
codegen_flags: <defaults>
</compile_context>

<pallas_src>
import math

import numpy as np
import jax
import jax.numpy as jnp
from jax import lax
from jax.experimental import pallas as pl
from jax.experimental.pallas import tpu as pltpu

# Problem sizes (dictated by the module definition).
B = 2          # batch
T = 20         # sequence length (BatchNorm1d(20) channel count)
E = 10         # emb_dim = GRU input_size = GRU output_size = BatchNorm1d(10)
H = 50         # GRU hidden size
M = 16         # meta_dim (free choice)
BN_EPS = 1e-5
BN_SCALE = 1.0 / math.sqrt(1.0 + BN_EPS)   # eval-mode BN, gamma=1, beta=0, mean=0, var=1

# --------------------- packed weight-slab layout (one DMA) --------------------
SLAB_W = 3 * H                      # widest entry (concatenated GRU projections)
_WEIGHT_SPECS = [                   # name -> (rows, cols), all stored (in, out)
    ("w_icat", (E, 3 * H)),         # GRU input proj  [r|z|n]
    ("b_icat", (1, 3 * H)),         # r/z: b_ih+b_hh ; n: b_in only
    ("w_hcat", (H, 3 * H)),         # GRU recurrent proj [r|z|n]
    ("b_hn",   (1, H)),             # b_hn (stays inside r*(...))
    ("w_l2g",  (H, E)),             # BN20-eval * l2_reg * fc fused
    ("b_fcg",  (1, E)),
    ("w_a1",   (E, M)),             # attention1 (x branch)
    ("b_a1",   (1, M)),
    ("w_l2a2", (H, M)),             # attention2 pre-fused past l2_reg/fc: relu(h)@w_l2a2
    ("b_a2f",  (1, M)),             # b_fcg @ w_a2^T + b_a2
    ("w_a3",   (M, 1)),             # attention3 (b_a3 dropped: cancels in softmax)
    ("w_fcm",  (E, E)),             # BN10-eval scaled fc_m
    ("b_fcm",  (1, E)),             # BN10-eval * T * b_fcm
]


def _slab_layout():
    offs, r0 = {}, 0
    for name, (r, _c) in _WEIGHT_SPECS:
        offs[name] = (r0, r, _c)
        r0 += -(-r // 8) * 8        # 8-sublane-align each entry -> clean static slices
    return offs, r0


SLAB_OFFS, SLAB_ROWS = _slab_layout()


# --------------------------------- kernel -------------------------------------
def fusion_kernel(x_ref, slab_ref, o_ref):
    f32 = jnp.float32

    def mm(a, b):
        return jnp.dot(a, b, preferred_element_type=f32)

    def W(name):
        r0, r, c = SLAB_OFFS[name]
        return slab_ref[r0:r0 + r, :c]          # static, 8-aligned slab slice

    x2d = x_ref[...]                            # (T*B, E) flat time-major input

    w_hcat = W("w_hcat")                        # loop-invariant recurrent weights
    b_hn = W("b_hn")

    # Hoisted work that depends only on x: GRU input projections and the
    # attention1 branch.  Both sit off the serial h-chain, so the scheduler can
    # hide them under the latency-bound recurrence.
    gi = mm(x2d, W("w_icat")) + W("b_icat")     # (T*B, 3H) pre-activations [r|z|n]
    a1 = jnp.tanh(mm(x2d, W("w_a1")) + W("b_a1"))   # (T*B, M)

    # ---- GRU recurrence: static Python unroll, h values live in vregs --------
    h = jnp.zeros((B, H), f32)
    hs = []
    for t in range(T):
        gi_t = gi[t * B:(t + 1) * B, :]         # static vreg slice, no VMEM traffic
        gh = mm(h, w_hcat)                      # (B, 3H): only MXU op on the serial chain
        rz = jax.nn.sigmoid(gi_t[:, :2 * H] + gh[:, :2 * H])   # one sigmoid for r and z
        r = rz[:, :H]
        z = rz[:, H:]
        n = jnp.tanh(gi_t[:, 2 * H:] + r * (gh[:, 2 * H:] + b_hn))
        h = (1.0 - z) * n + z * h
        hs.append(h)                            # stays in registers

    hflat = jnp.maximum(jnp.concatenate(hs, axis=0), 0.0)   # (T*B, H): one concat + relu

    # ---- post-GRU MLP + attention (BN20/dropout-eval/l2_reg/fc folded) -------
    s2 = mm(hflat, W("w_l2g")) + W("b_fcg")             # (T*B, E)
    a2 = jnp.tanh(mm(hflat, W("w_l2a2")) + W("b_a2f"))  # attention2, parallel with s2
    attn = jnp.tanh(a1 + a2)                            # (T*B, M)
    logits = mm(attn, W("w_a3"))                        # (T*B, 1); b_a3 dropped

    # ---- softmax-over-T + pooling, collapsed into one reduction --------------
    # fused = s2 + w*(x-s2), w = ex/denom  =>  sum_T fused = sum s2 + (sum ex*(x-s2))/denom
    ex = jnp.exp(logits - jnp.max(logits, axis=0, keepdims=True))   # global shift: cancels per batch
    cat = jnp.concatenate([ex, ex * (x2d - s2), s2], axis=1)        # (T*B, 1+2E)

    # Per-batch sum over T in the flat layout via an in-kernel iota-built
    # (B, T*B) selection matrix (row t*B+b belongs to batch b).
    col = lax.broadcasted_iota(jnp.int32, (B, T * B), 1)
    row = lax.broadcasted_iota(jnp.int32, (B, T * B), 0)
    sel = (col % B == row).astype(f32)
    red = mm(sel, cat)                                  # (B, 1+2E) = [denom | sum ex*(x-s2) | sum s2]

    pooled = red[:, 1 + E:] + red[:, 1:1 + E] * pl.reciprocal(red[:, :1], approx=True)
    o_ref[...] = mm(pooled, W("w_fcm")) + W("b_fcm")    # (B, E); BN10-eval & T*bias folded in


# ------------------------- parameter setup (deterministic) --------------------
def make_params(key):
    ks = jax.random.split(key, 15)

    def unif(k, shape, fan_in):
        b = 1.0 / math.sqrt(fan_in)
        return jax.random.uniform(k, shape, jnp.float32, -b, b)

    return dict(
        # GRU (PyTorch layout: weight_ih (3H, E), weight_hh (3H, H), gate order r,z,n)
        w_ih=unif(ks[0], (3 * H, E), H),
        w_hh=unif(ks[1], (3 * H, H), H),
        b_ih=unif(ks[2], (3 * H,), H),
        b_hh=unif(ks[3], (3 * H,), H),
        # GRUModel post-processing
        w_l2=unif(ks[4], (H, H), H),         # Linear(H, H, bias=False)
        w_fcg=unif(ks[5], (E, H), H),        # Linear(H, E)
        b_fcg=unif(ks[6], (E,), H),
        # muAtt
        w_a1=unif(ks[7], (M, E), E),         # Linear(E, M)
        b_a1=unif(ks[8], (M,), E),
        w_a2=unif(ks[9], (M, E), E),
        b_a2=unif(ks[10], (M,), E),
        w_a3=unif(ks[11], (1, M), M),        # Linear(M, 1)
        b_a3=unif(ks[12], (1,), M),
        w_fcm=unif(ks[13], (E, E), E),       # Linear(E, E)
        b_fcm=unif(ks[14], (E,), E),
    )


def pack_weights(P):
    """Host-side weight fusion + packing into one 8-row-aligned slab."""
    w_ih, w_hh, b_ih, b_hh = P['w_ih'], P['w_hh'], P['b_ih'], P['b_hh']
    ws = {}
    # GRU: concatenated input-side (E, 3H) and recurrent-side (H, 3H) matrices.
    ws['w_icat'] = jnp.concatenate([w_ih[:H].T, w_ih[H:2 * H].T, w_ih[2 * H:].T], axis=1)
    # r/z biases combine b_ih + b_hh (both live inside the sigmoid); n keeps b_in only.
    ws['b_icat'] = jnp.concatenate([b_ih[:2 * H] + b_hh[:2 * H], b_ih[2 * H:]]).reshape(1, 3 * H)
    ws['w_hcat'] = jnp.concatenate([w_hh[:H].T, w_hh[H:2 * H].T, w_hh[2 * H:].T], axis=1)
    ws['b_hn'] = b_hh[2 * H:].reshape(1, H)

    # BN20(eval) + l2_reg + fc fused: relu(c*x) = c*relu(x)  (c = BN_SCALE > 0).
    w_l2g = BN_SCALE * (P['w_l2'].T @ P['w_fcg'].T)          # (H, E)
    ws['w_l2g'] = w_l2g
    ws['b_fcg'] = P['b_fcg'].reshape(1, E)

    # attention1 on x; attention2 pre-fused past the l2_reg/fc layer.
    ws['w_a1'] = P['w_a1'].T
    ws['b_a1'] = P['b_a1'].reshape(1, M)
    ws['w_l2a2'] = w_l2g @ P['w_a2'].T                       # (H, M)
    ws['b_a2f'] = (P['b_fcg'] @ P['w_a2'].T + P['b_a2']).reshape(1, M)
    ws['w_a3'] = P['w_a3'].T                                 # (M, 1); b_a3 dropped

    # pool-before-fc_m + BN10(eval) scale folded into fc_m weights / bias.
    ws['w_fcm'] = BN_SCALE * P['w_fcm'].T                    # (E, E)
    ws['b_fcm'] = (BN_SCALE * T) * P['b_fcm'].reshape(1, E)

    slab = jnp.zeros((SLAB_ROWS, SLAB_W), jnp.float32)
    for name, (r0, r, c) in SLAB_OFFS.items():
        slab = slab.at[r0:r0 + r, :c].set(ws[name])
    return slab


def fusion_forward(x, slab):
    # x: (B, T, E), batch-first like the PyTorch module; flatten to time-major rows.
    # NOTE: grid-less single invocation; at B=2 a batch grid buys nothing, add
    # grid=(B_tiles,) with dimension_semantics=("parallel",) only if batch grows
    # (v7x dual-TC).
    x2d = jnp.transpose(x, (1, 0, 2)).reshape(T * B, E)
    return pl.pallas_call(
        fusion_kernel,
        out_shape=jax.ShapeDtypeStruct((B, E), jnp.float32),
    )(x2d, slab)


# ------------------------- pure-JAX reference ---------------------------------
def fusion_ref(x, P):
    h = jnp.zeros((B, H), jnp.float32)
    hs = []
    for t in range(T):
        xt = x[:, t, :]
        gi = xt @ P['w_ih'].T + P['b_ih']
        gh = h @ P['w_hh'].T + P['b_hh']
        r = jax.nn.sigmoid(gi[:, :H] + gh[:, :H])
        z = jax.nn.sigmoid(gi[:, H:2 * H] + gh[:, H:2 * H])
        n = jnp.tanh(gi[:, 2 * H:] + r * gh[:, 2 * H:])
        h = (1.0 - z) * n + z * h
        hs.append(h)
    out = jnp.stack(hs, axis=1)                              # (B, T, H)
    out3 = jnp.maximum(out * BN_SCALE, 0.0)
    out4 = out3 @ P['w_l2'].T
    s = out4 @ P['w_fcg'].T + P['b_fcg']
    l = x
    a1 = jnp.tanh(l @ P['w_a1'].T + P['b_a1'])
    a2 = jnp.tanh(s @ P['w_a2'].T + P['b_a2'])
    attn = jnp.tanh(a1 + a2)
    logits = (attn @ P['w_a3'].T + P['b_a3'])[..., 0]        # (B, T)
    w = jax.nn.softmax(logits, axis=1)[..., None]
    fused = w * l + (1.0 - w) * s
    outp = fused @ P['w_fcm'].T + P['b_fcm']
    return jnp.sum(outp, axis=1) * BN_SCALE                  # (B, E)


if __name__ == "__main__":
    key = jax.random.PRNGKey(0)
    kx, kp = jax.random.split(key)
    x = jax.random.normal(kx, (B, T, E), jnp.float32)
    P = make_params(kp)
    slab = pack_weights(P)

    out = jax.block_until_ready(fusion_forward(x, slab))
    ref = jax.block_until_ready(fusion_ref(x, P))

    assert out.shape == (B, E)
    np.testing.assert_allclose(np.asarray(out), np.asarray(ref), rtol=2e-2, atol=2e-2)
    print("KERNEL_OK")
</pallas_src>

<mosaic_0001>
module attributes {stable_mosaic.version = 11 : i64} {
  func.func @fusion_kernel(%arg0: memref<40x10xf32, #tpu.memory_space<vmem>>, %arg1: memref<280x150xf32, #tpu.memory_space<vmem>>, %arg2: memref<2x10xf32, #tpu.memory_space<vmem>>) attributes {dimension_semantics = [], scalar_prefetch = 0 : i64, scratch_operands = 0 : i64, tpu.core_type = #tpu.core_type<tc>} {
    %c0 = arith.constant 0 : index
    %c0_0 = arith.constant 0 : index
    %0 = vector.load %arg0[%c0, %c0_0] : memref<40x10xf32, #tpu.memory_space<vmem>>, vector<40x10xf32>
    %c24 = arith.constant 24 : index
    %c0_1 = arith.constant 0 : index
    %1 = vector.load %arg1[%c24, %c0_1] : memref<280x150xf32, #tpu.memory_space<vmem>>, vector<50x150xf32>
    %c80 = arith.constant 80 : index
    %c0_2 = arith.constant 0 : index
    %2 = vector.load %arg1[%c80, %c0_2] : memref<280x150xf32, #tpu.memory_space<vmem>>, vector<1x50xf32>
    %c0_3 = arith.constant 0 : index
    %c0_4 = arith.constant 0 : index
    %3 = vector.load %arg1[%c0_3, %c0_4] : memref<280x150xf32, #tpu.memory_space<vmem>>, vector<10x150xf32>
    %cst = arith.constant dense<0.000000e+00> : vector<40x150xf32>
    %4 = tpu.matmul %0, %3, %cst {dimension_numbers = #tpu.dot_dimension_numbers<[1], [0], [0], [1], [0, 0, 1, 1], [], []>} : vector<40x10xf32>, vector<10x150xf32>, vector<40x150xf32> -> vector<40x150xf32>
    %c16 = arith.constant 16 : index
    %c0_5 = arith.constant 0 : index
    %5 = vector.load %arg1[%c16, %c0_5] : memref<280x150xf32, #tpu.memory_space<vmem>>, vector<1x150xf32>
    %6 = vector.broadcast %5 : vector<1x150xf32> to vector<40x150xf32>
    %7 = arith.addf %4, %6 : vector<40x150xf32>
    %c152 = arith.constant 152 : index
    %c0_6 = arith.constant 0 : index
    %8 = vector.load %arg1[%c152, %c0_6] : memref<280x150xf32, #tpu.memory_space<vmem>>, vector<10x16xf32>
    %cst_7 = arith.constant dense<0.000000e+00> : vector<40x16xf32>
    %9 = tpu.matmul %0, %8, %cst_7 {dimension_numbers = #tpu.dot_dimension_numbers<[1], [0], [0], [1], [0, 0, 1, 1], [], []>} : vector<40x10xf32>, vector<10x16xf32>, vector<40x16xf32> -> vector<40x16xf32>
    %c168 = arith.constant 168 : index
    %c0_8 = arith.constant 0 : index
    %10 = vector.load %arg1[%c168, %c0_8] : memref<280x150xf32, #tpu.memory_space<vmem>>, vector<1x16xf32>
    %11 = vector.broadcast %10 : vector<1x16xf32> to vector<40x16xf32>
    %12 = arith.addf %9, %11 : vector<40x16xf32>
    %13 = math.tanh %12 : vector<40x16xf32>
    %cst_9 = arith.constant 0.000000e+00 : f32
    %14 = vector.broadcast %cst_9 : f32 to vector<2x50xf32>
    %15 = vector.extract_strided_slice %7 {offsets = [0, 0], sizes = [2, 150], strides = [1, 1]} : vector<40x150xf32> to vector<2x150xf32>
    %cst_10 = arith.constant dense<0.000000e+00> : vector<2x150xf32>
    %16 = tpu.matmul %14, %1, %cst_10 {dimension_numbers = #tpu.dot_dimension_numbers<[1], [0], [0], [1], [0, 0, 1, 1], [], []>} : vector<2x50xf32>, vector<50x150xf32>, vector<2x150xf32> -> vector<2x150xf32>
    %17 = vector.extract_strided_slice %15 {offsets = [0, 0], sizes = [2, 100], strides = [1, 1]} : vector<2x150xf32> to vector<2x100xf32>
    %18 = vector.extract_strided_slice %16 {offsets = [0, 0], sizes = [2, 100], strides = [1, 1]} : vector<2x150xf32> to vector<2x100xf32>
    %19 = arith.addf %17, %18 : vector<2x100xf32>
    %20 = arith.negf %19 : vector<2x100xf32>
    %21 = math.exp %20 : vector<2x100xf32>
    %cst_11 = arith.constant 1.000000e+00 : f32
    %22 = vector.broadcast %cst_11 : f32 to vector<2x100xf32>
    %23 = arith.addf %22, %21 : vector<2x100xf32>
    %24 = arith.divf %22, %23 : vector<2x100xf32>
    %25 = vector.extract_strided_slice %24 {offsets = [0, 0], sizes = [2, 50], strides = [1, 1]} : vector<2x100xf32> to vector<2x50xf32>
    %26 = vector.extract_strided_slice %24 {offsets = [0, 50], sizes = [2, 50], strides = [1, 1]} : vector<2x100xf32> to vector<2x50xf32>
    %27 = vector.extract_strided_slice %15 {offsets = [0, 100], sizes = [2, 50], strides = [1, 1]} : vector<2x150xf32> to vector<2x50xf32>
    %28 = vector.extract_strided_slice %16 {offsets = [0, 100], sizes = [2, 50], strides = [1, 1]} : vector<2x150xf32> to vector<2x50xf32>
    %29 = vector.broadcast %2 : vector<1x50xf32> to vector<2x50xf32>
    %30 = arith.addf %28, %29 : vector<2x50xf32>
    %31 = arith.mulf %25, %30 : vector<2x50xf32>
    %32 = arith.addf %27, %31 : vector<2x50xf32>
    %33 = math.tanh %32 : vector<2x50xf32>
    %cst_12 = arith.constant 1.000000e+00 : f32
    %34 = vector.broadcast %cst_12 : f32 to vector<2x50xf32>
    %35 = arith.subf %34, %26 : vector<2x50xf32>
    %36 = arith.mulf %35, %33 : vector<2x50xf32>
    %37 = arith.mulf %26, %14 : vector<2x50xf32>
    %38 = arith.addf %36, %37 : vector<2x50xf32>
    %39 = vector.extract_strided_slice %7 {offsets = [2, 0], sizes = [2, 150], strides = [1, 1]} : vector<40x150xf32> to vector<2x150xf32>
    %cst_13 = arith.constant dense<0.000000e+00> : vector<2x150xf32>
    %40 = tpu.matmul %38, %1, %cst_13 {dimension_numbers = #tpu.dot_dimension_numbers<[1], [0], [0], [1], [0, 0, 1, 1], [], []>} : vector<2x50xf32>, vector<50x150xf32>, vector<2x150xf32> -> vector<2x150xf32>
    %41 = vector.extract_strided_slice %39 {offsets = [0, 0], sizes = [2, 100], strides = [1, 1]} : vector<2x150xf32> to vector<2x100xf32>
    %42 = vector.extract_strided_slice %40 {offsets = [0, 0], sizes = [2, 100], strides = [1, 1]} : vector<2x150xf32> to vector<2x100xf32>
    %43 = arith.addf %41, %42 : vector<2x100xf32>
    %44 = arith.negf %43 : vector<2x100xf32>
    %45 = math.exp %44 : vector<2x100xf32>
    %cst_14 = arith.constant 1.000000e+00 : f32
    %46 = vector.broadcast %cst_14 : f32 to vector<2x100xf32>
    %47 = arith.addf %46, %45 : vector<2x100xf32>
    %48 = arith.divf %46, %47 : vector<2x100xf32>
    %49 = vector.extract_strided_slice %48 {offsets = [0, 0], sizes = [2, 50], strides = [1, 1]} : vector<2x100xf32> to vector<2x50xf32>
    %50 = vector.extract_strided_slice %48 {offsets = [0, 50], sizes = [2, 50], strides = [1, 1]} : vector<2x100xf32> to vector<2x50xf32>
    %51 = vector.extract_strided_slice %39 {offsets = [0, 100], sizes = [2, 50], strides = [1, 1]} : vector<2x150xf32> to vector<2x50xf32>
    %52 = vector.extract_strided_slice %40 {offsets = [0, 100], sizes = [2, 50], strides = [1, 1]} : vector<2x150xf32> to vector<2x50xf32>
    %53 = vector.broadcast %2 : vector<1x50xf32> to vector<2x50xf32>
    %54 = arith.addf %52, %53 : vector<2x50xf32>
    %55 = arith.mulf %49, %54 : vector<2x50xf32>
    %56 = arith.addf %51, %55 : vector<2x50xf32>
    %57 = math.tanh %56 : vector<2x50xf32>
    %cst_15 = arith.constant 1.000000e+00 : f32
    %58 = vector.broadcast %cst_15 : f32 to vector<2x50xf32>
    %59 = arith.subf %58, %50 : vector<2x50xf32>
    %60 = arith.mulf %59, %57 : vector<2x50xf32>
    %61 = arith.mulf %50, %38 : vector<2x50xf32>
    %62 = arith.addf %60, %61 : vector<2x50xf32>
    %63 = vector.extract_strided_slice %7 {offsets = [4, 0], sizes = [2, 150], strides = [1, 1]} : vector<40x150xf32> to vector<2x150xf32>
    %cst_16 = arith.constant dense<0.000000e+00> : vector<2x150xf32>
    %64 = tpu.matmul %62, %1, %cst_16 {dimension_numbers = #tpu.dot_dimension_numbers<[1], [0], [0], [1], [0, 0, 1, 1], [], []>} : vector<2x50xf32>, vector<50x150xf32>, vector<2x150xf32> -> vector<2x150xf32>
    %65 = vector.extract_strided_slice %63 {offsets = [0, 0], sizes = [2, 100], strides = [1, 1]} : vector<2x150xf32> to vector<2x100xf32>
    %66 = vector.extract_strided_slice %64 {offsets = [0, 0], sizes = [2, 100], strides = [1, 1]} : vector<2x150xf32> to vector<2x100xf32>
    %67 = arith.addf %65, %66 : vector<2x100xf32>
    %68 = arith.negf %67 : vector<2x100xf32>
    %69 = math.exp %68 : vector<2x100xf32>
    %cst_17 = arith.constant 1.000000e+00 : f32
    %70 = vector.broadcast %cst_17 : f32 to vector<2x100xf32>
    %71 = arith.addf %70, %69 : vector<2x100xf32>
    %72 = arith.divf %70, %71 : vector<2x100xf32>
    %73 = vector.extract_strided_slice %72 {offsets = [0, 0], sizes = [2, 50], strides = [1, 1]} : vector<2x100xf32> to vector<2x50xf32>
    %74 = vector.extract_strided_slice %72 {offsets = [0, 50], sizes = [2, 50], strides = [1, 1]} : vector<2x100xf32> to vector<2x50xf32>
    %75 = vector.extract_strided_slice %63 {offsets = [0, 100], sizes = [2, 50], strides = [1, 1]} : vector<2x150xf32> to vector<2x50xf32>
    %76 = vector.extract_strided_slice %64 {offsets = [0, 100], sizes = [2, 50], strides = [1, 1]} : vector<2x150xf32> to vector<2x50xf32>
    %77 = vector.broadcast %2 : vector<1x50xf32> to vector<2x50xf32>
    %78 = arith.addf %76, %77 : vector<2x50xf32>
    %79 = arith.mulf %73, %78 : vector<2x50xf32>
    %80 = arith.addf %75, %79 : vector<2x50xf32>
    %81 = math.tanh %80 : vector<2x50xf32>
    %cst_18 = arith.constant 1.000000e+00 : f32
    %82 = vector.broadcast %cst_18 : f32 to vector<2x50xf32>
    %83 = arith.subf %82, %74 : vector<2x50xf32>
    %84 = arith.mulf %83, %81 : vector<2x50xf32>
    %85 = arith.mulf %74, %62 : vector<2x50xf32>
    %86 = arith.addf %84, %85 : vector<2x50xf32>
    %87 = vector.extract_strided_slice %7 {offsets = [6, 0], sizes = [2, 150], strides = [1, 1]} : vector<40x150xf32> to vector<2x150xf32>
    %cst_19 = arith.constant dense<0.000000e+00> : vector<2x150xf32>
    %88 = tpu.matmul %86, %1, %cst_19 {dimension_numbers = #tpu.dot_dimension_numbers<[1], [0], [0], [1], [0, 0, 1, 1], [], []>} : vector<2x50xf32>, vector<50x150xf32>, vector<2x150xf32> -> vector<2x150xf32>
    %89 = vector.extract_strided_slice %87 {offsets = [0, 0], sizes = [2, 100], strides = [1, 1]} : vector<2x150xf32> to vector<2x100xf32>
    %90 = vector.extract_strided_slice %88 {offsets = [0, 0], sizes = [2, 100], strides = [1, 1]} : vector<2x150xf32> to vector<2x100xf32>
    %91 = arith.addf %89, %90 : vector<2x100xf32>
    %92 = arith.negf %91 : vector<2x100xf32>
    %93 = math.exp %92 : vector<2x100xf32>
    %cst_20 = arith.constant 1.000000e+00 : f32
    %94 = vector.broadcast %cst_20 : f32 to vector<2x100xf32>
    %95 = arith.addf %94, %93 : vector<2x100xf32>
    %96 = arith.divf %94, %95 : vector<2x100xf32>
    %97 = vector.extract_strided_slice %96 {offsets = [0, 0], sizes = [2, 50], strides = [1, 1]} : vector<2x100xf32> to vector<2x50xf32>
    %98 = vector.extract_strided_slice %96 {offsets = [0, 50], sizes = [2, 50], strides = [1, 1]} : vector<2x100xf32> to vector<2x50xf32>
    %99 = vector.extract_strided_slice %87 {offsets = [0, 100], sizes = [2, 50], strides = [1, 1]} : vector<2x150xf32> to vector<2x50xf32>
    %100 = vector.extract_strided_slice %88 {offsets = [0, 100], sizes = [2, 50], strides = [1, 1]} : vector<2x150xf32> to vector<2x50xf32>
    %101 = vector.broadcast %2 : vector<1x50xf32> to vector<2x50xf32>
    %102 = arith.addf %100, %101 : vector<2x50xf32>
    %103 = arith.mulf %97, %102 : vector<2x50xf32>
    %104 = arith.addf %99, %103 : vector<2x50xf32>
    %105 = math.tanh %104 : vector<2x50xf32>
    %cst_21 = arith.constant 1.000000e+00 : f32
    %106 = vector.broadcast %cst_21 : f32 to vector<2x50xf32>
    %107 = arith.subf %106, %98 : vector<2x50xf32>
    %108 = arith.mulf %107, %105 : vector<2x50xf32>
    %109 = arith.mulf %98, %86 : vector<2x50xf32>
    %110 = arith.addf %108, %109 : vector<2x50xf32>
    %111 = vector.extract_strided_slice %7 {offsets = [8, 0], sizes = [2, 150], strides = [1, 1]} : vector<40x150xf32> to vector<2x150xf32>
    %cst_22 = arith.constant dense<0.000000e+00> : vector<2x150xf32>
    %112 = tpu.matmul %110, %1, %cst_22 {dimension_numbers = #tpu.dot_dimension_numbers<[1], [0], [0], [1], [0, 0, 1, 1], [], []>} : vector<2x50xf32>, vector<50x150xf32>, vector<2x150xf32> -> vector<2x150xf32>
    %113 = vector.extract_strided_slice %111 {offsets = [0, 0], sizes = [2, 100], strides = [1, 1]} : vector<2x150xf32> to vector<2x100xf32>
    %114 = vector.extract_strided_slice %112 {offsets = [0, 0], sizes = [2, 100], strides = [1, 1]} : vector<2x150xf32> to vector<2x100xf32>
    %115 = arith.addf %113, %114 : vector<2x100xf32>
    %116 = arith.negf %115 : vector<2x100xf32>
    %117 = math.exp %116 : vector<2x100xf32>
    %cst_23 = arith.constant 1.000000e+00 : f32
    %118 = vector.broadcast %cst_23 : f32 to vector<2x100xf32>
    %119 = arith.addf %118, %117 : vector<2x100xf32>
    %120 = arith.divf %118, %119 : vector<2x100xf32>
    %121 = vector.extract_strided_slice %120 {offsets = [0, 0], sizes = [2, 50], strides = [1, 1]} : vector<2x100xf32> to vector<2x50xf32>
    %122 = vector.extract_strided_slice %120 {offsets = [0, 50], sizes = [2, 50], strides = [1, 1]} : vector<2x100xf32> to vector<2x50xf32>
    %123 = vector.extract_strided_slice %111 {offsets = [0, 100], sizes = [2, 50], strides = [1, 1]} : vector<2x150xf32> to vector<2x50xf32>
    %124 = vector.extract_strided_slice %112 {offsets = [0, 100], sizes = [2, 50], strides = [1, 1]} : vector<2x150xf32> to vector<2x50xf32>
    %125 = vector.broadcast %2 : vector<1x50xf32> to vector<2x50xf32>
    %126 = arith.addf %124, %125 : vector<2x50xf32>
    %127 = arith.mulf %121, %126 : vector<2x50xf32>
    %128 = arith.addf %123, %127 : vector<2x50xf32>
    %129 = math.tanh %128 : vector<2x50xf32>
    %cst_24 = arith.constant 1.000000e+00 : f32
    %130 = vector.broadcast %cst_24 : f32 to vector<2x50xf32>
    %131 = arith.subf %130, %122 : vector<2x50xf32>
    %132 = arith.mulf %131, %129 : vector<2x50xf32>
    %133 = arith.mulf %122, %110 : vector<2x50xf32>
    %134 = arith.addf %132, %133 : vector<2x50xf32>
    %135 = vector.extract_strided_slice %7 {offsets = [10, 0], sizes = [2, 150], strides = [1, 1]} : vector<40x150xf32> to vector<2x150xf32>
    %cst_25 = arith.constant dense<0.000000e+00> : vector<2x150xf32>
    %136 = tpu.matmul %134, %1, %cst_25 {dimension_numbers = #tpu.dot_dimension_numbers<[1], [0], [0], [1], [0, 0, 1, 1], [], []>} : vector<2x50xf32>, vector<50x150xf32>, vector<2x150xf32> -> vector<2x150xf32>
    %137 = vector.extract_strided_slice %135 {offsets = [0, 0], sizes = [2, 100], strides = [1, 1]} : vector<2x150xf32> to vector<2x100xf32>
    %138 = vector.extract_strided_slice %136 {offsets = [0, 0], sizes = [2, 100], strides = [1, 1]} : vector<2x150xf32> to vector<2x100xf32>
    %139 = arith.addf %137, %138 : vector<2x100xf32>
    %140 = arith.negf %139 : vector<2x100xf32>
    %141 = math.exp %140 : vector<2x100xf32>
    %cst_26 = arith.constant 1.000000e+00 : f32
    %142 = vector.broadcast %cst_26 : f32 to vector<2x100xf32>
    %143 = arith.addf %142, %141 : vector<2x100xf32>
    %144 = arith.divf %142, %143 : vector<2x100xf32>
    %145 = vector.extract_strided_slice %144 {offsets = [0, 0], sizes = [2, 50], strides = [1, 1]} : vector<2x100xf32> to vector<2x50xf32>
    %146 = vector.extract_strided_slice %144 {offsets = [0, 50], sizes = [2, 50], strides = [1, 1]} : vector<2x100xf32> to vector<2x50xf32>
    %147 = vector.extract_strided_slice %135 {offsets = [0, 100], sizes = [2, 50], strides = [1, 1]} : vector<2x150xf32> to vector<2x50xf32>
    %148 = vector.extract_strided_slice %136 {offsets = [0, 100], sizes = [2, 50], strides = [1, 1]} : vector<2x150xf32> to vector<2x50xf32>
    %149 = vector.broadcast %2 : vector<1x50xf32> to vector<2x50xf32>
    %150 = arith.addf %148, %149 : vector<2x50xf32>
    %151 = arith.mulf %145, %150 : vector<2x50xf32>
    %152 = arith.addf %147, %151 : vector<2x50xf32>
    %153 = math.tanh %152 : vector<2x50xf32>
    %cst_27 = arith.constant 1.000000e+00 : f32
    %154 = vector.broadcast %cst_27 : f32 to vector<2x50xf32>
    %155 = arith.subf %154, %146 : vector<2x50xf32>
    %156 = arith.mulf %155, %153 : vector<2x50xf32>
    %157 = arith.mulf %146, %134 : vector<2x50xf32>
    %158 = arith.addf %156, %157 : vector<2x50xf32>
    %159 = vector.extract_strided_slice %7 {offsets = [12, 0], sizes = [2, 150], strides = [1, 1]} : vector<40x150xf32> to vector<2x150xf32>
    %cst_28 = arith.constant dense<0.000000e+00> : vector<2x150xf32>
    %160 = tpu.matmul %158, %1, %cst_28 {dimension_numbers = #tpu.dot_dimension_numbers<[1], [0], [0], [1], [0, 0, 1, 1], [], []>} : vector<2x50xf32>, vector<50x150xf32>, vector<2x150xf32> -> vector<2x150xf32>
    %161 = vector.extract_strided_slice %159 {offsets = [0, 0], sizes = [2, 100], strides = [1, 1]} : vector<2x150xf32> to vector<2x100xf32>
    %162 = vector.extract_strided_slice %160 {offsets = [0, 0], sizes = [2, 100], strides = [1, 1]} : vector<2x150xf32> to vector<2x100xf32>
    %163 = arith.addf %161, %162 : vector<2x100xf32>
    %164 = arith.negf %163 : vector<2x100xf32>
    %165 = math.exp %164 : vector<2x100xf32>
    %cst_29 = arith.constant 1.000000e+00 : f32
    %166 = vector.broadcast %cst_29 : f32 to vector<2x100xf32>
    %167 = arith.addf %166, %165 : vector<2x100xf32>
    %168 = arith.divf %166, %167 : vector<2x100xf32>
    %169 = vector.extract_strided_slice %168 {offsets = [0, 0], sizes = [2, 50], strides = [1, 1]} : vector<2x100xf32> to vector<2x50xf32>
    %170 = vector.extract_strided_slice %168 {offsets = [0, 50], sizes = [2, 50], strides = [1, 1]} : vector<2x100xf32> to vector<2x50xf32>
    %171 = vector.extract_strided_slice %159 {offsets = [0, 100], sizes = [2, 50], strides = [1, 1]} : vector<2x150xf32> to vector<2x50xf32>
    %172 = vector.extract_strided_slice %160 {offsets = [0, 100], sizes = [2, 50], strides = [1, 1]} : vector<2x150xf32> to vector<2x50xf32>
    %173 = vector.broadcast %2 : vector<1x50xf32> to vector<2x50xf32>
    %174 = arith.addf %172, %173 : vector<2x50xf32>
    %175 = arith.mulf %169, %174 : vector<2x50xf32>
    %176 = arith.addf %171, %175 : vector<2x50xf32>
    %177 = math.tanh %176 : vector<2x50xf32>
    %cst_30 = arith.constant 1.000000e+00 : f32
    %178 = vector.broadcast %cst_30 : f32 to vector<2x50xf32>
    %179 = arith.subf %178, %170 : vector<2x50xf32>
    %180 = arith.mulf %179, %177 : vector<2x50xf32>
    %181 = arith.mulf %170, %158 : vector<2x50xf32>
    %182 = arith.addf %180, %181 : vector<2x50xf32>
    %183 = vector.extract_strided_slice %7 {offsets = [14, 0], sizes = [2, 150], strides = [1, 1]} : vector<40x150xf32> to vector<2x150xf32>
    %cst_31 = arith.constant dense<0.000000e+00> : vector<2x150xf32>
    %184 = tpu.matmul %182, %1, %cst_31 {dimension_numbers = #tpu.dot_dimension_numbers<[1], [0], [0], [1], [0, 0, 1, 1], [], []>} : vector<2x50xf32>, vector<50x150xf32>, vector<2x150xf32> -> vector<2x150xf32>
    %185 = vector.extract_strided_slice %183 {offsets = [0, 0], sizes = [2, 100], strides = [1, 1]} : vector<2x150xf32> to vector<2x100xf32>
    %186 = vector.extract_strided_slice %184 {offsets = [0, 0], sizes = [2, 100], strides = [1, 1]} : vector<2x150xf32> to vector<2x100xf32>
    %187 = arith.addf %185, %186 : vector<2x100xf32>
    %188 = arith.negf %187 : vector<2x100xf32>
    %189 = math.exp %188 : vector<2x100xf32>
    %cst_32 = arith.constant 1.000000e+00 : f32
    %190 = vector.broadcast %cst_32 : f32 to vector<2x100xf32>
    %191 = arith.addf %190, %189 : vector<2x100xf32>
    %192 = arith.divf %190, %191 : vector<2x100xf32>
    %193 = vector.extract_strided_slice %192 {offsets = [0, 0], sizes = [2, 50], strides = [1, 1]} : vector<2x100xf32> to vector<2x50xf32>
    %194 = vector.extract_strided_slice %192 {offsets = [0, 50], sizes = [2, 50], strides = [1, 1]} : vector<2x100xf32> to vector<2x50xf32>
    %195 = vector.extract_strided_slice %183 {offsets = [0, 100], sizes = [2, 50], strides = [1, 1]} : vector<2x150xf32> to vector<2x50xf32>
    %196 = vector.extract_strided_slice %184 {offsets = [0, 100], sizes = [2, 50], strides = [1, 1]} : vector<2x150xf32> to vector<2x50xf32>
    %197 = vector.broadcast %2 : vector<1x50xf32> to vector<2x50xf32>
    %198 = arith.addf %196, %197 : vector<2x50xf32>
    %199 = arith.mulf %193, %198 : vector<2x50xf32>
    %200 = arith.addf %195, %199 : vector<2x50xf32>
    %201 = math.tanh %200 : vector<2x50xf32>
    %cst_33 = arith.constant 1.000000e+00 : f32
    %202 = vector.broadcast %cst_33 : f32 to vector<2x50xf32>
    %203 = arith.subf %202, %194 : vector<2x50xf32>
    %204 = arith.mulf %203, %201 : vector<2x50xf32>
    %205 = arith.mulf %194, %182 : vector<2x50xf32>
    %206 = arith.addf %204, %205 : vector<2x50xf32>
    %207 = vector.extract_strided_slice %7 {offsets = [16, 0], sizes = [2, 150], strides = [1, 1]} : vector<40x150xf32> to vector<2x150xf32>
    %cst_34 = arith.constant dense<0.000000e+00> : vector<2x150xf32>
    %208 = tpu.matmul %206, %1, %cst_34 {dimension_numbers = #tpu.dot_dimension_numbers<[1], [0], [0], [1], [0, 0, 1, 1], [], []>} : vector<2x50xf32>, vector<50x150xf32>, vector<2x150xf32> -> vector<2x150xf32>
    %209 = vector.extract_strided_slice %207 {offsets = [0, 0], sizes = [2, 100], strides = [1, 1]} : vector<2x150xf32> to vector<2x100xf32>
    %210 = vector.extract_strided_slice %208 {offsets = [0, 0], sizes = [2, 100], strides = [1, 1]} : vector<2x150xf32> to vector<2x100xf32>
    %211 = arith.addf %209, %210 : vector<2x100xf32>
    %212 = arith.negf %211 : vector<2x100xf32>
    %213 = math.exp %212 : vector<2x100xf32>
    %cst_35 = arith.constant 1.000000e+00 : f32
    %214 = vector.broadcast %cst_35 : f32 to vector<2x100xf32>
    %215 = arith.addf %214, %213 : vector<2x100xf32>
    %216 = arith.divf %214, %215 : vector<2x100xf32>
    %217 = vector.extract_strided_slice %216 {offsets = [0, 0], sizes = [2, 50], strides = [1, 1]} : vector<2x100xf32> to vector<2x50xf32>
    %218 = vector.extract_strided_slice %216 {offsets = [0, 50], sizes = [2, 50], strides = [1, 1]} : vector<2x100xf32> to vector<2x50xf32>
    %219 = vector.extract_strided_slice %207 {offsets = [0, 100], sizes = [2, 50], strides = [1, 1]} : vector<2x150xf32> to vector<2x50xf32>
    %220 = vector.extract_strided_slice %208 {offsets = [0, 100], sizes = [2, 50], strides = [1, 1]} : vector<2x150xf32> to vector<2x50xf32>
    %221 = vector.broadcast %2 : vector<1x50xf32> to vector<2x50xf32>
    %222 = arith.addf %220, %221 : vector<2x50xf32>
    %223 = arith.mulf %217, %222 : vector<2x50xf32>
    %224 = arith.addf %219, %223 : vector<2x50xf32>
    %225 = math.tanh %224 : vector<2x50xf32>
    %cst_36 = arith.constant 1.000000e+00 : f32
    %226 = vector.broadcast %cst_36 : f32 to vector<2x50xf32>
    %227 = arith.subf %226, %218 : vector<2x50xf32>
    %228 = arith.mulf %227, %225 : vector<2x50xf32>
    %229 = arith.mulf %218, %206 : vector<2x50xf32>
    %230 = arith.addf %228, %229 : vector<2x50xf32>
    %231 = vector.extract_strided_slice %7 {offsets = [18, 0], sizes = [2, 150], strides = [1, 1]} : vector<40x150xf32> to vector<2x150xf32>
    %cst_37 = arith.constant dense<0.000000e+00> : vector<2x150xf32>
    %232 = tpu.matmul %230, %1, %cst_37 {dimension_numbers = #tpu.dot_dimension_numbers<[1], [0], [0], [1], [0, 0, 1, 1], [], []>} : vector<2x50xf32>, vector<50x150xf32>, vector<2x150xf32> -> vector<2x150xf32>
    %233 = vector.extract_strided_slice %231 {offsets = [0, 0], sizes = [2, 100], strides = [1, 1]} : vector<2x150xf32> to vector<2x100xf32>
    %234 = vector.extract_strided_slice %232 {offsets = [0, 0], sizes = [2, 100], strides = [1, 1]} : vector<2x150xf32> to vector<2x100xf32>
    %235 = arith.addf %233, %234 : vector<2x100xf32>
    %236 = arith.negf %235 : vector<2x100xf32>
    %237 = math.exp %236 : vector<2x100xf32>
    %cst_38 = arith.constant 1.000000e+00 : f32
    %238 = vector.broadcast %cst_38 : f32 to vector<2x100xf32>
    %239 = arith.addf %238, %237 : vector<2x100xf32>
    %240 = arith.divf %238, %239 : vector<2x100xf32>
    %241 = vector.extract_strided_slice %240 {offsets = [0, 0], sizes = [2, 50], strides = [1, 1]} : vector<2x100xf32> to vector<2x50xf32>
    %242 = vector.extract_strided_slice %240 {offsets = [0, 50], sizes = [2, 50], strides = [1, 1]} : vector<2x100xf32> to vector<2x50xf32>
    %243 = vector.extract_strided_slice %231 {offsets = [0, 100], sizes = [2, 50], strides = [1, 1]} : vector<2x150xf32> to vector<2x50xf32>
    %244 = vector.extract_strided_slice %232 {offsets = [0, 100], sizes = [2, 50], strides = [1, 1]} : vector<2x150xf32> to vector<2x50xf32>
    %245 = vector.broadcast %2 : vector<1x50xf32> to vector<2x50xf32>
    %246 = arith.addf %244, %245 : vector<2x50xf32>
    %247 = arith.mulf %241, %246 : vector<2x50xf32>
    %248 = arith.addf %243, %247 : vector<2x50xf32>
    %249 = math.tanh %248 : vector<2x50xf32>
    %cst_39 = arith.constant 1.000000e+00 : f32
    %250 = vector.broadcast %cst_39 : f32 to vector<2x50xf32>
    %251 = arith.subf %250, %242 : vector<2x50xf32>
    %252 = arith.mulf %251, %249 : vector<2x50xf32>
    %253 = arith.mulf %242, %230 : vector<2x50xf32>
    %254 = arith.addf %252, %253 : vector<2x50xf32>
    %255 = vector.extract_strided_slice %7 {offsets = [20, 0], sizes = [2, 150], strides = [1, 1]} : vector<40x150xf32> to vector<2x150xf32>
    %cst_40 = arith.constant dense<0.000000e+00> : vector<2x150xf32>
    %256 = tpu.matmul %254, %1, %cst_40 {dimension_numbers = #tpu.dot_dimension_numbers<[1], [0], [0], [1], [0, 0, 1, 1], [], []>} : vector<2x50xf32>, vector<50x150xf32>, vector<2x150xf32> -> vector<2x150xf32>
    %257 = vector.extract_strided_slice %255 {offsets = [0, 0], sizes = [2, 100], strides = [1, 1]} : vector<2x150xf32> to vector<2x100xf32>
    %258 = vector.extract_strided_slice %256 {offsets = [0, 0], sizes = [2, 100], strides = [1, 1]} : vector<2x150xf32> to vector<2x100xf32>
    %259 = arith.addf %257, %258 : vector<2x100xf32>
    %260 = arith.negf %259 : vector<2x100xf32>
    %261 = math.exp %260 : vector<2x100xf32>
    %cst_41 = arith.constant 1.000000e+00 : f32
    %262 = vector.broadcast %cst_41 : f32 to vector<2x100xf32>
    %263 = arith.addf %262, %261 : vector<2x100xf32>
    %264 = arith.divf %262, %263 : vector<2x100xf32>
    %265 = vector.extract_strided_slice %264 {offsets = [0, 0], sizes = [2, 50], strides = [1, 1]} : vector<2x100xf32> to vector<2x50xf32>
    %266 = vector.extract_strided_slice %264 {offsets = [0, 50], sizes = [2, 50], strides = [1, 1]} : vector<2x100xf32> to vector<2x50xf32>
    %267 = vector.extract_strided_slice %255 {offsets = [0, 100], sizes = [2, 50], strides = [1, 1]} : vector<2x150xf32> to vector<2x50xf32>
    %268 = vector.extract_strided_slice %256 {offsets = [0, 100], sizes = [2, 50], strides = [1, 1]} : vector<2x150xf32> to vector<2x50xf32>
    %269 = vector.broadcast %2 : vector<1x50xf32> to vector<2x50xf32>
    %270 = arith.addf %268, %269 : vector<2x50xf32>
    %271 = arith.mulf %265, %270 : vector<2x50xf32>
    %272 = arith.addf %267, %271 : vector<2x50xf32>
    %273 = math.tanh %272 : vector<2x50xf32>
    %cst_42 = arith.constant 1.000000e+00 : f32
    %274 = vector.broadcast %cst_42 : f32 to vector<2x50xf32>
    %275 = arith.subf %274, %266 : vector<2x50xf32>
    %276 = arith.mulf %275, %273 : vector<2x50xf32>
    %277 = arith.mulf %266, %254 : vector<2x50xf32>
    %278 = arith.addf %276, %277 : vector<2x50xf32>
    %279 = vector.extract_strided_slice %7 {offsets = [22, 0], sizes = [2, 150], strides = [1, 1]} : vector<40x150xf32> to vector<2x150xf32>
    %cst_43 = arith.constant dense<0.000000e+00> : vector<2x150xf32>
    %280 = tpu.matmul %278, %1, %cst_43 {dimension_numbers = #tpu.dot_dimension_numbers<[1], [0], [0], [1], [0, 0, 1, 1], [], []>} : vector<2x50xf32>, vector<50x150xf32>, vector<2x150xf32> -> vector<2x150xf32>
    %281 = vector.extract_strided_slice %279 {offsets = [0, 0], sizes = [2, 100], strides = [1, 1]} : vector<2x150xf32> to vector<2x100xf32>
    %282 = vector.extract_strided_slice %280 {offsets = [0, 0], sizes = [2, 100], strides = [1, 1]} : vector<2x150xf32> to vector<2x100xf32>
    %283 = arith.addf %281, %282 : vector<2x100xf32>
    %284 = arith.negf %283 : vector<2x100xf32>
    %285 = math.exp %284 : vector<2x100xf32>
    %cst_44 = arith.constant 1.000000e+00 : f32
    %286 = vector.broadcast %cst_44 : f32 to vector<2x100xf32>
    %287 = arith.addf %286, %285 : vector<2x100xf32>
    %288 = arith.divf %286, %287 : vector<2x100xf32>
    %289 = vector.extract_strided_slice %288 {offsets = [0, 0], sizes = [2, 50], strides = [1, 1]} : vector<2x100xf32> to vector<2x50xf32>
    %290 = vector.extract_strided_slice %288 {offsets = [0, 50], sizes = [2, 50], strides = [1, 1]} : vector<2x100xf32> to vector<2x50xf32>
    %291 = vector.extract_strided_slice %279 {offsets = [0, 100], sizes = [2, 50], strides = [1, 1]} : vector<2x150xf32> to vector<2x50xf32>
    %292 = vector.extract_strided_slice %280 {offsets = [0, 100], sizes = [2, 50], strides = [1, 1]} : vector<2x150xf32> to vector<2x50xf32>
    %293 = vector.broadcast %2 : vector<1x50xf32> to vector<2x50xf32>
    %294 = arith.addf %292, %293 : vector<2x50xf32>
    %295 = arith.mulf %289, %294 : vector<2x50xf32>
    %296 = arith.addf %291, %295 : vector<2x50xf32>
    %297 = math.tanh %296 : vector<2x50xf32>
    %cst_45 = arith.constant 1.000000e+00 : f32
    %298 = vector.broadcast %cst_45 : f32 to vector<2x50xf32>
    %299 = arith.subf %298, %290 : vector<2x50xf32>
    %300 = arith.mulf %299, %297 : vector<2x50xf32>
    %301 = arith.mulf %290, %278 : vector<2x50xf32>
    %302 = arith.addf %300, %301 : vector<2x50xf32>
    %303 = vector.extract_strided_slice %7 {offsets = [24, 0], sizes = [2, 150], strides = [1, 1]} : vector<40x150xf32> to vector<2x150xf32>
    %cst_46 = arith.constant dense<0.000000e+00> : vector<2x150xf32>
    %304 = tpu.matmul %302, %1, %cst_46 {dimension_numbers = #tpu.dot_dimension_numbers<[1], [0], [0], [1], [0, 0, 1, 1], [], []>} : vector<2x50xf32>, vector<50x150xf32>, vector<2x150xf32> -> vector<2x150xf32>
    %305 = vector.extract_strided_slice %303 {offsets = [0, 0], sizes = [2, 100], strides = [1, 1]} : vector<2x150xf32> to vector<2x100xf32>
    %306 = vector.extract_strided_slice %304 {offsets = [0, 0], sizes = [2, 100], strides = [1, 1]} : vector<2x150xf32> to vector<2x100xf32>
    %307 = arith.addf %305, %306 : vector<2x100xf32>
    %308 = arith.negf %307 : vector<2x100xf32>
    %309 = math.exp %308 : vector<2x100xf32>
    %cst_47 = arith.constant 1.000000e+00 : f32
    %310 = vector.broadcast %cst_47 : f32 to vector<2x100xf32>
    %311 = arith.addf %310, %309 : vector<2x100xf32>
    %312 = arith.divf %310, %311 : vector<2x100xf32>
    %313 = vector.extract_strided_slice %312 {offsets = [0, 0], sizes = [2, 50], strides = [1, 1]} : vector<2x100xf32> to vector<2x50xf32>
    %314 = vector.extract_strided_slice %312 {offsets = [0, 50], sizes = [2, 50], strides = [1, 1]} : vector<2x100xf32> to vector<2x50xf32>
    %315 = vector.extract_strided_slice %303 {offsets = [0, 100], sizes = [2, 50], strides = [1, 1]} : vector<2x150xf32> to vector<2x50xf32>
    %316 = vector.extract_strided_slice %304 {offsets = [0, 100], sizes = [2, 50], strides = [1, 1]} : vector<2x150xf32> to vector<2x50xf32>
    %317 = vector.broadcast %2 : vector<1x50xf32> to vector<2x50xf32>
    %318 = arith.addf %316, %317 : vector<2x50xf32>
    %319 = arith.mulf %313, %318 : vector<2x50xf32>
    %320 = arith.addf %315, %319 : vector<2x50xf32>
    %321 = math.tanh %320 : vector<2x50xf32>
    %cst_48 = arith.constant 1.000000e+00 : f32
    %322 = vector.broadcast %cst_48 : f32 to vector<2x50xf32>
    %323 = arith.subf %322, %314 : vector<2x50xf32>
    %324 = arith.mulf %323, %321 : vector<2x50xf32>
    %325 = arith.mulf %314, %302 : vector<2x50xf32>
    %326 = arith.addf %324, %325 : vector<2x50xf32>
    %327 = vector.extract_strided_slice %7 {offsets = [26, 0], sizes = [2, 150], strides = [1, 1]} : vector<40x150xf32> to vector<2x150xf32>
    %cst_49 = arith.constant dense<0.000000e+00> : vector<2x150xf32>
    %328 = tpu.matmul %326, %1, %cst_49 {dimension_numbers = #tpu.dot_dimension_numbers<[1], [0], [0], [1], [0, 0, 1, 1], [], []>} : vector<2x50xf32>, vector<50x150xf32>, vector<2x150xf32> -> vector<2x150xf32>
    %329 = vector.extract_strided_slice %327 {offsets = [0, 0], sizes = [2, 100], strides = [1, 1]} : vector<2x150xf32> to vector<2x100xf32>
    %330 = vector.extract_strided_slice %328 {offsets = [0, 0], sizes = [2, 100], strides = [1, 1]} : vector<2x150xf32> to vector<2x100xf32>
    %331 = arith.addf %329, %330 : vector<2x100xf32>
    %332 = arith.negf %331 : vector<2x100xf32>
    %333 = math.exp %332 : vector<2x100xf32>
    %cst_50 = arith.constant 1.000000e+00 : f32
    %334 = vector.broadcast %cst_50 : f32 to vector<2x100xf32>
    %335 = arith.addf %334, %333 : vector<2x100xf32>
    %336 = arith.divf %334, %335 : vector<2x100xf32>
    %337 = vector.extract_strided_slice %336 {offsets = [0, 0], sizes = [2, 50], strides = [1, 1]} : vector<2x100xf32> to vector<2x50xf32>
    %338 = vector.extract_strided_slice %336 {offsets = [0, 50], sizes = [2, 50], strides = [1, 1]} : vector<2x100xf32> to vector<2x50xf32>
    %339 = vector.extract_strided_slice %327 {offsets = [0, 100], sizes = [2, 50], strides = [1, 1]} : vector<2x150xf32> to vector<2x50xf32>
    %340 = vector.extract_strided_slice %328 {offsets = [0, 100], sizes = [2, 50], strides = [1, 1]} : vector<2x150xf32> to vector<2x50xf32>
    %341 = vector.broadcast %2 : vector<1x50xf32> to vector<2x50xf32>
    %342 = arith.addf %340, %341 : vector<2x50xf32>
    %343 = arith.mulf %337, %342 : vector<2x50xf32>
    %344 = arith.addf %339, %343 : vector<2x50xf32>
    %345 = math.tanh %344 : vector<2x50xf32>
    %cst_51 = arith.constant 1.000000e+00 : f32
    %346 = vector.broadcast %cst_51 : f32 to vector<2x50xf32>
    %347 = arith.subf %346, %338 : vector<2x50xf32>
    %348 = arith.mulf %347, %345 : vector<2x50xf32>
    %349 = arith.mulf %338, %326 : vector<2x50xf32>
    %350 = arith.addf %348, %349 : vector<2x50xf32>
    %351 = vector.extract_strided_slice %7 {offsets = [28, 0], sizes = [2, 150], strides = [1, 1]} : vector<40x150xf32> to vector<2x150xf32>
    %cst_52 = arith.constant dense<0.000000e+00> : vector<2x150xf32>
    %352 = tpu.matmul %350, %1, %cst_52 {dimension_numbers = #tpu.dot_dimension_numbers<[1], [0], [0], [1], [0, 0, 1, 1], [], []>} : vector<2x50xf32>, vector<50x150xf32>, vector<2x150xf32> -> vector<2x150xf32>
    %353 = vector.extract_strided_slice %351 {offsets = [0, 0], sizes = [2, 100], strides = [1, 1]} : vector<2x150xf32> to vector<2x100xf32>
    %354 = vector.extract_strided_slice %352 {offsets = [0, 0], sizes = [2, 100], strides = [1, 1]} : vector<2x150xf32> to vector<2x100xf32>
    %355 = arith.addf %353, %354 : vector<2x100xf32>
    %356 = arith.negf %355 : vector<2x100xf32>
    %357 = math.exp %356 : vector<2x100xf32>
    %cst_53 = arith.constant 1.000000e+00 : f32
    %358 = vector.broadcast %cst_53 : f32 to vector<2x100xf32>
    %359 = arith.addf %358, %357 : vector<2x100xf32>
    %360 = arith.divf %358, %359 : vector<2x100xf32>
    %361 = vector.extract_strided_slice %360 {offsets = [0, 0], sizes = [2, 50], strides = [1, 1]} : vector<2x100xf32> to vector<2x50xf32>
    %362 = vector.extract_strided_slice %360 {offsets = [0, 50], sizes = [2, 50], strides = [1, 1]} : vector<2x100xf32> to vector<2x50xf32>
    %363 = vector.extract_strided_slice %351 {offsets = [0, 100], sizes = [2, 50], strides = [1, 1]} : vector<2x150xf32> to vector<2x50xf32>
    %364 = vector.extract_strided_slice %352 {offsets = [0, 100], sizes = [2, 50], strides = [1, 1]} : vector<2x150xf32> to vector<2x50xf32>
    %365 = vector.broadcast %2 : vector<1x50xf32> to vector<2x50xf32>
    %366 = arith.addf %364, %365 : vector<2x50xf32>
    %367 = arith.mulf %361, %366 : vector<2x50xf32>
    %368 = arith.addf %363, %367 : vector<2x50xf32>
    %369 = math.tanh %368 : vector<2x50xf32>
    %cst_54 = arith.constant 1.000000e+00 : f32
    %370 = vector.broadcast %cst_54 : f32 to vector<2x50xf32>
    %371 = arith.subf %370, %362 : vector<2x50xf32>
    %372 = arith.mulf %371, %369 : vector<2x50xf32>
    %373 = arith.mulf %362, %350 : vector<2x50xf32>
    %374 = arith.addf %372, %373 : vector<2x50xf32>
    %375 = vector.extract_strided_slice %7 {offsets = [30, 0], sizes = [2, 150], strides = [1, 1]} : vector<40x150xf32> to vector<2x150xf32>
    %cst_55 = arith.constant dense<0.000000e+00> : vector<2x150xf32>
    %376 = tpu.matmul %374, %1, %cst_55 {dimension_numbers = #tpu.dot_dimension_numbers<[1], [0], [0], [1], [0, 0, 1, 1], [], []>} : vector<2x50xf32>, vector<50x150xf32>, vector<2x150xf32> -> vector<2x150xf32>
    %377 = vector.extract_strided_slice %375 {offsets = [0, 0], sizes = [2, 100], strides = [1, 1]} : vector<2x150xf32> to vector<2x100xf32>
    %378 = vector.extract_strided_slice %376 {offsets = [0, 0], sizes = [2, 100], strides = [1, 1]} : vector<2x150xf32> to vector<2x100xf32>
    %379 = arith.addf %377, %378 : vector<2x100xf32>
    %380 = arith.negf %379 : vector<2x100xf32>
    %381 = math.exp %380 : vector<2x100xf32>
    %cst_56 = arith.constant 1.000000e+00 : f32
    %382 = vector.broadcast %cst_56 : f32 to vector<2x100xf32>
    %383 = arith.addf %382, %381 : vector<2x100xf32>
    %384 = arith.divf %382, %383 : vector<2x100xf32>
    %385 = vector.extract_strided_slice %384 {offsets = [0, 0], sizes = [2, 50], strides = [1, 1]} : vector<2x100xf32> to vector<2x50xf32>
    %386 = vector.extract_strided_slice %384 {offsets = [0, 50], sizes = [2, 50], strides = [1, 1]} : vector<2x100xf32> to vector<2x50xf32>
    %387 = vector.extract_strided_slice %375 {offsets = [0, 100], sizes = [2, 50], strides = [1, 1]} : vector<2x150xf32> to vector<2x50xf32>
    %388 = vector.extract_strided_slice %376 {offsets = [0, 100], sizes = [2, 50], strides = [1, 1]} : vector<2x150xf32> to vector<2x50xf32>
    %389 = vector.broadcast %2 : vector<1x50xf32> to vector<2x50xf32>
    %390 = arith.addf %388, %389 : vector<2x50xf32>
    %391 = arith.mulf %385, %390 : vector<2x50xf32>
    %392 = arith.addf %387, %391 : vector<2x50xf32>
    %393 = math.tanh %392 : vector<2x50xf32>
    %cst_57 = arith.constant 1.000000e+00 : f32
    %394 = vector.broadcast %cst_57 : f32 to vector<2x50xf32>
    %395 = arith.subf %394, %386 : vector<2x50xf32>
    %396 = arith.mulf %395, %393 : vector<2x50xf32>
    %397 = arith.mulf %386, %374 : vector<2x50xf32>
    %398 = arith.addf %396, %397 : vector<2x50xf32>
    %399 = vector.extract_strided_slice %7 {offsets = [32, 0], sizes = [2, 150], strides = [1, 1]} : vector<40x150xf32> to vector<2x150xf32>
    %cst_58 = arith.constant dense<0.000000e+00> : vector<2x150xf32>
    %400 = tpu.matmul %398, %1, %cst_58 {dimension_numbers = #tpu.dot_dimension_numbers<[1], [0], [0], [1], [0, 0, 1, 1], [], []>} : vector<2x50xf32>, vector<50x150xf32>, vector<2x150xf32> -> vector<2x150xf32>
    %401 = vector.extract_strided_slice %399 {offsets = [0, 0], sizes = [2, 100], strides = [1, 1]} : vector<2x150xf32> to vector<2x100xf32>
    %402 = vector.extract_strided_slice %400 {offsets = [0, 0], sizes = [2, 100], strides = [1, 1]} : vector<2x150xf32> to vector<2x100xf32>
    %403 = arith.addf %401, %402 : vector<2x100xf32>
    %404 = arith.negf %403 : vector<2x100xf32>
    %405 = math.exp %404 : vector<2x100xf32>
    %cst_59 = arith.constant 1.000000e+00 : f32
    %406 = vector.broadcast %cst_59 : f32 to vector<2x100xf32>
    %407 = arith.addf %406, %405 : vector<2x100xf32>
    %408 = arith.divf %406, %407 : vector<2x100xf32>
    %409 = vector.extract_strided_slice %408 {offsets = [0, 0], sizes = [2, 50], strides = [1, 1]} : vector<2x100xf32> to vector<2x50xf32>
    %410 = vector.extract_strided_slice %408 {offsets = [0, 50], sizes = [2, 50], strides = [1, 1]} : vector<2x100xf32> to vector<2x50xf32>
    %411 = vector.extract_strided_slice %399 {offsets = [0, 100], sizes = [2, 50], strides = [1, 1]} : vector<2x150xf32> to vector<2x50xf32>
    %412 = vector.extract_strided_slice %400 {offsets = [0, 100], sizes = [2, 50], strides = [1, 1]} : vector<2x150xf32> to vector<2x50xf32>
    %413 = vector.broadcast %2 : vector<1x50xf32> to vector<2x50xf32>
    %414 = arith.addf %412, %413 : vector<2x50xf32>
    %415 = arith.mulf %409, %414 : vector<2x50xf32>
    %416 = arith.addf %411, %415 : vector<2x50xf32>
    %417 = math.tanh %416 : vector<2x50xf32>
    %cst_60 = arith.constant 1.000000e+00 : f32
    %418 = vector.broadcast %cst_60 : f32 to vector<2x50xf32>
    %419 = arith.subf %418, %410 : vector<2x50xf32>
    %420 = arith.mulf %419, %417 : vector<2x50xf32>
    %421 = arith.mulf %410, %398 : vector<2x50xf32>
    %422 = arith.addf %420, %421 : vector<2x50xf32>
    %423 = vector.extract_strided_slice %7 {offsets = [34, 0], sizes = [2, 150], strides = [1, 1]} : vector<40x150xf32> to vector<2x150xf32>
    %cst_61 = arith.constant dense<0.000000e+00> : vector<2x150xf32>
    %424 = tpu.matmul %422, %1, %cst_61 {dimension_numbers = #tpu.dot_dimension_numbers<[1], [0], [0], [1], [0, 0, 1, 1], [], []>} : vector<2x50xf32>, vector<50x150xf32>, vector<2x150xf32> -> vector<2x150xf32>
    %425 = vector.extract_strided_slice %423 {offsets = [0, 0], sizes = [2, 100], strides = [1, 1]} : vector<2x150xf32> to vector<2x100xf32>
    %426 = vector.extract_strided_slice %424 {offsets = [0, 0], sizes = [2, 100], strides = [1, 1]} : vector<2x150xf32> to vector<2x100xf32>
    %427 = arith.addf %425, %426 : vector<2x100xf32>
    %428 = arith.negf %427 : vector<2x100xf32>
    %429 = math.exp %428 : vector<2x100xf32>
    %cst_62 = arith.constant 1.000000e+00 : f32
    %430 = vector.broadcast %cst_62 : f32 to vector<2x100xf32>
    %431 = arith.addf %430, %429 : vector<2x100xf32>
    %432 = arith.divf %430, %431 : vector<2x100xf32>
    %433 = vector.extract_strided_slice %432 {offsets = [0, 0], sizes = [2, 50], strides = [1, 1]} : vector<2x100xf32> to vector<2x50xf32>
    %434 = vector.extract_strided_slice %432 {offsets = [0, 50], sizes = [2, 50], strides = [1, 1]} : vector<2x100xf32> to vector<2x50xf32>
    %435 = vector.extract_strided_slice %423 {offsets = [0, 100], sizes = [2, 50], strides = [1, 1]} : vector<2x150xf32> to vector<2x50xf32>
    %436 = vector.extract_strided_slice %424 {offsets = [0, 100], sizes = [2, 50], strides = [1, 1]} : vector<2x150xf32> to vector<2x50xf32>
    %437 = vector.broadcast %2 : vector<1x50xf32> to vector<2x50xf32>
    %438 = arith.addf %436, %437 : vector<2x50xf32>
    %439 = arith.mulf %433, %438 : vector<2x50xf32>
    %440 = arith.addf %435, %439 : vector<2x50xf32>
    %441 = math.tanh %440 : vector<2x50xf32>
    %cst_63 = arith.constant 1.000000e+00 : f32
    %442 = vector.broadcast %cst_63 : f32 to vector<2x50xf32>
    %443 = arith.subf %442, %434 : vector<2x50xf32>
    %444 = arith.mulf %443, %441 : vector<2x50xf32>
    %445 = arith.mulf %434, %422 : vector<2x50xf32>
    %446 = arith.addf %444, %445 : vector<2x50xf32>
    %447 = vector.extract_strided_slice %7 {offsets = [36, 0], sizes = [2, 150], strides = [1, 1]} : vector<40x150xf32> to vector<2x150xf32>
    %cst_64 = arith.constant dense<0.000000e+00> : vector<2x150xf32>
    %448 = tpu.matmul %446, %1, %cst_64 {dimension_numbers = #tpu.dot_dimension_numbers<[1], [0], [0], [1], [0, 0, 1, 1], [], []>} : vector<2x50xf32>, vector<50x150xf32>, vector<2x150xf32> -> vector<2x150xf32>
    %449 = vector.extract_strided_slice %447 {offsets = [0, 0], sizes = [2, 100], strides = [1, 1]} : vector<2x150xf32> to vector<2x100xf32>
    %450 = vector.extract_strided_slice %448 {offsets = [0, 0], sizes = [2, 100], strides = [1, 1]} : vector<2x150xf32> to vector<2x100xf32>
    %451 = arith.addf %449, %450 : vector<2x100xf32>
    %452 = arith.negf %451 : vector<2x100xf32>
    %453 = math.exp %452 : vector<2x100xf32>
    %cst_65 = arith.constant 1.000000e+00 : f32
    %454 = vector.broadcast %cst_65 : f32 to vector<2x100xf32>
    %455 = arith.addf %454, %453 : vector<2x100xf32>
    %456 = arith.divf %454, %455 : vector<2x100xf32>
    %457 = vector.extract_strided_slice %456 {offsets = [0, 0], sizes = [2, 50], strides = [1, 1]} : vector<2x100xf32> to vector<2x50xf32>
    %458 = vector.extract_strided_slice %456 {offsets = [0, 50], sizes = [2, 50], strides = [1, 1]} : vector<2x100xf32> to vector<2x50xf32>
    %459 = vector.extract_strided_slice %447 {offsets = [0, 100], sizes = [2, 50], strides = [1, 1]} : vector<2x150xf32> to vector<2x50xf32>
    %460 = vector.extract_strided_slice %448 {offsets = [0, 100], sizes = [2, 50], strides = [1, 1]} : vector<2x150xf32> to vector<2x50xf32>
    %461 = vector.broadcast %2 : vector<1x50xf32> to vector<2x50xf32>
    %462 = arith.addf %460, %461 : vector<2x50xf32>
    %463 = arith.mulf %457, %462 : vector<2x50xf32>
    %464 = arith.addf %459, %463 : vector<2x50xf32>
    %465 = math.tanh %464 : vector<2x50xf32>
    %cst_66 = arith.constant 1.000000e+00 : f32
    %466 = vector.broadcast %cst_66 : f32 to vector<2x50xf32>
    %467 = arith.subf %466, %458 : vector<2x50xf32>
    %468 = arith.mulf %467, %465 : vector<2x50xf32>
    %469 = arith.mulf %458, %446 : vector<2x50xf32>
    %470 = arith.addf %468, %469 : vector<2x50xf32>
    %471 = vector.extract_strided_slice %7 {offsets = [38, 0], sizes = [2, 150], strides = [1, 1]} : vector<40x150xf32> to vector<2x150xf32>
    %cst_67 = arith.constant dense<0.000000e+00> : vector<2x150xf32>
    %472 = tpu.matmul %470, %1, %cst_67 {dimension_numbers = #tpu.dot_dimension_numbers<[1], [0], [0], [1], [0, 0, 1, 1], [], []>} : vector<2x50xf32>, vector<50x150xf32>, vector<2x150xf32> -> vector<2x150xf32>
    %473 = vector.extract_strided_slice %471 {offsets = [0, 0], sizes = [2, 100], strides = [1, 1]} : vector<2x150xf32> to vector<2x100xf32>
    %474 = vector.extract_strided_slice %472 {offsets = [0, 0], sizes = [2, 100], strides = [1, 1]} : vector<2x150xf32> to vector<2x100xf32>
    %475 = arith.addf %473, %474 : vector<2x100xf32>
    %476 = arith.negf %475 : vector<2x100xf32>
    %477 = math.exp %476 : vector<2x100xf32>
    %cst_68 = arith.constant 1.000000e+00 : f32
    %478 = vector.broadcast %cst_68 : f32 to vector<2x100xf32>
    %479 = arith.addf %478, %477 : vector<2x100xf32>
    %480 = arith.divf %478, %479 : vector<2x100xf32>
    %481 = vector.extract_strided_slice %480 {offsets = [0, 0], sizes = [2, 50], strides = [1, 1]} : vector<2x100xf32> to vector<2x50xf32>
    %482 = vector.extract_strided_slice %480 {offsets = [0, 50], sizes = [2, 50], strides = [1, 1]} : vector<2x100xf32> to vector<2x50xf32>
    %483 = vector.extract_strided_slice %471 {offsets = [0, 100], sizes = [2, 50], strides = [1, 1]} : vector<2x150xf32> to vector<2x50xf32>
    %484 = vector.extract_strided_slice %472 {offsets = [0, 100], sizes = [2, 50], strides = [1, 1]} : vector<2x150xf32> to vector<2x50xf32>
    %485 = vector.broadcast %2 : vector<1x50xf32> to vector<2x50xf32>
    %486 = arith.addf %484, %485 : vector<2x50xf32>
    %487 = arith.mulf %481, %486 : vector<2x50xf32>
    %488 = arith.addf %483, %487 : vector<2x50xf32>
    %489 = math.tanh %488 : vector<2x50xf32>
    %cst_69 = arith.constant 1.000000e+00 : f32
    %490 = vector.broadcast %cst_69 : f32 to vector<2x50xf32>
    %491 = arith.subf %490, %482 : vector<2x50xf32>
    %492 = arith.mulf %491, %489 : vector<2x50xf32>
    %493 = arith.mulf %482, %470 : vector<2x50xf32>
    %494 = arith.addf %492, %493 : vector<2x50xf32>
    %495 = tpu.concatenate %38, %62, %86, %110, %134, %158, %182, %206, %230, %254, %278, %302, %326, %350, %374, %398 in 0 : vector<2x50xf32>, vector<2x50xf32>, vector<2x50xf32>, vector<2x50xf32>, vector<2x50xf32>, vector<2x50xf32>, vector<2x50xf32>, vector<2x50xf32>, vector<2x50xf32>, vector<2x50xf32>, vector<2x50xf32>, vector<2x50xf32>, vector<2x50xf32>, vector<2x50xf32>, vector<2x50xf32>, vector<2x50xf32> -> vector<32x50xf32>
    %496 = tpu.concatenate %422, %446, %470, %494 in 0 : vector<2x50xf32>, vector<2x50xf32>, vector<2x50xf32>, vector<2x50xf32> -> vector<8x50xf32>
    %497 = tpu.concatenate %495, %496 in 0 : vector<32x50xf32>, vector<8x50xf32> -> vector<40x50xf32>
    %cst_70 = arith.constant 0.000000e+00 : f32
    %498 = vector.broadcast %cst_70 : f32 to vector<40x50xf32>
    %499 = arith.maximumf %497, %498 : vector<40x50xf32>
    %c88 = arith.constant 88 : index
    %c0_71 = arith.constant 0 : index
    %500 = vector.load %arg1[%c88, %c0_71] : memref<280x150xf32, #tpu.memory_space<vmem>>, vector<50x10xf32>
    %cst_72 = arith.constant dense<0.000000e+00> : vector<40x10xf32>
    %501 = tpu.matmul %499, %500, %cst_72 {dimension_numbers = #tpu.dot_dimension_numbers<[1], [0], [0], [1], [0, 0, 1, 1], [], []>} : vector<40x50xf32>, vector<50x10xf32>, vector<40x10xf32> -> vector<40x10xf32>
    %c144 = arith.constant 144 : index
    %c0_73 = arith.constant 0 : index
    %502 = vector.load %arg1[%c144, %c0_73] : memref<280x150xf32, #tpu.memory_space<vmem>>, vector<1x10xf32>
    %503 = vector.broadcast %502 : vector<1x10xf32> to vector<40x10xf32>
    %504 = arith.addf %501, %503 : vector<40x10xf32>
    %c176 = arith.constant 176 : index
    %c0_74 = arith.constant 0 : index
    %505 = vector.load %arg1[%c176, %c0_74] : memref<280x150xf32, #tpu.memory_space<vmem>>, vector<50x16xf32>
    %cst_75 = arith.constant dense<0.000000e+00> : vector<40x16xf32>
    %506 = tpu.matmul %499, %505, %cst_75 {dimension_numbers = #tpu.dot_dimension_numbers<[1], [0], [0], [1], [0, 0, 1, 1], [], []>} : vector<40x50xf32>, vector<50x16xf32>, vector<40x16xf32> -> vector<40x16xf32>
    %c232 = arith.constant 232 : index
    %c0_76 = arith.constant 0 : index
    %507 = vector.load %arg1[%c232, %c0_76] : memref<280x150xf32, #tpu.memory_space<vmem>>, vector<1x16xf32>
    %508 = vector.broadcast %507 : vector<1x16xf32> to vector<40x16xf32>
    %509 = arith.addf %506, %508 : vector<40x16xf32>
    %510 = math.tanh %509 : vector<40x16xf32>
    %511 = arith.addf %13, %510 : vector<40x16xf32>
    %512 = math.tanh %511 : vector<40x16xf32>
    %c240 = arith.constant 240 : index
    %c0_77 = arith.constant 0 : index
    %513 = vector.load %arg1[%c240, %c0_77] : memref<280x150xf32, #tpu.memory_space<vmem>>, vector<16x1xf32>
    %cst_78 = arith.constant dense<0.000000e+00> : vector<40x1xf32>
    %514 = tpu.matmul %512, %513, %cst_78 {dimension_numbers = #tpu.dot_dimension_numbers<[1], [0], [0], [1], [0, 0, 1, 1], [], []>} : vector<40x16xf32>, vector<16x1xf32>, vector<40x1xf32> -> vector<40x1xf32>
    %cst_79 = arith.constant dense<0xFF800000> : vector<1xf32>
    %515 = vector.multi_reduction <maximumf>, %514, %cst_79 [0] : vector<40x1xf32> to vector<1xf32>
    %516 = vector.shape_cast %515 : vector<1xf32> to vector<1x1xf32>
    %517 = vector.broadcast %516 : vector<1x1xf32> to vector<40x1xf32>
    %518 = arith.subf %514, %517 : vector<40x1xf32>
    %519 = math.exp %518 : vector<40x1xf32>
    %520 = arith.subf %0, %504 : vector<40x10xf32>
    %521 = vector.broadcast %519 : vector<40x1xf32> to vector<40x10xf32>
    %522 = arith.mulf %521, %520 : vector<40x10xf32>
    %523 = tpu.concatenate %519, %522, %504 in 1 : vector<40x1xf32>, vector<40x10xf32>, vector<40x10xf32> -> vector<40x21xf32>
    %524 = tpu.iota {dimensions = array<i32: 1>} : vector<2x40xi32>
    %525 = tpu.iota {dimensions = array<i32: 0>} : vector<2x40xi32>
    %c2_i32 = arith.constant 2 : i32
    %c0_i32 = arith.constant 0 : i32
    %526 = arith.cmpi eq, %c2_i32, %c0_i32 : i32
    %c1_i32 = arith.constant 1 : i32
    %527 = arith.select %526, %c1_i32, %c2_i32 : i32
    %528 = vector.broadcast %527 : i32 to vector<2x40xi32>
    %529 = arith.remsi %524, %528 : vector<2x40xi32>
    %c0_i32_80 = arith.constant 0 : i32
    %530 = vector.broadcast %c0_i32_80 : i32 to vector<2x40xi32>
    %531 = arith.cmpi ne, %529, %530 : vector<2x40xi32>
    %c0_i32_81 = arith.constant 0 : i32
    %532 = vector.broadcast %c0_i32_81 : i32 to vector<2x40xi32>
    %533 = arith.cmpi slt, %529, %532 : vector<2x40xi32>
    %c0_i32_82 = arith.constant 0 : i32
    %534 = arith.cmpi slt, %527, %c0_i32_82 : i32
    %535 = vector.broadcast %534 : i1 to vector<2x40xi1>
    %536 = vector.broadcast %535 : vector<2x40xi1> to vector<2x40xi1>
    %537 = arith.xori %533, %536 : vector<2x40xi1>
    %538 = arith.andi %537, %531 : vector<2x40xi1>
    %539 = vector.broadcast %527 : i32 to vector<2x40xi32>
    %540 = arith.addi %529, %539 : vector<2x40xi32>
    %541 = arith.select %538, %540, %529 : vector<2x40xi1>, vector<2x40xi32>
    %542 = arith.cmpi eq, %541, %525 : vector<2x40xi32>
    %543 = arith.extui %542 : vector<2x40xi1> to vector<2x40xi32>
    %544 = arith.sitofp %543 : vector<2x40xi32> to vector<2x40xf32>
    %cst_83 = arith.constant dense<0.000000e+00> : vector<2x21xf32>
    %545 = tpu.matmul %544, %523, %cst_83 {dimension_numbers = #tpu.dot_dimension_numbers<[1], [0], [0], [1], [0, 0, 1, 1], [], []>} : vector<2x40xf32>, vector<40x21xf32>, vector<2x21xf32> -> vector<2x21xf32>
    %546 = vector.extract_strided_slice %545 {offsets = [0, 11], sizes = [2, 10], strides = [1, 1]} : vector<2x21xf32> to vector<2x10xf32>
    %547 = vector.extract_strided_slice %545 {offsets = [0, 1], sizes = [2, 10], strides = [1, 1]} : vector<2x21xf32> to vector<2x10xf32>
    %548 = vector.extract_strided_slice %545 {offsets = [0, 0], sizes = [2, 1], strides = [1, 1]} : vector<2x21xf32> to vector<2x1xf32>
    %549 = tpu.reciprocal %548 {approx = true} : vector<2x1xf32> -> vector<2x1xf32>
    %550 = vector.broadcast %549 : vector<2x1xf32> to vector<2x10xf32>
    %551 = arith.mulf %547, %550 : vector<2x10xf32>
    %552 = arith.addf %546, %551 : vector<2x10xf32>
    %c256 = arith.constant 256 : index
    %c0_84 = arith.constant 0 : index
    %553 = vector.load %arg1[%c256, %c0_84] : memref<280x150xf32, #tpu.memory_space<vmem>>, vector<10x10xf32>
    %cst_85 = arith.constant dense<0.000000e+00> : vector<2x10xf32>
    %554 = tpu.matmul %552, %553, %cst_85 {dimension_numbers = #tpu.dot_dimension_numbers<[1], [0], [0], [1], [0, 0, 1, 1], [], []>} : vector<2x10xf32>, vector<10x10xf32>, vector<2x10xf32> -> vector<2x10xf32>
    %c272 = arith.constant 272 : index
    %c0_86 = arith.constant 0 : index
    %555 = vector.load %arg1[%c272, %c0_86] : memref<280x150xf32, #tpu.memory_space<vmem>>, vector<1x10xf32>
    %556 = vector.broadcast %555 : vector<1x10xf32> to vector<2x10xf32>
    %557 = arith.addf %554, %556 : vector<2x10xf32>
    %c0_87 = arith.constant 0 : index
    %c0_88 = arith.constant 0 : index
    %558 = vector.load %arg2[%c0_87, %c0_88] : memref<2x10xf32, #tpu.memory_space<vmem>>, vector<2x10xf32>
    tpu.vector_store %arg2[%c0_87, %c0_88], %557 {strides = array<i32>} : memref<2x10xf32, #tpu.memory_space<vmem>>, vector<2x10xf32>,
    return
  }
}

</mosaic_0001>

<llo_original>
// kernel: tpu_custom_call.1
$region0: #{tpu_custom_call.1}
  #allocation0 [shape = 'u32[]', space=smem, size = 0x4, offset = 0x4, fixed_abs, tag = 'smem constant byte address 0x4 - core index']
  #allocation1 [shape = 'u32[144,128]{1,0:T(1,128)}', space=vmem, size = 0x12000, scoped, tag = 'internal scratch']
  %s0 = inlined_call_operand.vmem [shape: f32[40,10], index: 0, kind: input, shape index: {}]
  %s1 = inlined_call_operand.vmem [shape: f32[280,150], index: 1, kind: input, shape index: {}]
  %s2 = inlined_call_operand.hbm [shape: f32[2,10], index: 2, kind: output, shape index: {}]
  %s3 = sld [smem:[#allocation0]]
  $region18: #{tpu_custom_call.1} parent=0
    _
  %s5 = ssub.s32 1, %s3
  %s6 = scalar_select 0, %s5, %s3
  $region1: #{tpu_custom_call.1} parent=0
    #allocation2 [shape = 'u8[1024]{0}', space=vmem, size = 0x400, scoped, tag = 'output window, operand 0, single buffered']
    #allocation3 [shape = 's32[1]{0}', space=sflag, size = 0x4, scoped, tag = 'scoped memory for tpu_custom_call.1']
    %7 = vsyncpa [#allocation3], 0
    // Predicated region
    $region2: #{tpu_custom_call.1} parent=1 // pred_check
      _
    $region3: #{tpu_custom_call.1} parent=1 // pred_check_branch
      %9 = sbr.rel (0) target = $region5
    $region4: #{tpu_custom_call.1} parent=1 // pred_region
      _
    $region5: #{tpu_custom_call.1} parent=1 // pred_fallthru
      _
    // Predicated region
    $region6: #{tpu_custom_call.1} parent=1 // pred_check
      _
    $region7: #{tpu_custom_call.1} parent=1 // pred_check_branch
      %11 = sbr.rel (0) target = $region9
    $region8: #{tpu_custom_call.1} parent=1 // pred_region
      _
    $region9: #{tpu_custom_call.1} parent=1 // pred_fallthru
      _
    %v12 = vld [vmem:[%s0] sm:$0xff]
    %v13 = vld [vmem:[%s0 + $0x8] sm:$0xff]
    %v14 = vld [vmem:[%s0 + $0x10] sm:$0xff]
    %v15 = vld [vmem:[%s0 + $0x18] sm:$0xff]
    %v16 = vld [vmem:[%s0 + $0x20] sm:$0xff]
    %v17 = vld [vmem:[%s1 + $0x30] sm:$0xff]
    %v18 = vld [vmem:[%s1 + $0x38] sm:$0xff]
    %v19 = vld [vmem:[%s1 + $0x40] sm:$0xff]
    %v20 = vld [vmem:[%s1 + $0x48] sm:$0xff]
    %v21 = vld [vmem:[%s1 + $0x50] sm:$0xff]
    %v22 = vld [vmem:[%s1 + $0x58] sm:$0xff]
    %v23 = vld [vmem:[%s1 + $0x60] sm:$0xff]
    %v24 = vld [vmem:[%s1 + $0x68] sm:$0xff]
    %v25 = vld [vmem:[%s1 + $0x70] sm:$0xff]
    %v26 = vld [vmem:[%s1 + $0x78] sm:$0xff]
    %v27 = vld [vmem:[%s1 + $0x80] sm:$0xff]
    %v28 = vld [vmem:[%s1 + $0x88] sm:$0xff]
    %v29 = vld [vmem:[%s1 + $0x90] sm:$0x3]
    %v30 = vld [vmem:[%s1 + $0x98] sm:$0x3]
    %v31 = vld [vmem:[%s1 + $0xa0] ss:$0 sm:$0xff]
    %v32 = vld [vmem:[%s1] sm:$0xff]
    %v33 = vld [vmem:[%s1 + $0x8] sm:$0xff]
    %v34 = vld [vmem:[%s1 + $0x10] sm:$0x3]
    %v35 = vld [vmem:[%s1 + $0x18] sm:$0x3]
    %s36 = scalar_lea.vmem %s1, 32
    %v37 = vld [vmem:[%s36] ss:$8 sm:$0x3]
    %v39 = vlaneseq
    %v40 = vshrl.u32 %v39, 7
    %v41 = vsub.s32 0, %v40
    %v42 = vrot.slane %v37, %v41
    %v43 = vlaneseq
    %v44 = vshrl.u32 %v43, 7
    %v45 = vsub.s32 1, %v44
    %v46 = vrot.slane %v37, %v45
    %vm49 = vcmask 80896
    %v51 = vsel %vm49, %v12, 0
    %v54 = vsel %vm49, %v13, 0
    %v57 = vsel %vm49, %v14, 0
    %v60 = vsel %vm49, %v15, 0
    %v63 = vsel %vm49, %v16, 0
    %vm65 = vcmask 1041408
    %v67 = vsel %vm65, %v34, 0
    %v70 = vsel %vm65, %v35, 0
    %72 = vmatprep.subr.mxu0 %v33
    %73 = vmatpush1.msra.mxu0 %v32
    %74 = vmatprep.subr.mxu0 %v70
    %75 = vmatpush1.msra.mxu0 %v67
    %76 = vmatprep.subr.mxu0 0.0
    %77 = vmatpush1.msra.mxu0 0.0
    %78 = vmatprep.subr.mxu0 0.0
    %79 = vmatpush1.msra.mxu0 0.0
    %80 = vmatprep.subr.mxu0 0.0
    %81 = vmatpush1.msra.mxu0 0.0
    %82 = vmatprep.subr.mxu0 0.0
    %83 = vmatpush1.msra.mxu0 0.0
    %84 = vmatprep.subr.mxu0 0.0
    %85 = vmatpush1.msra.mxu0 0.0
    %86 = vmatprep.subr.mxu0 0.0
    %87 = vmatpush1.msra.mxu0 0.0
    %88 = vmatprep.subr.mxu0 0.0
    %89 = vmatpush1.msra.mxu0 0.0
    %90 = vmatprep.subr.mxu0 0.0
    %91 = vmatpush1.msra.mxu0 0.0
    %92 = vmatprep.subr.mxu0 0.0
    %93 = vmatpush1.msra.mxu0 0.0
    %94 = vmatprep.subr.mxu0 0.0
    %95 = vmatpush1.msra.mxu0 0.0
    %96 = vmatprep.subr.mxu0 0.0
    %97 = vmatpush1.msra.mxu0 0.0
    %98 = vmatprep.subr.mxu0 0.0
    %99 = vmatpush1.msra.mxu0 0.0
    %100 = vmatprep.subr.mxu0 0.0
    %101 = vmatpush1.msra.mxu0 0.0
    %102 = vmatprep.subr.mxu0 0.0
    %103 = vmatpush1.msra.mxu0 0.0
    %104 = vmatprep.subr.mxu0 0.0
    %105 = vmatpush1.msra.mxu0 0.0
    %106 = vmatprep.subr.mxu0 0.0
    %107 = vmatpush1.msra.mxu0 0.0
    %108 = vmatprep.subr.mxu0 0.0
    %109 = vmatpush1.msra.mxu0 0.0
    %110 = vmatprep.subr.mxu0 0.0
    %111 = vmatpush1.msra.mxu0 0.0
    %112 = vmatprep.subr.mxu0 0.0
    %113 = vmatpush1.msra.mxu0 0.0
    %114 = vmatprep.subr.mxu0 0.0
    %115 = vmatpush1.msra.mxu0 0.0
    %116 = vmatprep.subr.mxu0 0.0
    %117 = vmatpush1.msra.mxu0 0.0
    %118 = vmatprep.subr.mxu0 0.0
    %119 = vmatpush1.msra.mxu0 0.0
    %120 = vmatprep.subr.mxu0 0.0
    %121 = vmatpush1.msra.mxu0 0.0
    %122 = vmatprep.subr.mxu0 0.0
    %123 = vmatpush1.msra.mxu0 0.0
    %124 = vmatprep.subr.mxu0 0.0
    %125 = vmatpush1.msra.mxu0 0.0
    %126 = vmatprep.subr.mxu0 0.0
    %127 = vmatpush1.msra.mxu0 0.0
    %128 = vmatprep.subr.mxu0 0.0
    %129 = vmatpush1.msra.mxu0 0.0
    %130 = vmatprep.subr.mxu0 0.0
    %131 = vmatpush1.msra.mxu0 0.0
    %132 = vmatprep.subr.mxu0 0.0
    %133 = vmatpush1.msra.mxu0 0.0
    %134 = vmatprep.subr.mxu0 0.0
    %135 = vmatpush1.msra.mxu0 0.0
    %136 = vmatprep.mubr.f32.mxu0 0.0
    %137 = vmatmul.mubr.f32.gmra.mrb[0].mxu0 %v51
    %v138 = vpop.f32.mrb[0].mxu0
    %v139 = vadd.f32 %v42, %v138
    %v140 = vpop.f32.mrb[0].mxu0
    %v141 = vadd.f32 %v46, %v140
    %142 = vmatprep.mubr.f32.mxu0 0.0
    %143 = vmatmul.mubr.f32.gmra.mrb[0].mxu0 %v54
    %v144 = vpop.f32.mrb[0].mxu0
    %v145 = vadd.f32 %v42, %v144
    %v146 = vpop.f32.mrb[0].mxu0
    %v147 = vadd.f32 %v46, %v146
    %148 = vmatprep.mubr.f32.mxu0 0.0
    %149 = vmatmul.mubr.f32.gmra.mrb[0].mxu0 %v57
    %v150 = vpop.f32.mrb[0].mxu0
    %v151 = vadd.f32 %v42, %v150
    %v152 = vpop.f32.mrb[0].mxu0
    %v153 = vadd.f32 %v46, %v152
    %154 = vmatprep.mubr.f32.mxu0 0.0
    %155 = vmatmul.mubr.f32.gmra.mrb[0].mxu0 %v60
    %v156 = vpop.f32.mrb[0].mxu0
    %v157 = vadd.f32 %v42, %v156
    %v158 = vpop.f32.mrb[0].mxu0
    %v159 = vadd.f32 %v46, %v158
    %160 = vmatprep.mubr.f32.mxu0 0.0
    %161 = vmatmul.mubr.f32.gmra.mrb[0].mxu0 %v63
    %v162 = vpop.f32.mrb[0].mxu0
    %v163 = vadd.f32 %v42, %v162
    %v164 = vpop.f32.mrb[0].mxu0
    %v165 = vadd.f32 %v46, %v164
    %166 = vdwg.mxu0
    %v167 = vld [vmem:[%s1 + $0x130] sm:$0xff]
    %v168 = vld [vmem:[%s1 + $0x140] sm:$0x3]
    %v169 = vld [vmem:[%s1 + $0x150] ss:$0 sm:$0xff]
    %v171 = vsel %vm65, %v168, 0
    %173 = vmatprep.subr.mxu0 0.0
    %174 = vmatpush1.msra.mxu0 %v167
    %175 = vmatprep.subr.mxu0 0.0
    %176 = vmatpush1.msra.mxu0 %v171
    %177 = vmatprep.subr.mxu0 0.0
    %178 = vmatpush1.msra.mxu0 0.0
    %179 = vmatprep.subr.mxu0 0.0
    %180 = vmatpush1.msra.mxu0 0.0
    %181 = vmatprep.subr.mxu0 0.0
    %182 = vmatpush1.msra.mxu0 0.0
    %183 = vmatprep.subr.mxu0 0.0
    %184 = vmatpush1.msra.mxu0 0.0
    %185 = vmatprep.subr.mxu0 0.0
    %186 = vmatpush1.msra.mxu0 0.0
    %187 = vmatprep.subr.mxu0 0.0
    %188 = vmatpush1.msra.mxu0 0.0
    %189 = vmatprep.subr.mxu0 0.0
    %190 = vmatpush1.msra.mxu0 0.0
    %191 = vmatprep.subr.mxu0 0.0
    %192 = vmatpush1.msra.mxu0 0.0
    %193 = vmatprep.subr.mxu0 0.0
    %194 = vmatpush1.msra.mxu0 0.0
    %195 = vmatprep.subr.mxu0 0.0
    %196 = vmatpush1.msra.mxu0 0.0
    %197 = vmatprep.subr.mxu0 0.0
    %198 = vmatpush1.msra.mxu0 0.0
    %199 = vmatprep.subr.mxu0 0.0
    %200 = vmatpush1.msra.mxu0 0.0
    %201 = vmatprep.subr.mxu0 0.0
    %202 = vmatpush1.msra.mxu0 0.0
    %203 = vmatprep.subr.mxu0 0.0
    %204 = vmatpush1.msra.mxu0 0.0
    %205 = vmatprep.subr.mxu0 0.0
    %206 = vmatpush1.msra.mxu0 0.0
    %207 = vmatprep.subr.mxu0 0.0
    %208 = vmatpush1.msra.mxu0 0.0
    %209 = vmatprep.subr.mxu0 0.0
    %210 = vmatpush1.msra.mxu0 0.0
    %211 = vmatprep.subr.mxu0 0.0
    %212 = vmatpush1.msra.mxu0 0.0
    %213 = vmatprep.subr.mxu0 0.0
    %214 = vmatpush1.msra.mxu0 0.0
    %215 = vmatprep.subr.mxu0 0.0
    %216 = vmatpush1.msra.mxu0 0.0
    %217 = vmatprep.subr.mxu0 0.0
    %218 = vmatpush1.msra.mxu0 0.0
    %219 = vmatprep.subr.mxu0 0.0
    %220 = vmatpush1.msra.mxu0 0.0
    %221 = vmatprep.subr.mxu0 0.0
    %222 = vmatpush1.msra.mxu0 0.0
    %223 = vmatprep.subr.mxu0 0.0
    %224 = vmatpush1.msra.mxu0 0.0
    %225 = vmatprep.subr.mxu0 0.0
    %226 = vmatpush1.msra.mxu0 0.0
    %227 = vmatprep.subr.mxu0 0.0
    %228 = vmatpush1.msra.mxu0 0.0
    %229 = vmatprep.subr.mxu0 0.0
    %230 = vmatpush1.msra.mxu0 0.0
    %231 = vmatprep.subr.mxu0 0.0
    %232 = vmatpush1.msra.mxu0 0.0
    %233 = vmatprep.subr.mxu0 0.0
    %234 = vmatpush1.msra.mxu0 0.0
    %235 = vmatprep.subr.mxu0 0.0
    %236 = vmatpush1.msra.mxu0 0.0
    %237 = vmatprep.mubr.f32.mxu0 0.0
    %238 = vmatmul.mubr.f32.gmra.mrb[0].mxu0 %v51
    %v239 = vpop.f32.mrb[0].mxu0
    %v240 = vadd.f32 %v169, %v239
    %v241 = vpop.f32.mrb[0].mxu0
    %242 = vmatprep.mubr.f32.mxu0 0.0
    %243 = vmatmul.mubr.f32.gmra.mrb[0].mxu0 %v54
    %v244 = vpop.f32.mrb[0].mxu0
    %v245 = vadd.f32 %v169, %v244
    %v246 = vpop.f32.mrb[0].mxu0
    %247 = vmatprep.mubr.f32.mxu0 0.0
    %248 = vmatmul.mubr.f32.gmra.mrb[0].mxu0 %v57
    %v249 = vpop.f32.mrb[0].mxu0
    %v250 = vadd.f32 %v169, %v249
    %v251 = vpop.f32.mrb[0].mxu0
    %252 = vmatprep.mubr.f32.mxu0 0.0
    %253 = vmatmul.mubr.f32.gmra.mrb[0].mxu0 %v60
    %v254 = vpop.f32.mrb[0].mxu0
    %v255 = vadd.f32 %v169, %v254
    %v256 = vpop.f32.mrb[0].mxu0
    %257 = vmatprep.mubr.f32.mxu0 0.0
    %258 = vmatmul.mubr.f32.gmra.mrb[0].mxu0 %v63
    %v259 = vpop.f32.mrb[0].mxu0
    %v260 = vadd.f32 %v169, %v259
    %v261 = vpop.f32.mrb[0].mxu0
    %262 = vdwg.mxu0
    %v263 = vtanh.pop %v240
    %v264 = vtanh.pop %v245
    %v265 = vtanh.pop %v250
    %v266 = vtanh.pop %v255
    %v267 = vtanh.pop %v260
    %vm268 = vcmask 408576
    %v270 = vsel %vm268, 0.0, 0
    %v273 = vsel %vm65, %v29, 0
    %v276 = vsel %vm65, %v30, 0
    %278 = vmatprep.subr.mxu0 %v18
    %279 = vmatpush1.msra.mxu0 %v17
    %280 = vmatprep.subr.mxu0 %v20
    %281 = vmatpush1.msra.mxu0 %v19
    %282 = vmatprep.subr.mxu0 %v22
    %283 = vmatpush1.msra.mxu0 %v21
    %284 = vmatprep.subr.mxu0 %v24
    %285 = vmatpush1.msra.mxu0 %v23
    %286 = vmatprep.subr.mxu0 %v26
    %287 = vmatpush1.msra.mxu0 %v25
    %288 = vmatprep.subr.mxu0 %v28
    %289 = vmatpush1.msra.mxu0 %v27
    %290 = vmatprep.subr.mxu0 %v276
    %291 = vmatpush1.msra.mxu0 %v273
    %292 = vmatprep.subr.mxu0 0.0
    %293 = vmatpush1.msra.mxu0 0.0
    %294 = vmatprep.subr.mxu0 0.0
    %295 = vmatpush1.msra.mxu0 0.0
    %296 = vmatprep.subr.mxu0 0.0
    %297 = vmatpush1.msra.mxu0 0.0
    %298 = vmatprep.subr.mxu0 0.0
    %299 = vmatpush1.msra.mxu0 0.0
    %300 = vmatprep.subr.mxu0 0.0
    %301 = vmatpush1.msra.mxu0 0.0
    %302 = vmatprep.subr.mxu0 0.0
    %303 = vmatpush1.msra.mxu0 0.0
    %304 = vmatprep.subr.mxu0 0.0
    %305 = vmatpush1.msra.mxu0 0.0
    %306 = vmatprep.subr.mxu0 0.0
    %307 = vmatpush1.msra.mxu0 0.0
    %308 = vmatprep.subr.mxu0 0.0
    %309 = vmatpush1.msra.mxu0 0.0
    %310 = vmatprep.subr.mxu0 0.0
    %311 = vmatpush1.msra.mxu0 0.0
    %312 = vmatprep.subr.mxu0 0.0
    %313 = vmatpush1.msra.mxu0 0.0
    %314 = vmatprep.subr.mxu0 0.0
    %315 = vmatpush1.msra.mxu0 0.0
    %316 = vmatprep.subr.mxu0 0.0
    %317 = vmatpush1.msra.mxu0 0.0
    %318 = vmatprep.subr.mxu0 0.0
    %319 = vmatpush1.msra.mxu0 0.0
    %320 = vmatprep.subr.mxu0 0.0
    %321 = vmatpush1.msra.mxu0 0.0
    %322 = vmatprep.subr.mxu0 0.0
    %323 = vmatpush1.msra.mxu0 0.0
    %324 = vmatprep.subr.mxu0 0.0
    %325 = vmatpush1.msra.mxu0 0.0
    %326 = vmatprep.subr.mxu0 0.0
    %327 = vmatpush1.msra.mxu0 0.0
    %328 = vmatprep.subr.mxu0 0.0
    %329 = vmatpush1.msra.mxu0 0.0
    %330 = vmatprep.subr.mxu0 0.0
    %331 = vmatpush1.msra.mxu0 0.0
    %332 = vmatprep.subr.mxu0 0.0
    %333 = vmatpush1.msra.mxu0 0.0
    %334 = vmatprep.subr.mxu0 0.0
    %335 = vmatpush1.msra.mxu0 0.0
    %336 = vmatprep.subr.mxu0 0.0
    %337 = vmatpush1.msra.mxu0 0.0
    %338 = vmatprep.subr.mxu0 0.0
    %339 = vmatpush1.msra.mxu0 0.0
    %340 = vmatprep.subr.mxu0 0.0
    %341 = vmatpush1.msra.mxu0 0.0
    %342 = vmatprep.mubr.f32.mxu0 0.0
    %343 = vmatmul.mubr.f32.gmra.mrb[0].mxu0 %v270
    %v344 = vpop.f32.mrb[0].mxu0
    %v345 = vadd.f32 0.0, %v344
    %v346 = vpop.f32.mrb[0].mxu0
    %v347 = vadd.f32 0.0, %v346
    %348 = vdwg.mxu0
    %v349 = vadd.f32 %v139, %v345
    %v350 = vxor.u32 %v349, 2147483648
    %v351 = vmul.f32 %v350, 1.442695
    %v352 = vpow.pop %v351
    %v353 = vadd.f32 %v352, 1.0
    %v354 = vrcp.pop %v353
    %v355 = vmul.f32 1.0, %v354
    %357 = vrot.lane.b32.xlu0 %v31, 100
    %v358 = vpop.permute.xlu0 %357
    %v360 = vadd.f32 %v345, %v358
    %v361 = vadd.f32 %v347, %v358
    %364 = vrot.lane.b32.xlu0 %v360, 28
    %v365 = vpop.permute.xlu0 %364
    %366 = vrot.lane.b32.xlu0 %v361, 28
    %v367 = vpop.permute.xlu0 %366
    %vm368 = vcmask 228352
    %v369 = vsel %vm368, %v365, %v367
    %v371 = vmul.f32 %v355, %v369
    %373 = vrot.lane.b32.xlu0 %v371, 100
    %v374 = vpop.permute.xlu0 %373
    %v376 = vadd.f32 %v139, %v374
    %v377 = vadd.f32 %v141, %v374
    %v378 = vtanh.pop %v376
    %v379 = vtanh.pop %v377
    %v380 = vsub.f32 1.0, %v355
    %383 = vrot.lane.b32.xlu0 %v378, 78
    %v384 = vpop.permute.xlu0 %383
    %385 = vrot.lane.b32.xlu0 %v379, 78
    %v386 = vpop.permute.xlu0 %385
    %vm387 = vcmask 637952
    %v388 = vsel %vm387, %v384, %v386
    %v390 = vmul.f32 %v380, %v388
    %v391 = vmul.f32 %v355, 0.0
    %v392 = vadd.f32 %v390, %v391
    %394 = vrot.lane.b32.xlu0 %v392, 78
    %v395 = vpop.permute.xlu0 %394
    %v396 = vsel %vm268, %v395, 0
    %398 = vmatprep.subr.mxu0 %v18
    %399 = vmatpush1.msra.mxu0 %v17
    %400 = vmatprep.subr.mxu0 %v20
    %401 = vmatpush1.msra.mxu0 %v19
    %402 = vmatprep.subr.mxu0 %v22
    %403 = vmatpush1.msra.mxu0 %v21
    %404 = vmatprep.subr.mxu0 %v24
    %405 = vmatpush1.msra.mxu0 %v23
    %406 = vmatprep.subr.mxu0 %v26
    %407 = vmatpush1.msra.mxu0 %v25
    %408 = vmatprep.subr.mxu0 %v28
    %409 = vmatpush1.msra.mxu0 %v27
    %410 = vmatprep.subr.mxu0 %v276
    %411 = vmatpush1.msra.mxu0 %v273
    %412 = vmatprep.subr.mxu0 0.0
    %413 = vmatpush1.msra.mxu0 0.0
    %414 = vmatprep.subr.mxu0 0.0
    %415 = vmatpush1.msra.mxu0 0.0
    %416 = vmatprep.subr.mxu0 0.0
    %417 = vmatpush1.msra.mxu0 0.0
    %418 = vmatprep.subr.mxu0 0.0
    %419 = vmatpush1.msra.mxu0 0.0
    %420 = vmatprep.subr.mxu0 0.0
    %421 = vmatpush1.msra.mxu0 0.0
    %422 = vmatprep.subr.mxu0 0.0
    %423 = vmatpush1.msra.mxu0 0.0
    %424 = vmatprep.subr.mxu0 0.0
    %425 = vmatpush1.msra.mxu0 0.0
    %426 = vmatprep.subr.mxu0 0.0
    %427 = vmatpush1.msra.mxu0 0.0
    %428 = vmatprep.subr.mxu0 0.0
    %429 = vmatpush1.msra.mxu0 0.0
    %430 = vmatprep.subr.mxu0 0.0
    %431 = vmatpush1.msra.mxu0 0.0
    %432 = vmatprep.subr.mxu0 0.0
    %433 = vmatpush1.msra.mxu0 0.0
    %434 = vmatprep.subr.mxu0 0.0
    %435 = vmatpush1.msra.mxu0 0.0
    %436 = vmatprep.subr.mxu0 0.0
    %437 = vmatpush1.msra.mxu0 0.0
    %438 = vmatprep.subr.mxu0 0.0
    %439 = vmatpush1.msra.mxu0 0.0
    %440 = vmatprep.subr.mxu0 0.0
    %441 = vmatpush1.msra.mxu0 0.0
    %442 = vmatprep.subr.mxu0 0.0
    %443 = vmatpush1.msra.mxu0 0.0
    %444 = vmatprep.subr.mxu0 0.0
    %445 = vmatpush1.msra.mxu0 0.0
    %446 = vmatprep.subr.mxu0 0.0
    %447 = vmatpush1.msra.mxu0 0.0
    %448 = vmatprep.subr.mxu0 0.0
    %449 = vmatpush1.msra.mxu0 0.0
    %450 = vmatprep.subr.mxu0 0.0
    %451 = vmatpush1.msra.mxu0 0.0
    %452 = vmatprep.subr.mxu0 0.0
    %453 = vmatpush1.msra.mxu0 0.0
    %454 = vmatprep.subr.mxu0 0.0
    %455 = vmatpush1.msra.mxu0 0.0
    %456 = vmatprep.subr.mxu0 0.0
    %457 = vmatpush1.msra.mxu0 0.0
    %458 = vmatprep.subr.mxu0 0.0
    %459 = vmatpush1.msra.mxu0 0.0
    %460 = vmatprep.subr.mxu0 0.0
    %461 = vmatpush1.msra.mxu0 0.0
    %462 = vmatprep.mubr.f32.mxu0 0.0
    %463 = vmatmul.mubr.f32.gmra.mrb[0].mxu0 %v396
    %v464 = vpop.f32.mrb[0].mxu0
    %v465 = vadd.f32 0.0, %v464
    %v466 = vpop.f32.mrb[0].mxu0
    %v467 = vadd.f32 0.0, %v466
    %468 = vdwg.mxu0
    %v470 = vrot.slane %v465, 6
    %v472 = vadd.f32 %v139, %v470
    %v473 = vxor.u32 %v472, 2147483648
    %v474 = vmul.f32 %v473, 1.442695
    %v475 = vpow.pop %v474
    %v476 = vadd.f32 %v475, 1.0
    %v477 = vrcp.pop %v476
    %v478 = vmul.f32 1.0, %v477
    %v479 = vadd.f32 %v465, %v358
    %v480 = vadd.f32 %v467, %v358
    %v483 = vrot.slane %v479, 6
    %v484 = vrot.slane %v480, 6
    %485 = vrot.lane.b32.xlu0 %v483, 28
    %v486 = vpop.permute.xlu0 %485
    %487 = vrot.lane.b32.xlu0 %v484, 28
    %v488 = vpop.permute.xlu0 %487
    %v489 = vsel %vm368, %v486, %v488
    %v491 = vmul.f32 %v478, %v489
    %493 = vrot.lane.b32.xlu0 %v491, 100
    %v494 = vpop.permute.xlu0 %493
    %v496 = vadd.f32 %v139, %v494
    %v497 = vadd.f32 %v141, %v494
    %v498 = vtanh.pop %v496
    %v499 = vtanh.pop %v497
    %v500 = vsub.f32 1.0, %v478
    %503 = vrot.lane.b32.xlu0 %v498, 78
    %v504 = vpop.permute.xlu0 %503
    %505 = vrot.lane.b32.xlu0 %v499, 78
    %v506 = vpop.permute.xlu0 %505
    %v507 = vsel %vm387, %v504, %v506
    %v509 = vmul.f32 %v500, %v507
    %v510 = vrot.slane %v392, 6
    %v512 = vmul.f32 %v478, %v510
    %v513 = vadd.f32 %v509, %v512
    %v515 = vrot.slane %v513, 2
    %516 = vrot.lane.b32.xlu0 %v515, 78
    %v517 = vpop.permute.xlu0 %516
    %v518 = vsel %vm268, %v517, 0
    %520 = vmatprep.subr.mxu0 %v18
    %521 = vmatpush1.msra.mxu0 %v17
    %522 = vmatprep.subr.mxu0 %v20
    %523 = vmatpush1.msra.mxu0 %v19
    %524 = vmatprep.subr.mxu0 %v22
    %525 = vmatpush1.msra.mxu0 %v21
    %526 = vmatprep.subr.mxu0 %v24
    %527 = vmatpush1.msra.mxu0 %v23
    %528 = vmatprep.subr.mxu0 %v26
    %529 = vmatpush1.msra.mxu0 %v25
    %530 = vmatprep.subr.mxu0 %v28
    %531 = vmatpush1.msra.mxu0 %v27
    %532 = vmatprep.subr.mxu0 %v276
    %533 = vmatpush1.msra.mxu0 %v273
    %534 = vmatprep.subr.mxu0 0.0
    %535 = vmatpush1.msra.mxu0 0.0
    %536 = vmatprep.subr.mxu0 0.0
    %537 = vmatpush1.msra.mxu0 0.0
    %538 = vmatprep.subr.mxu0 0.0
    %539 = vmatpush1.msra.mxu0 0.0
    %540 = vmatprep.subr.mxu0 0.0
    %541 = vmatpush1.msra.mxu0 0.0
    %542 = vmatprep.subr.mxu0 0.0
    %543 = vmatpush1.msra.mxu0 0.0
    %544 = vmatprep.subr.mxu0 0.0
    %545 = vmatpush1.msra.mxu0 0.0
    %546 = vmatprep.subr.mxu0 0.0
    %547 = vmatpush1.msra.mxu0 0.0
    %548 = vmatprep.subr.mxu0 0.0
    %549 = vmatpush1.msra.mxu0 0.0
    %550 = vmatprep.subr.mxu0 0.0
    %551 = vmatpush1.msra.mxu0 0.0
    %552 = vmatprep.subr.mxu0 0.0
    %553 = vmatpush1.msra.mxu0 0.0
    %554 = vmatprep.subr.mxu0 0.0
    %555 = vmatpush1.msra.mxu0 0.0
    %556 = vmatprep.subr.mxu0 0.0
    %557 = vmatpush1.msra.mxu0 0.0
    %558 = vmatprep.subr.mxu0 0.0
    %559 = vmatpush1.msra.mxu0 0.0
    %560 = vmatprep.subr.mxu0 0.0
    %561 = vmatpush1.msra.mxu0 0.0
    %562 = vmatprep.subr.mxu0 0.0
    %563 = vmatpush1.msra.mxu0 0.0
    %564 = vmatprep.subr.mxu0 0.0
    %565 = vmatpush1.msra.mxu0 0.0
    %566 = vmatprep.subr.mxu0 0.0
    %567 = vmatpush1.msra.mxu0 0.0
    %568 = vmatprep.subr.mxu0 0.0
    %569 = vmatpush1.msra.mxu0 0.0
    %570 = vmatprep.subr.mxu0 0.0
    %571 = vmatpush1.msra.mxu0 0.0
    %572 = vmatprep.subr.mxu0 0.0
    %573 = vmatpush1.msra.mxu0 0.0
    %574 = vmatprep.subr.mxu0 0.0
    %575 = vmatpush1.msra.mxu0 0.0
    %576 = vmatprep.subr.mxu0 0.0
    %577 = vmatpush1.msra.mxu0 0.0
    %578 = vmatprep.subr.mxu0 0.0
    %579 = vmatpush1.msra.mxu0 0.0
    %580 = vmatprep.subr.mxu0 0.0
    %581 = vmatpush1.msra.mxu0 0.0
    %582 = vmatprep.subr.mxu0 0.0
    %583 = vmatpush1.msra.mxu0 0.0
    %584 = vmatprep.mubr.f32.mxu0 0.0
    %585 = vmatmul.mubr.f32.gmra.mrb[0].mxu0 %v518
    %v586 = vpop.f32.mrb[0].mxu0
    %v587 = vadd.f32 0.0, %v586
    %v588 = vpop.f32.mrb[0].mxu0
    %v589 = vadd.f32 0.0, %v588
    %590 = vdwg.mxu0
    %v592 = vrot.slane %v587, 4
    %v594 = vadd.f32 %v139, %v592
    %v595 = vxor.u32 %v594, 2147483648
    %v596 = vmul.f32 %v595, 1.442695
    %v597 = vpow.pop %v596
    %v598 = vadd.f32 %v597, 1.0
    %v599 = vrcp.pop %v598
    %v600 = vmul.f32 1.0, %v599
    %v601 = vadd.f32 %v587, %v358
    %v602 = vadd.f32 %v589, %v358
    %v605 = vrot.slane %v601, 4
    %v606 = vrot.slane %v602, 4
    %607 = vrot.lane.b32.xlu0 %v605, 28
    %v608 = vpop.permute.xlu0 %607
    %609 = vrot.lane.b32.xlu0 %v606, 28
    %v610 = vpop.permute.xlu0 %609
    %v611 = vsel %vm368, %v608, %v610
    %v613 = vmul.f32 %v600, %v611
    %615 = vrot.lane.b32.xlu0 %v613, 100
    %v616 = vpop.permute.xlu0 %615
    %v618 = vadd.f32 %v139, %v616
    %v619 = vadd.f32 %v141, %v616
    %v620 = vtanh.pop %v618
    %v621 = vtanh.pop %v619
    %v622 = vsub.f32 1.0, %v600
    %625 = vrot.lane.b32.xlu0 %v620, 78
    %v626 = vpop.permute.xlu0 %625
    %627 = vrot.lane.b32.xlu0 %v621, 78
    %v628 = vpop.permute.xlu0 %627
    %v629 = vsel %vm387, %v626, %v628
    %v631 = vmul.f32 %v622, %v629
    %v632 = vrot.slane %v513, 6
    %v634 = vmul.f32 %v600, %v632
    %v635 = vadd.f32 %v631, %v634
    %v637 = vrot.slane %v635, 4
    %638 = vrot.lane.b32.xlu0 %v637, 78
    %v639 = vpop.permute.xlu0 %638
    %v640 = vsel %vm268, %v639, 0
    %642 = vmatprep.subr.mxu0 %v18
    %643 = vmatpush1.msra.mxu0 %v17
    %644 = vmatprep.subr.mxu0 %v20
    %645 = vmatpush1.msra.mxu0 %v19
    %646 = vmatprep.subr.mxu0 %v22
    %647 = vmatpush1.msra.mxu0 %v21
    %648 = vmatprep.subr.mxu0 %v24
    %649 = vmatpush1.msra.mxu0 %v23
    %650 = vmatprep.subr.mxu0 %v26
    %651 = vmatpush1.msra.mxu0 %v25
    %652 = vmatprep.subr.mxu0 %v28
    %653 = vmatpush1.msra.mxu0 %v27
    %654 = vmatprep.subr.mxu0 %v276
    %655 = vmatpush1.msra.mxu0 %v273
    %656 = vmatprep.subr.mxu0 0.0
    %657 = vmatpush1.msra.mxu0 0.0
    %658 = vmatprep.subr.mxu0 0.0
    %659 = vmatpush1.msra.mxu0 0.0
    %660 = vmatprep.subr.mxu0 0.0
    %661 = vmatpush1.msra.mxu0 0.0
    %662 = vmatprep.subr.mxu0 0.0
    %663 = vmatpush1.msra.mxu0 0.0
    %664 = vmatprep.subr.mxu0 0.0
    %665 = vmatpush1.msra.mxu0 0.0
    %666 = vmatprep.subr.mxu0 0.0
    %667 = vmatpush1.msra.mxu0 0.0
    %668 = vmatprep.subr.mxu0 0.0
    %669 = vmatpush1.msra.mxu0 0.0
    %670 = vmatprep.subr.mxu0 0.0
    %671 = vmatpush1.msra.mxu0 0.0
    %672 = vmatprep.subr.mxu0 0.0
    %673 = vmatpush1.msra.mxu0 0.0
    %674 = vmatprep.subr.mxu0 0.0
    %675 = vmatpush1.msra.mxu0 0.0
    %676 = vmatprep.subr.mxu0 0.0
    %677 = vmatpush1.msra.mxu0 0.0
    %678 = vmatprep.subr.mxu0 0.0
    %679 = vmatpush1.msra.mxu0 0.0
    %680 = vmatprep.subr.mxu0 0.0
    %681 = vmatpush1.msra.mxu0 0.0
    %682 = vmatprep.subr.mxu0 0.0
    %683 = vmatpush1.msra.mxu0 0.0
    %684 = vmatprep.subr.mxu0 0.0
    %685 = vmatpush1.msra.mxu0 0.0
    %686 = vmatprep.subr.mxu0 0.0
    %687 = vmatpush1.msra.mxu0 0.0
    %688 = vmatprep.subr.mxu0 0.0
    %689 = vmatpush1.msra.mxu0 0.0
    %690 = vmatprep.subr.mxu0 0.0
    %691 = vmatpush1.msra.mxu0 0.0
    %692 = vmatprep.subr.mxu0 0.0
    %693 = vmatpush1.msra.mxu0 0.0
    %694 = vmatprep.subr.mxu0 0.0
    %695 = vmatpush1.msra.mxu0 0.0
    %696 = vmatprep.subr.mxu0 0.0
    %697 = vmatpush1.msra.mxu0 0.0
    %698 = vmatprep.subr.mxu0 0.0
    %699 = vmatpush1.msra.mxu0 0.0
    %700 = vmatprep.subr.mxu0 0.0
    %701 = vmatpush1.msra.mxu0 0.0
    %702 = vmatprep.subr.mxu0 0.0
    %703 = vmatpush1.msra.mxu0 0.0
    %704 = vmatprep.subr.mxu0 0.0
    %705 = vmatpush1.msra.mxu0 0.0
    %706 = vmatprep.mubr.f32.mxu0 0.0
    %707 = vmatmul.mubr.f32.gmra.mrb[0].mxu0 %v640
    %v708 = vpop.f32.mrb[0].mxu0
    %v709 = vadd.f32 0.0, %v708
    %v710 = vpop.f32.mrb[0].mxu0
    %v711 = vadd.f32 0.0, %v710
    %712 = vdwg.mxu0
    %v714 = vrot.slane %v709, 2
    %v716 = vadd.f32 %v139, %v714
    %v717 = vxor.u32 %v716, 2147483648
    %v718 = vmul.f32 %v717, 1.442695
    %v719 = vpow.pop %v718
    %v720 = vadd.f32 %v719, 1.0
    %v721 = vrcp.pop %v720
    %v722 = vmul.f32 1.0, %v721
    %v723 = vadd.f32 %v709, %v358
    %v724 = vadd.f32 %v711, %v358
    %v727 = vrot.slane %v723, 2
    %v728 = vrot.slane %v724, 2
    %729 = vrot.lane.b32.xlu0 %v727, 28
    %v730 = vpop.permute.xlu0 %729
    %731 = vrot.lane.b32.xlu0 %v728, 28
    %v732 = vpop.permute.xlu0 %731
    %v733 = vsel %vm368, %v730, %v732
    %v735 = vmul.f32 %v722, %v733
    %737 = vrot.lane.b32.xlu0 %v735, 100
    %v738 = vpop.permute.xlu0 %737
    %v740 = vadd.f32 %v139, %v738
    %v741 = vadd.f32 %v141, %v738
    %v742 = vtanh.pop %v740
    %v743 = vtanh.pop %v741
    %v744 = vsub.f32 1.0, %v722
    %747 = vrot.lane.b32.xlu0 %v742, 78
    %v748 = vpop.permute.xlu0 %747
    %749 = vrot.lane.b32.xlu0 %v743, 78
    %v750 = vpop.permute.xlu0 %749
    %v751 = vsel %vm387, %v748, %v750
    %v753 = vmul.f32 %v744, %v751
    %v754 = vrot.slane %v635, 6
    %v756 = vmul.f32 %v722, %v754
    %v757 = vadd.f32 %v753, %v756
    %v759 = vrot.slane %v757, 6
    %760 = vrot.lane.b32.xlu0 %v759, 78
    %v761 = vpop.permute.xlu0 %760
    %v762 = vsel %vm268, %v761, 0
    %764 = vmatprep.subr.mxu0 %v18
    %765 = vmatpush1.msra.mxu0 %v17
    %766 = vmatprep.subr.mxu0 %v20
    %767 = vmatpush1.msra.mxu0 %v19
    %768 = vmatprep.subr.mxu0 %v22
    %769 = vmatpush1.msra.mxu0 %v21
    %770 = vmatprep.subr.mxu0 %v24
    %771 = vmatpush1.msra.mxu0 %v23
    %772 = vmatprep.subr.mxu0 %v26
    %773 = vmatpush1.msra.mxu0 %v25
    %774 = vmatprep.subr.mxu0 %v28
    %775 = vmatpush1.msra.mxu0 %v27
    %776 = vmatprep.subr.mxu0 %v276
    %777 = vmatpush1.msra.mxu0 %v273
    %778 = vmatprep.subr.mxu0 0.0
    %779 = vmatpush1.msra.mxu0 0.0
    %780 = vmatprep.subr.mxu0 0.0
    %781 = vmatpush1.msra.mxu0 0.0
    %782 = vmatprep.subr.mxu0 0.0
    %783 = vmatpush1.msra.mxu0 0.0
    %784 = vmatprep.subr.mxu0 0.0
    %785 = vmatpush1.msra.mxu0 0.0
    %786 = vmatprep.subr.mxu0 0.0
    %787 = vmatpush1.msra.mxu0 0.0
    %788 = vmatprep.subr.mxu0 0.0
    %789 = vmatpush1.msra.mxu0 0.0
    %790 = vmatprep.subr.mxu0 0.0
    %791 = vmatpush1.msra.mxu0 0.0
    %792 = vmatprep.subr.mxu0 0.0
    %793 = vmatpush1.msra.mxu0 0.0
    %794 = vmatprep.subr.mxu0 0.0
    %795 = vmatpush1.msra.mxu0 0.0
    %796 = vmatprep.subr.mxu0 0.0
    %797 = vmatpush1.msra.mxu0 0.0
    %798 = vmatprep.subr.mxu0 0.0
    %799 = vmatpush1.msra.mxu0 0.0
    %800 = vmatprep.subr.mxu0 0.0
    %801 = vmatpush1.msra.mxu0 0.0
    %802 = vmatprep.subr.mxu0 0.0
    %803 = vmatpush1.msra.mxu0 0.0
    %804 = vmatprep.subr.mxu0 0.0
    %805 = vmatpush1.msra.mxu0 0.0
    %806 = vmatprep.subr.mxu0 0.0
    %807 = vmatpush1.msra.mxu0 0.0
    %808 = vmatprep.subr.mxu0 0.0
    %809 = vmatpush1.msra.mxu0 0.0
    %810 = vmatprep.subr.mxu0 0.0
    %811 = vmatpush1.msra.mxu0 0.0
    %812 = vmatprep.subr.mxu0 0.0
    %813 = vmatpush1.msra.mxu0 0.0
    %814 = vmatprep.subr.mxu0 0.0
    %815 = vmatpush1.msra.mxu0 0.0
    %816 = vmatprep.subr.mxu0 0.0
    %817 = vmatpush1.msra.mxu0 0.0
    %818 = vmatprep.subr.mxu0 0.0
    %819 = vmatpush1.msra.mxu0 0.0
    %820 = vmatprep.subr.mxu0 0.0
    %821 = vmatpush1.msra.mxu0 0.0
    %822 = vmatprep.subr.mxu0 0.0
    %823 = vmatpush1.msra.mxu0 0.0
    %824 = vmatprep.subr.mxu0 0.0
    %825 = vmatpush1.msra.mxu0 0.0
    %826 = vmatprep.subr.mxu0 0.0
    %827 = vmatpush1.msra.mxu0 0.0
    %828 = vmatprep.mubr.f32.mxu0 0.0
    %829 = vmatmul.mubr.f32.gmra.mrb[0].mxu0 %v762
    %v830 = vpop.f32.mrb[0].mxu0
    %v831 = vadd.f32 0.0, %v830
    %v832 = vpop.f32.mrb[0].mxu0
    %v833 = vadd.f32 0.0, %v832
    %834 = vdwg.mxu0
    %v835 = vadd.f32 %v145, %v831
    %v836 = vxor.u32 %v835, 2147483648
    %v837 = vmul.f32 %v836, 1.442695
    %v838 = vpow.pop %v837
    %v839 = vadd.f32 %v838, 1.0
    %v840 = vrcp.pop %v839
    %v841 = vmul.f32 1.0, %v840
    %v842 = vadd.f32 %v831, %v358
    %v843 = vadd.f32 %v833, %v358
    %846 = vrot.lane.b32.xlu0 %v842, 28
    %v847 = vpop.permute.xlu0 %846
    %848 = vrot.lane.b32.xlu0 %v843, 28
    %v849 = vpop.permute.xlu0 %848
    %v850 = vsel %vm368, %v847, %v849
    %v852 = vmul.f32 %v841, %v850
    %854 = vrot.lane.b32.xlu0 %v852, 100
    %v855 = vpop.permute.xlu0 %854
    %v857 = vadd.f32 %v145, %v855
    %v858 = vadd.f32 %v147, %v855
    %v859 = vtanh.pop %v857
    %v860 = vtanh.pop %v858
    %v861 = vsub.f32 1.0, %v841
    %864 = vrot.lane.b32.xlu0 %v859, 78
    %v865 = vpop.permute.xlu0 %864
    %866 = vrot.lane.b32.xlu0 %v860, 78
    %v867 = vpop.permute.xlu0 %866
    %v868 = vsel %vm387, %v865, %v867
    %v870 = vmul.f32 %v861, %v868
    %v872 = vmul.f32 %v841, %v759
    %v873 = vadd.f32 %v870, %v872
    %875 = vrot.lane.b32.xlu0 %v873, 78
    %v876 = vpop.permute.xlu0 %875
    %v877 = vsel %vm268, %v876, 0
    %879 = vmatprep.subr.mxu0 %v18
    %880 = vmatpush1.msra.mxu0 %v17
    %881 = vmatprep.subr.mxu0 %v20
    %882 = vmatpush1.msra.mxu0 %v19
    %883 = vmatprep.subr.mxu0 %v22
    %884 = vmatpush1.msra.mxu0 %v21
    %885 = vmatprep.subr.mxu0 %v24
    %886 = vmatpush1.msra.mxu0 %v23
    %887 = vmatprep.subr.mxu0 %v26
    %888 = vmatpush1.msra.mxu0 %v25
    %889 = vmatprep.subr.mxu0 %v28
    %890 = vmatpush1.msra.mxu0 %v27
    %891 = vmatprep.subr.mxu0 %v276
    %892 = vmatpush1.msra.mxu0 %v273
    %893 = vmatprep.subr.mxu0 0.0
    %894 = vmatpush1.msra.mxu0 0.0
    %895 = vmatprep.subr.mxu0 0.0
    %896 = vmatpush1.msra.mxu0 0.0
    %897 = vmatprep.subr.mxu0 0.0
    %898 = vmatpush1.msra.mxu0 0.0
    %899 = vmatprep.subr.mxu0 0.0
    %900 = vmatpush1.msra.mxu0 0.0
    %901 = vmatprep.subr.mxu0 0.0
    %902 = vmatpush1.msra.mxu0 0.0
    %903 = vmatprep.subr.mxu0 0.0
    %904 = vmatpush1.msra.mxu0 0.0
    %905 = vmatprep.subr.mxu0 0.0
    %906 = vmatpush1.msra.mxu0 0.0
    %907 = vmatprep.subr.mxu0 0.0
    %908 = vmatpush1.msra.mxu0 0.0
    %909 = vmatprep.subr.mxu0 0.0
    %910 = vmatpush1.msra.mxu0 0.0
    %911 = vmatprep.subr.mxu0 0.0
    %912 = vmatpush1.msra.mxu0 0.0
    %913 = vmatprep.subr.mxu0 0.0
    %914 = vmatpush1.msra.mxu0 0.0
    %915 = vmatprep.subr.mxu0 0.0
    %916 = vmatpush1.msra.mxu0 0.0
    %917 = vmatprep.subr.mxu0 0.0
    %918 = vmatpush1.msra.mxu0 0.0
    %919 = vmatprep.subr.mxu0 0.0
    %920 = vmatpush1.msra.mxu0 0.0
    %921 = vmatprep.subr.mxu0 0.0
    %922 = vmatpush1.msra.mxu0 0.0
    %923 = vmatprep.subr.mxu0 0.0
    %924 = vmatpush1.msra.mxu0 0.0
    %925 = vmatprep.subr.mxu0 0.0
    %926 = vmatpush1.msra.mxu0 0.0
    %927 = vmatprep.subr.mxu0 0.0
    %928 = vmatpush1.msra.mxu0 0.0
    %929 = vmatprep.subr.mxu0 0.0
    %930 = vmatpush1.msra.mxu0 0.0
    %931 = vmatprep.subr.mxu0 0.0
    %932 = vmatpush1.msra.mxu0 0.0
    %933 = vmatprep.subr.mxu0 0.0
    %934 = vmatpush1.msra.mxu0 0.0
    %935 = vmatprep.subr.mxu0 0.0
    %936 = vmatpush1.msra.mxu0 0.0
    %937 = vmatprep.subr.mxu0 0.0
    %938 = vmatpush1.msra.mxu0 0.0
    %939 = vmatprep.subr.mxu0 0.0
    %940 = vmatpush1.msra.mxu0 0.0
    %941 = vmatprep.subr.mxu0 0.0
    %942 = vmatpush1.msra.mxu0 0.0
    %943 = vmatprep.mubr.f32.mxu0 0.0
    %944 = vmatmul.mubr.f32.gmra.mrb[0].mxu0 %v877
    %v945 = vpop.f32.mrb[0].mxu0
    %v946 = vadd.f32 0.0, %v945
    %v947 = vpop.f32.mrb[0].mxu0
    %v948 = vadd.f32 0.0, %v947
    %949 = vdwg.mxu0
    %v951 = vrot.slane %v946, 6
    %v953 = vadd.f32 %v145, %v951
    %v954 = vxor.u32 %v953, 2147483648
    %v955 = vmul.f32 %v954, 1.442695
    %v956 = vpow.pop %v955
    %v957 = vadd.f32 %v956, 1.0
    %v958 = vrcp.pop %v957
    %v959 = vmul.f32 1.0, %v958
    %v960 = vadd.f32 %v946, %v358
    %v961 = vadd.f32 %v948, %v358
    %v964 = vrot.slane %v960, 6
    %v965 = vrot.slane %v961, 6
    %966 = vrot.lane.b32.xlu0 %v964, 28
    %v967 = vpop.permute.xlu0 %966
    %968 = vrot.lane.b32.xlu0 %v965, 28
    %v969 = vpop.permute.xlu0 %968
    %v970 = vsel %vm368, %v967, %v969
    %v972 = vmul.f32 %v959, %v970
    %974 = vrot.lane.b32.xlu0 %v972, 100
    %v975 = vpop.permute.xlu0 %974
    %v977 = vadd.f32 %v145, %v975
    %v978 = vadd.f32 %v147, %v975
    %v979 = vtanh.pop %v977
    %v980 = vtanh.pop %v978
    %v981 = vsub.f32 1.0, %v959
    %984 = vrot.lane.b32.xlu0 %v979, 78
    %v985 = vpop.permute.xlu0 %984
    %986 = vrot.lane.b32.xlu0 %v980, 78
    %v987 = vpop.permute.xlu0 %986
    %v988 = vsel %vm387, %v985, %v987
    %v990 = vmul.f32 %v981, %v988
    %v991 = vrot.slane %v873, 6
    %v993 = vmul.f32 %v959, %v991
    %v994 = vadd.f32 %v990, %v993
    %v996 = vrot.slane %v994, 2
    %997 = vrot.lane.b32.xlu0 %v996, 78
    %v998 = vpop.permute.xlu0 %997
    %v999 = vsel %vm268, %v998, 0
    %1001 = vmatprep.subr.mxu0 %v18
    %1002 = vmatpush1.msra.mxu0 %v17
    %1003 = vmatprep.subr.mxu0 %v20
    %1004 = vmatpush1.msra.mxu0 %v19
    %1005 = vmatprep.subr.mxu0 %v22
    %1006 = vmatpush1.msra.mxu0 %v21
    %1007 = vmatprep.subr.mxu0 %v24
    %1008 = vmatpush1.msra.mxu0 %v23
    %1009 = vmatprep.subr.mxu0 %v26
    %1010 = vmatpush1.msra.mxu0 %v25
    %1011 = vmatprep.subr.mxu0 %v28
    %1012 = vmatpush1.msra.mxu0 %v27
    %1013 = vmatprep.subr.mxu0 %v276
    %1014 = vmatpush1.msra.mxu0 %v273
    %1015 = vmatprep.subr.mxu0 0.0
    %1016 = vmatpush1.msra.mxu0 0.0
    %1017 = vmatprep.subr.mxu0 0.0
    %1018 = vmatpush1.msra.mxu0 0.0
    %1019 = vmatprep.subr.mxu0 0.0
    %1020 = vmatpush1.msra.mxu0 0.0
    %1021 = vmatprep.subr.mxu0 0.0
    %1022 = vmatpush1.msra.mxu0 0.0
    %1023 = vmatprep.subr.mxu0 0.0
    %1024 = vmatpush1.msra.mxu0 0.0
    %1025 = vmatprep.subr.mxu0 0.0
    %1026 = vmatpush1.msra.mxu0 0.0
    %1027 = vmatprep.subr.mxu0 0.0
    %1028 = vmatpush1.msra.mxu0 0.0
    %1029 = vmatprep.subr.mxu0 0.0
    %1030 = vmatpush1.msra.mxu0 0.0
    %1031 = vmatprep.subr.mxu0 0.0
    %1032 = vmatpush1.msra.mxu0 0.0
    %1033 = vmatprep.subr.mxu0 0.0
    %1034 = vmatpush1.msra.mxu0 0.0
    %1035 = vmatprep.subr.mxu0 0.0
    %1036 = vmatpush1.msra.mxu0 0.0
    %1037 = vmatprep.subr.mxu0 0.0
    %1038 = vmatpush1.msra.mxu0 0.0
    %1039 = vmatprep.subr.mxu0 0.0
    %1040 = vmatpush1.msra.mxu0 0.0
    %1041 = vmatprep.subr.mxu0 0.0
    %1042 = vmatpush1.msra.mxu0 0.0
    %1043 = vmatprep.subr.mxu0 0.0
    %1044 = vmatpush1.msra.mxu0 0.0
    %1045 = vmatprep.subr.mxu0 0.0
    %1046 = vmatpush1.msra.mxu0 0.0
    %1047 = vmatprep.subr.mxu0 0.0
    %1048 = vmatpush1.msra.mxu0 0.0
    %1049 = vmatprep.subr.mxu0 0.0
    %1050 = vmatpush1.msra.mxu0 0.0
    %1051 = vmatprep.subr.mxu0 0.0
    %1052 = vmatpush1.msra.mxu0 0.0
    %1053 = vmatprep.subr.mxu0 0.0
    %1054 = vmatpush1.msra.mxu0 0.0
    %1055 = vmatprep.subr.mxu0 0.0
    %1056 = vmatpush1.msra.mxu0 0.0
    %1057 = vmatprep.subr.mxu0 0.0
    %1058 = vmatpush1.msra.mxu0 0.0
    %1059 = vmatprep.subr.mxu0 0.0
    %1060 = vmatpush1.msra.mxu0 0.0
    %1061 = vmatprep.subr.mxu0 0.0
    %1062 = vmatpush1.msra.mxu0 0.0
    %1063 = vmatprep.subr.mxu0 0.0
    %1064 = vmatpush1.msra.mxu0 0.0
    %1065 = vmatprep.mubr.f32.mxu0 0.0
    %1066 = vmatmul.mubr.f32.gmra.mrb[0].mxu0 %v999
    %v1067 = vpop.f32.mrb[0].mxu0
    %v1068 = vadd.f32 0.0, %v1067
    %v1069 = vpop.f32.mrb[0].mxu0
    %v1070 = vadd.f32 0.0, %v1069
    %1071 = vdwg.mxu0
    %v1073 = vrot.slane %v1068, 4
    %v1075 = vadd.f32 %v145, %v1073
    %v1076 = vxor.u32 %v1075, 2147483648
    %v1077 = vmul.f32 %v1076, 1.442695
    %v1078 = vpow.pop %v1077
    %v1079 = vadd.f32 %v1078, 1.0
    %v1080 = vrcp.pop %v1079
    %v1081 = vmul.f32 1.0, %v1080
    %v1082 = vadd.f32 %v1068, %v358
    %v1083 = vadd.f32 %v1070, %v358
    %v1086 = vrot.slane %v1082, 4
    %v1087 = vrot.slane %v1083, 4
    %1088 = vrot.lane.b32.xlu0 %v1086, 28
    %v1089 = vpop.permute.xlu0 %1088
    %1090 = vrot.lane.b32.xlu0 %v1087, 28
    %v1091 = vpop.permute.xlu0 %1090
    %v1092 = vsel %vm368, %v1089, %v1091
    %v1094 = vmul.f32 %v1081, %v1092
    %1096 = vrot.lane.b32.xlu0 %v1094, 100
    %v1097 = vpop.permute.xlu0 %1096
    %v1099 = vadd.f32 %v145, %v1097
    %v1100 = vadd.f32 %v147, %v1097
    %v1101 = vtanh.pop %v1099
    %v1102 = vtanh.pop %v1100
    %v1103 = vsub.f32 1.0, %v1081
    %1106 = vrot.lane.b32.xlu0 %v1101, 78
    %v1107 = vpop.permute.xlu0 %1106
    %1108 = vrot.lane.b32.xlu0 %v1102, 78
    %v1109 = vpop.permute.xlu0 %1108
    %v1110 = vsel %vm387, %v1107, %v1109
    %v1112 = vmul.f32 %v1103, %v1110
    %v1113 = vrot.slane %v994, 6
    %v1115 = vmul.f32 %v1081, %v1113
    %v1116 = vadd.f32 %v1112, %v1115
    %v1118 = vrot.slane %v1116, 4
    %1119 = vrot.lane.b32.xlu0 %v1118, 78
    %v1120 = vpop.permute.xlu0 %1119
    %v1121 = vsel %vm268, %v1120, 0
    %1123 = vmatprep.subr.mxu0 %v18
    %1124 = vmatpush1.msra.mxu0 %v17
    %1125 = vmatprep.subr.mxu0 %v20
    %1126 = vmatpush1.msra.mxu0 %v19
    %1127 = vmatprep.subr.mxu0 %v22
    %1128 = vmatpush1.msra.mxu0 %v21
    %1129 = vmatprep.subr.mxu0 %v24
    %1130 = vmatpush1.msra.mxu0 %v23
    %1131 = vmatprep.subr.mxu0 %v26
    %1132 = vmatpush1.msra.mxu0 %v25
    %1133 = vmatprep.subr.mxu0 %v28
    %1134 = vmatpush1.msra.mxu0 %v27
    %1135 = vmatprep.subr.mxu0 %v276
    %1136 = vmatpush1.msra.mxu0 %v273
    %1137 = vmatprep.subr.mxu0 0.0
    %1138 = vmatpush1.msra.mxu0 0.0
    %1139 = vmatprep.subr.mxu0 0.0
    %1140 = vmatpush1.msra.mxu0 0.0
    %1141 = vmatprep.subr.mxu0 0.0
    %1142 = vmatpush1.msra.mxu0 0.0
    %1143 = vmatprep.subr.mxu0 0.0
    %1144 = vmatpush1.msra.mxu0 0.0
    %1145 = vmatprep.subr.mxu0 0.0
    %1146 = vmatpush1.msra.mxu0 0.0
    %1147 = vmatprep.subr.mxu0 0.0
    %1148 = vmatpush1.msra.mxu0 0.0
    %1149 = vmatprep.subr.mxu0 0.0
    %1150 = vmatpush1.msra.mxu0 0.0
    %1151 = vmatprep.subr.mxu0 0.0
    %1152 = vmatpush1.msra.mxu0 0.0
    %1153 = vmatprep.subr.mxu0 0.0
    %1154 = vmatpush1.msra.mxu0 0.0
    %1155 = vmatprep.subr.mxu0 0.0
    %1156 = vmatpush1.msra.mxu0 0.0
    %1157 = vmatprep.subr.mxu0 0.0
    %1158 = vmatpush1.msra.mxu0 0.0
    %1159 = vmatprep.subr.mxu0 0.0
    %1160 = vmatpush1.msra.mxu0 0.0
    %1161 = vmatprep.subr.mxu0 0.0
    %1162 = vmatpush1.msra.mxu0 0.0
    %1163 = vmatprep.subr.mxu0 0.0
    %1164 = vmatpush1.msra.mxu0 0.0
    %1165 = vmatprep.subr.mxu0 0.0
    %1166 = vmatpush1.msra.mxu0 0.0
    %1167 = vmatprep.subr.mxu0 0.0
    %1168 = vmatpush1.msra.mxu0 0.0
    %1169 = vmatprep.subr.mxu0 0.0
    %1170 = vmatpush1.msra.mxu0 0.0
    %1171 = vmatprep.subr.mxu0 0.0
    %1172 = vmatpush1.msra.mxu0 0.0
    %1173 = vmatprep.subr.mxu0 0.0
    %1174 = vmatpush1.msra.mxu0 0.0
    %1175 = vmatprep.subr.mxu0 0.0
    %1176 = vmatpush1.msra.mxu0 0.0
    %1177 = vmatprep.subr.mxu0 0.0
    %1178 = vmatpush1.msra.mxu0 0.0
    %1179 = vmatprep.subr.mxu0 0.0
    %1180 = vmatpush1.msra.mxu0 0.0
    %1181 = vmatprep.subr.mxu0 0.0
    %1182 = vmatpush1.msra.mxu0 0.0
    %1183 = vmatprep.subr.mxu0 0.0
    %1184 = vmatpush1.msra.mxu0 0.0
    %1185 = vmatprep.subr.mxu0 0.0
    %1186 = vmatpush1.msra.mxu0 0.0
    %1187 = vmatprep.mubr.f32.mxu0 0.0
    %1188 = vmatmul.mubr.f32.gmra.mrb[0].mxu0 %v1121
    %v1189 = vpop.f32.mrb[0].mxu0
    %v1190 = vadd.f32 0.0, %v1189
    %v1191 = vpop.f32.mrb[0].mxu0
    %v1192 = vadd.f32 0.0, %v1191
    %1193 = vdwg.mxu0
    %v1195 = vrot.slane %v1190, 2
    %v1197 = vadd.f32 %v145, %v1195
    %v1198 = vxor.u32 %v1197, 2147483648
    %v1199 = vmul.f32 %v1198, 1.442695
    %v1200 = vpow.pop %v1199
    %v1201 = vadd.f32 %v1200, 1.0
    %v1202 = vrcp.pop %v1201
    %v1203 = vmul.f32 1.0, %v1202
    %v1204 = vadd.f32 %v1190, %v358
    %v1205 = vadd.f32 %v1192, %v358
    %v1208 = vrot.slane %v1204, 2
    %v1209 = vrot.slane %v1205, 2
    %1210 = vrot.lane.b32.xlu0 %v1208, 28
    %v1211 = vpop.permute.xlu0 %1210
    %1212 = vrot.lane.b32.xlu0 %v1209, 28
    %v1213 = vpop.permute.xlu0 %1212
    %v1214 = vsel %vm368, %v1211, %v1213
    %v1216 = vmul.f32 %v1203, %v1214
    %1218 = vrot.lane.b32.xlu0 %v1216, 100
    %v1219 = vpop.permute.xlu0 %1218
    %v1221 = vadd.f32 %v145, %v1219
    %v1222 = vadd.f32 %v147, %v1219
    %v1223 = vtanh.pop %v1221
    %v1224 = vtanh.pop %v1222
    %v1225 = vsub.f32 1.0, %v1203
    %1228 = vrot.lane.b32.xlu0 %v1223, 78
    %v1229 = vpop.permute.xlu0 %1228
    %1230 = vrot.lane.b32.xlu0 %v1224, 78
    %v1231 = vpop.permute.xlu0 %1230
    %v1232 = vsel %vm387, %v1229, %v1231
    %v1234 = vmul.f32 %v1225, %v1232
    %v1235 = vrot.slane %v1116, 6
    %v1237 = vmul.f32 %v1203, %v1235
    %v1238 = vadd.f32 %v1234, %v1237
    %v1240 = vrot.slane %v1238, 6
    %1241 = vrot.lane.b32.xlu0 %v1240, 78
    %v1242 = vpop.permute.xlu0 %1241
    %v1243 = vsel %vm268, %v1242, 0
    %1245 = vmatprep.subr.mxu0 %v18
    %1246 = vmatpush1.msra.mxu0 %v17
    %1247 = vmatprep.subr.mxu0 %v20
    %1248 = vmatpush1.msra.mxu0 %v19
    %1249 = vmatprep.subr.mxu0 %v22
    %1250 = vmatpush1.msra.mxu0 %v21
    %1251 = vmatprep.subr.mxu0 %v24
    %1252 = vmatpush1.msra.mxu0 %v23
    %1253 = vmatprep.subr.mxu0 %v26
    %1254 = vmatpush1.msra.mxu0 %v25
    %1255 = vmatprep.subr.mxu0 %v28
    %1256 = vmatpush1.msra.mxu0 %v27
    %1257 = vmatprep.subr.mxu0 %v276
    %1258 = vmatpush1.msra.mxu0 %v273
    %1259 = vmatprep.subr.mxu0 0.0
    %1260 = vmatpush1.msra.mxu0 0.0
    %1261 = vmatprep.subr.mxu0 0.0
    %1262 = vmatpush1.msra.mxu0 0.0
    %1263 = vmatprep.subr.mxu0 0.0
    %1264 = vmatpush1.msra.mxu0 0.0
    %1265 = vmatprep.subr.mxu0 0.0
    %1266 = vmatpush1.msra.mxu0 0.0
    %1267 = vmatprep.subr.mxu0 0.0
    %1268 = vmatpush1.msra.mxu0 0.0
    %1269 = vmatprep.subr.mxu0 0.0
    %1270 = vmatpush1.msra.mxu0 0.0
    %1271 = vmatprep.subr.mxu0 0.0
    %1272 = vmatpush1.msra.mxu0 0.0
    %1273 = vmatprep.subr.mxu0 0.0
    %1274 = vmatpush1.msra.mxu0 0.0
    %1275 = vmatprep.subr.mxu0 0.0
    %1276 = vmatpush1.msra.mxu0 0.0
    %1277 = vmatprep.subr.mxu0 0.0
    %1278 = vmatpush1.msra.mxu0 0.0
    %1279 = vmatprep.subr.mxu0 0.0
    %1280 = vmatpush1.msra.mxu0 0.0
    %1281 = vmatprep.subr.mxu0 0.0
    %1282 = vmatpush1.msra.mxu0 0.0
    %1283 = vmatprep.subr.mxu0 0.0
    %1284 = vmatpush1.msra.mxu0 0.0
    %1285 = vmatprep.subr.mxu0 0.0
    %1286 = vmatpush1.msra.mxu0 0.0
    %1287 = vmatprep.subr.mxu0 0.0
    %1288 = vmatpush1.msra.mxu0 0.0
    %1289 = vmatprep.subr.mxu0 0.0
    %1290 = vmatpush1.msra.mxu0 0.0
    %1291 = vmatprep.subr.mxu0 0.0
    %1292 = vmatpush1.msra.mxu0 0.0
    %1293 = vmatprep.subr.mxu0 0.0
    %1294 = vmatpush1.msra.mxu0 0.0
    %1295 = vmatprep.subr.mxu0 0.0
    %1296 = vmatpush1.msra.mxu0 0.0
    %1297 = vmatprep.subr.mxu0 0.0
    %1298 = vmatpush1.msra.mxu0 0.0
    %1299 = vmatprep.subr.mxu0 0.0
    %1300 = vmatpush1.msra.mxu0 0.0
    %1301 = vmatprep.subr.mxu0 0.0
    %1302 = vmatpush1.msra.mxu0 0.0
    %1303 = vmatprep.subr.mxu0 0.0
    %1304 = vmatpush1.msra.mxu0 0.0
    %1305 = vmatprep.subr.mxu0 0.0
    %1306 = vmatpush1.msra.mxu0 0.0
    %1307 = vmatprep.subr.mxu0 0.0
    %1308 = vmatpush1.msra.mxu0 0.0
    %1309 = vmatprep.mubr.f32.mxu0 0.0
    %1310 = vmatmul.mubr.f32.gmra.mrb[0].mxu0 %v1243
    %v1311 = vpop.f32.mrb[0].mxu0
    %v1312 = vadd.f32 0.0, %v1311
    %v1313 = vpop.f32.mrb[0].mxu0
    %v1314 = vadd.f32 0.0, %v1313
    %1315 = vdwg.mxu0
    %v1316 = vadd.f32 %v151, %v1312
    %v1317 = vxor.u32 %v1316, 2147483648
    %v1318 = vmul.f32 %v1317, 1.442695
    %v1319 = vpow.pop %v1318
    %v1320 = vadd.f32 %v1319, 1.0
    %v1321 = vrcp.pop %v1320
    %v1322 = vmul.f32 1.0, %v1321
    %v1323 = vadd.f32 %v1312, %v358
    %v1324 = vadd.f32 %v1314, %v358
    %1327 = vrot.lane.b32.xlu0 %v1323, 28
    %v1328 = vpop.permute.xlu0 %1327
    %1329 = vrot.lane.b32.xlu0 %v1324, 28
    %v1330 = vpop.permute.xlu0 %1329
    %v1331 = vsel %vm368, %v1328, %v1330
    %v1333 = vmul.f32 %v1322, %v1331
    %1335 = vrot.lane.b32.xlu0 %v1333, 100
    %v1336 = vpop.permute.xlu0 %1335
    %v1338 = vadd.f32 %v151, %v1336
    %v1339 = vadd.f32 %v153, %v1336
    %v1340 = vtanh.pop %v1338
    %v1341 = vtanh.pop %v1339
    %v1342 = vsub.f32 1.0, %v1322
    %1345 = vrot.lane.b32.xlu0 %v1340, 78
    %v1346 = vpop.permute.xlu0 %1345
    %1347 = vrot.lane.b32.xlu0 %v1341, 78
    %v1348 = vpop.permute.xlu0 %1347
    %v1349 = vsel %vm387, %v1346, %v1348
    %v1351 = vmul.f32 %v1342, %v1349
    %v1353 = vmul.f32 %v1322, %v1240
    %v1354 = vadd.f32 %v1351, %v1353
    %1356 = vrot.lane.b32.xlu0 %v1354, 78
    %v1357 = vpop.permute.xlu0 %1356
    %v1358 = vsel %vm268, %v1357, 0
    %1360 = vmatprep.subr.mxu0 %v18
    %1361 = vmatpush1.msra.mxu0 %v17
    %1362 = vmatprep.subr.mxu0 %v20
    %1363 = vmatpush1.msra.mxu0 %v19
    %1364 = vmatprep.subr.mxu0 %v22
    %1365 = vmatpush1.msra.mxu0 %v21
    %1366 = vmatprep.subr.mxu0 %v24
    %1367 = vmatpush1.msra.mxu0 %v23
    %1368 = vmatprep.subr.mxu0 %v26
    %1369 = vmatpush1.msra.mxu0 %v25
    %1370 = vmatprep.subr.mxu0 %v28
    %1371 = vmatpush1.msra.mxu0 %v27
    %1372 = vmatprep.subr.mxu0 %v276
    %1373 = vmatpush1.msra.mxu0 %v273
    %1374 = vmatprep.subr.mxu0 0.0
    %1375 = vmatpush1.msra.mxu0 0.0
    %1376 = vmatprep.subr.mxu0 0.0
    %1377 = vmatpush1.msra.mxu0 0.0
    %1378 = vmatprep.subr.mxu0 0.0
    %1379 = vmatpush1.msra.mxu0 0.0
    %1380 = vmatprep.subr.mxu0 0.0
    %1381 = vmatpush1.msra.mxu0 0.0
    %1382 = vmatprep.subr.mxu0 0.0
    %1383 = vmatpush1.msra.mxu0 0.0
    %1384 = vmatprep.subr.mxu0 0.0
    %1385 = vmatpush1.msra.mxu0 0.0
    %1386 = vmatprep.subr.mxu0 0.0
    %1387 = vmatpush1.msra.mxu0 0.0
    %1388 = vmatprep.subr.mxu0 0.0
    %1389 = vmatpush1.msra.mxu0 0.0
    %1390 = vmatprep.subr.mxu0 0.0
    %1391 = vmatpush1.msra.mxu0 0.0
    %1392 = vmatprep.subr.mxu0 0.0
    %1393 = vmatpush1.msra.mxu0 0.0
    %1394 = vmatprep.subr.mxu0 0.0
    %1395 = vmatpush1.msra.mxu0 0.0
    %1396 = vmatprep.subr.mxu0 0.0
    %1397 = vmatpush1.msra.mxu0 0.0
    %1398 = vmatprep.subr.mxu0 0.0
    %1399 = vmatpush1.msra.mxu0 0.0
    %1400 = vmatprep.subr.mxu0 0.0
    %1401 = vmatpush1.msra.mxu0 0.0
    %1402 = vmatprep.subr.mxu0 0.0
    %1403 = vmatpush1.msra.mxu0 0.0
    %1404 = vmatprep.subr.mxu0 0.0
    %1405 = vmatpush1.msra.mxu0 0.0
    %1406 = vmatprep.subr.mxu0 0.0
    %1407 = vmatpush1.msra.mxu0 0.0
    %1408 = vmatprep.subr.mxu0 0.0
    %1409 = vmatpush1.msra.mxu0 0.0
    %1410 = vmatprep.subr.mxu0 0.0
    %1411 = vmatpush1.msra.mxu0 0.0
    %1412 = vmatprep.subr.mxu0 0.0
    %1413 = vmatpush1.msra.mxu0 0.0
    %1414 = vmatprep.subr.mxu0 0.0
    %1415 = vmatpush1.msra.mxu0 0.0
    %1416 = vmatprep.subr.mxu0 0.0
    %1417 = vmatpush1.msra.mxu0 0.0
    %1418 = vmatprep.subr.mxu0 0.0
    %1419 = vmatpush1.msra.mxu0 0.0
    %1420 = vmatprep.subr.mxu0 0.0
    %1421 = vmatpush1.msra.mxu0 0.0
    %1422 = vmatprep.subr.mxu0 0.0
    %1423 = vmatpush1.msra.mxu0 0.0
    %1424 = vmatprep.mubr.f32.mxu0 0.0
    %1425 = vmatmul.mubr.f32.gmra.mrb[0].mxu0 %v1358
    %v1426 = vpop.f32.mrb[0].mxu0
    %v1427 = vadd.f32 0.0, %v1426
    %v1428 = vpop.f32.mrb[0].mxu0
    %v1429 = vadd.f32 0.0, %v1428
    %1430 = vdwg.mxu0
    %v1432 = vrot.slane %v1427, 6
    %v1434 = vadd.f32 %v151, %v1432
    %v1435 = vxor.u32 %v1434, 2147483648
    %v1436 = vmul.f32 %v1435, 1.442695
    %v1437 = vpow.pop %v1436
    %v1438 = vadd.f32 %v1437, 1.0
    %v1439 = vrcp.pop %v1438
    %v1440 = vmul.f32 1.0, %v1439
    %v1441 = vadd.f32 %v1427, %v358
    %v1442 = vadd.f32 %v1429, %v358
    %v1445 = vrot.slane %v1441, 6
    %v1446 = vrot.slane %v1442, 6
    %1447 = vrot.lane.b32.xlu0 %v1445, 28
    %v1448 = vpop.permute.xlu0 %1447
    %1449 = vrot.lane.b32.xlu0 %v1446, 28
    %v1450 = vpop.permute.xlu0 %1449
    %v1451 = vsel %vm368, %v1448, %v1450
    %v1453 = vmul.f32 %v1440, %v1451
    %1455 = vrot.lane.b32.xlu0 %v1453, 100
    %v1456 = vpop.permute.xlu0 %1455
    %v1458 = vadd.f32 %v151, %v1456
    %v1459 = vadd.f32 %v153, %v1456
    %v1460 = vtanh.pop %v1458
    %v1461 = vtanh.pop %v1459
    %v1462 = vsub.f32 1.0, %v1440
    %1465 = vrot.lane.b32.xlu0 %v1460, 78
    %v1466 = vpop.permute.xlu0 %1465
    %1467 = vrot.lane.b32.xlu0 %v1461, 78
    %v1468 = vpop.permute.xlu0 %1467
    %v1469 = vsel %vm387, %v1466, %v1468
    %v1471 = vmul.f32 %v1462, %v1469
    %v1472 = vrot.slane %v1354, 6
    %v1474 = vmul.f32 %v1440, %v1472
    %v1475 = vadd.f32 %v1471, %v1474
    %v1477 = vrot.slane %v1475, 2
    %1478 = vrot.lane.b32.xlu0 %v1477, 78
    %v1479 = vpop.permute.xlu0 %1478
    %v1480 = vsel %vm268, %v1479, 0
    %1482 = vmatprep.subr.mxu0 %v18
    %1483 = vmatpush1.msra.mxu0 %v17
    %1484 = vmatprep.subr.mxu0 %v20
    %1485 = vmatpush1.msra.mxu0 %v19
    %1486 = vmatprep.subr.mxu0 %v22
    %1487 = vmatpush1.msra.mxu0 %v21
    %1488 = vmatprep.subr.mxu0 %v24
    %1489 = vmatpush1.msra.mxu0 %v23
    %1490 = vmatprep.subr.mxu0 %v26
    %1491 = vmatpush1.msra.mxu0 %v25
    %1492 = vmatprep.subr.mxu0 %v28
    %1493 = vmatpush1.msra.mxu0 %v27
    %1494 = vmatprep.subr.mxu0 %v276
    %1495 = vmatpush1.msra.mxu0 %v273
    %1496 = vmatprep.subr.mxu0 0.0
    %1497 = vmatpush1.msra.mxu0 0.0
    %1498 = vmatprep.subr.mxu0 0.0
    %1499 = vmatpush1.msra.mxu0 0.0
    %1500 = vmatprep.subr.mxu0 0.0
    %1501 = vmatpush1.msra.mxu0 0.0
    %1502 = vmatprep.subr.mxu0 0.0
    %1503 = vmatpush1.msra.mxu0 0.0
    %1504 = vmatprep.subr.mxu0 0.0
    %1505 = vmatpush1.msra.mxu0 0.0
    %1506 = vmatprep.subr.mxu0 0.0
    %1507 = vmatpush1.msra.mxu0 0.0
    %1508 = vmatprep.subr.mxu0 0.0
    %1509 = vmatpush1.msra.mxu0 0.0
    %1510 = vmatprep.subr.mxu0 0.0
    %1511 = vmatpush1.msra.mxu0 0.0
    %1512 = vmatprep.subr.mxu0 0.0
    %1513 = vmatpush1.msra.mxu0 0.0
    %1514 = vmatprep.subr.mxu0 0.0
    %1515 = vmatpush1.msra.mxu0 0.0
    %1516 = vmatprep.subr.mxu0 0.0
    %1517 = vmatpush1.msra.mxu0 0.0
    %1518 = vmatprep.subr.mxu0 0.0
    %1519 = vmatpush1.msra.mxu0 0.0
    %1520 = vmatprep.subr.mxu0 0.0
    %1521 = vmatpush1.msra.mxu0 0.0
    %1522 = vmatprep.subr.mxu0 0.0
    %1523 = vmatpush1.msra.mxu0 0.0
    %1524 = vmatprep.subr.mxu0 0.0
    %1525 = vmatpush1.msra.mxu0 0.0
    %1526 = vmatprep.subr.mxu0 0.0
    %1527 = vmatpush1.msra.mxu0 0.0
    %1528 = vmatprep.subr.mxu0 0.0
    %1529 = vmatpush1.msra.mxu0 0.0
    %1530 = vmatprep.subr.mxu0 0.0
    %1531 = vmatpush1.msra.mxu0 0.0
    %1532 = vmatprep.subr.mxu0 0.0
    %1533 = vmatpush1.msra.mxu0 0.0
    %1534 = vmatprep.subr.mxu0 0.0
    %1535 = vmatpush1.msra.mxu0 0.0
    %1536 = vmatprep.subr.mxu0 0.0
    %1537 = vmatpush1.msra.mxu0 0.0
    %1538 = vmatprep.subr.mxu0 0.0
    %1539 = vmatpush1.msra.mxu0 0.0
    %1540 = vmatprep.subr.mxu0 0.0
    %1541 = vmatpush1.msra.mxu0 0.0
    %1542 = vmatprep.subr.mxu0 0.0
    %1543 = vmatpush1.msra.mxu0 0.0
    %1544 = vmatprep.subr.mxu0 0.0
    %1545 = vmatpush1.msra.mxu0 0.0
    %1546 = vmatprep.mubr.f32.mxu0 0.0
    %1547 = vmatmul.mubr.f32.gmra.mrb[0].mxu0 %v1480
    %v1548 = vpop.f32.mrb[0].mxu0
    %v1549 = vadd.f32 0.0, %v1548
    %v1550 = vpop.f32.mrb[0].mxu0
    %v1551 = vadd.f32 0.0, %v1550
    %1552 = vdwg.mxu0
    %v1554 = vrot.slane %v1549, 4
    %v1556 = vadd.f32 %v151, %v1554
    %v1557 = vxor.u32 %v1556, 2147483648
    %v1558 = vmul.f32 %v1557, 1.442695
    %v1559 = vpow.pop %v1558
    %v1560 = vadd.f32 %v1559, 1.0
    %v1561 = vrcp.pop %v1560
    %v1562 = vmul.f32 1.0, %v1561
    %v1563 = vadd.f32 %v1549, %v358
    %v1564 = vadd.f32 %v1551, %v358
    %v1567 = vrot.slane %v1563, 4
    %v1568 = vrot.slane %v1564, 4
    %1569 = vrot.lane.b32.xlu0 %v1567, 28
    %v1570 = vpop.permute.xlu0 %1569
    %1571 = vrot.lane.b32.xlu0 %v1568, 28
    %v1572 = vpop.permute.xlu0 %1571
    %v1573 = vsel %vm368, %v1570, %v1572
    %v1575 = vmul.f32 %v1562, %v1573
    %1577 = vrot.lane.b32.xlu0 %v1575, 100
    %v1578 = vpop.permute.xlu0 %1577
    %v1580 = vadd.f32 %v151, %v1578
    %v1581 = vadd.f32 %v153, %v1578
    %v1582 = vtanh.pop %v1580
    %v1583 = vtanh.pop %v1581
    %v1584 = vsub.f32 1.0, %v1562
    %1587 = vrot.lane.b32.xlu0 %v1582, 78
    %v1588 = vpop.permute.xlu0 %1587
    %1589 = vrot.lane.b32.xlu0 %v1583, 78
    %v1590 = vpop.permute.xlu0 %1589
    %v1591 = vsel %vm387, %v1588, %v1590
    %v1593 = vmul.f32 %v1584, %v1591
    %v1594 = vrot.slane %v1475, 6
    %v1596 = vmul.f32 %v1562, %v1594
    %v1597 = vadd.f32 %v1593, %v1596
    %v1599 = vrot.slane %v1597, 4
    %1600 = vrot.lane.b32.xlu0 %v1599, 78
    %v1601 = vpop.permute.xlu0 %1600
    %v1602 = vsel %vm268, %v1601, 0
    %1604 = vmatprep.subr.mxu0 %v18
    %1605 = vmatpush1.msra.mxu0 %v17
    %1606 = vmatprep.subr.mxu0 %v20
    %1607 = vmatpush1.msra.mxu0 %v19
    %1608 = vmatprep.subr.mxu0 %v22
    %1609 = vmatpush1.msra.mxu0 %v21
    %1610 = vmatprep.subr.mxu0 %v24
    %1611 = vmatpush1.msra.mxu0 %v23
    %1612 = vmatprep.subr.mxu0 %v26
    %1613 = vmatpush1.msra.mxu0 %v25
    %1614 = vmatprep.subr.mxu0 %v28
    %1615 = vmatpush1.msra.mxu0 %v27
    %1616 = vmatprep.subr.mxu0 %v276
    %1617 = vmatpush1.msra.mxu0 %v273
    %1618 = vmatprep.subr.mxu0 0.0
    %1619 = vmatpush1.msra.mxu0 0.0
    %1620 = vmatprep.subr.mxu0 0.0
    %1621 = vmatpush1.msra.mxu0 0.0
    %1622 = vmatprep.subr.mxu0 0.0
    %1623 = vmatpush1.msra.mxu0 0.0
    %1624 = vmatprep.subr.mxu0 0.0
    %1625 = vmatpush1.msra.mxu0 0.0
    %1626 = vmatprep.subr.mxu0 0.0
    %1627 = vmatpush1.msra.mxu0 0.0
    %1628 = vmatprep.subr.mxu0 0.0
    %1629 = vmatpush1.msra.mxu0 0.0
    %1630 = vmatprep.subr.mxu0 0.0
    %1631 = vmatpush1.msra.mxu0 0.0
    %1632 = vmatprep.subr.mxu0 0.0
    %1633 = vmatpush1.msra.mxu0 0.0
    %1634 = vmatprep.subr.mxu0 0.0
    %1635 = vmatpush1.msra.mxu0 0.0
    %1636 = vmatprep.subr.mxu0 0.0
    %1637 = vmatpush1.msra.mxu0 0.0
    %1638 = vmatprep.subr.mxu0 0.0
    %1639 = vmatpush1.msra.mxu0 0.0
    %1640 = vmatprep.subr.mxu0 0.0
    %1641 = vmatpush1.msra.mxu0 0.0
    %1642 = vmatprep.subr.mxu0 0.0
    %1643 = vmatpush1.msra.mxu0 0.0
    %1644 = vmatprep.subr.mxu0 0.0
    %1645 = vmatpush1.msra.mxu0 0.0
    %1646 = vmatprep.subr.mxu0 0.0
    %1647 = vmatpush1.msra.mxu0 0.0
    %1648 = vmatprep.subr.mxu0 0.0
    %1649 = vmatpush1.msra.mxu0 0.0
    %1650 = vmatprep.subr.mxu0 0.0
    %1651 = vmatpush1.msra.mxu0 0.0
    %1652 = vmatprep.subr.mxu0 0.0
    %1653 = vmatpush1.msra.mxu0 0.0
    %1654 = vmatprep.subr.mxu0 0.0
    %1655 = vmatpush1.msra.mxu0 0.0
    %1656 = vmatprep.subr.mxu0 0.0
    %1657 = vmatpush1.msra.mxu0 0.0
    %1658 = vmatprep.subr.mxu0 0.0
    %1659 = vmatpush1.msra.mxu0 0.0
    %1660 = vmatprep.subr.mxu0 0.0
    %1661 = vmatpush1.msra.mxu0 0.0
    %1662 = vmatprep.subr.mxu0 0.0
    %1663 = vmatpush1.msra.mxu0 0.0
    %1664 = vmatprep.subr.mxu0 0.0
    %1665 = vmatpush1.msra.mxu0 0.0
    %1666 = vmatprep.subr.mxu0 0.0
    %1667 = vmatpush1.msra.mxu0 0.0
    %1668 = vmatprep.mubr.f32.mxu0 0.0
    %1669 = vmatmul.mubr.f32.gmra.mrb[0].mxu0 %v1602
    %v1670 = vpop.f32.mrb[0].mxu0
    %v1671 = vadd.f32 0.0, %v1670
    %v1672 = vpop.f32.mrb[0].mxu0
    %v1673 = vadd.f32 0.0, %v1672
    %1674 = vdwg.mxu0
    %v1676 = vrot.slane %v1671, 2
    %v1678 = vadd.f32 %v151, %v1676
    %v1679 = vxor.u32 %v1678, 2147483648
    %v1680 = vmul.f32 %v1679, 1.442695
    %v1681 = vpow.pop %v1680
    %v1682 = vadd.f32 %v1681, 1.0
    %v1683 = vrcp.pop %v1682
    %v1684 = vmul.f32 1.0, %v1683
    %v1685 = vadd.f32 %v1671, %v358
    %v1686 = vadd.f32 %v1673, %v358
    %v1689 = vrot.slane %v1685, 2
    %v1690 = vrot.slane %v1686, 2
    %1691 = vrot.lane.b32.xlu0 %v1689, 28
    %v1692 = vpop.permute.xlu0 %1691
    %1693 = vrot.lane.b32.xlu0 %v1690, 28
    %v1694 = vpop.permute.xlu0 %1693
    %v1695 = vsel %vm368, %v1692, %v1694
    %v1697 = vmul.f32 %v1684, %v1695
    %1699 = vrot.lane.b32.xlu0 %v1697, 100
    %v1700 = vpop.permute.xlu0 %1699
    %v1702 = vadd.f32 %v151, %v1700
    %v1703 = vadd.f32 %v153, %v1700
    %v1704 = vtanh.pop %v1702
    %v1705 = vtanh.pop %v1703
    %v1706 = vsub.f32 1.0, %v1684
    %1709 = vrot.lane.b32.xlu0 %v1704, 78
    %v1710 = vpop.permute.xlu0 %1709
    %1711 = vrot.lane.b32.xlu0 %v1705, 78
    %v1712 = vpop.permute.xlu0 %1711
    %v1713 = vsel %vm387, %v1710, %v1712
    %v1715 = vmul.f32 %v1706, %v1713
    %v1716 = vrot.slane %v1597, 6
    %v1718 = vmul.f32 %v1684, %v1716
    %v1719 = vadd.f32 %v1715, %v1718
    %v1721 = vrot.slane %v1719, 6
    %1722 = vrot.lane.b32.xlu0 %v1721, 78
    %v1723 = vpop.permute.xlu0 %1722
    %v1724 = vsel %vm268, %v1723, 0
    %1726 = vmatprep.subr.mxu0 %v18
    %1727 = vmatpush1.msra.mxu0 %v17
    %1728 = vmatprep.subr.mxu0 %v20
    %1729 = vmatpush1.msra.mxu0 %v19
    %1730 = vmatprep.subr.mxu0 %v22
    %1731 = vmatpush1.msra.mxu0 %v21
    %1732 = vmatprep.subr.mxu0 %v24
    %1733 = vmatpush1.msra.mxu0 %v23
    %1734 = vmatprep.subr.mxu0 %v26
    %1735 = vmatpush1.msra.mxu0 %v25
    %1736 = vmatprep.subr.mxu0 %v28
    %1737 = vmatpush1.msra.mxu0 %v27
    %1738 = vmatprep.subr.mxu0 %v276
    %1739 = vmatpush1.msra.mxu0 %v273
    %1740 = vmatprep.subr.mxu0 0.0
    %1741 = vmatpush1.msra.mxu0 0.0
    %1742 = vmatprep.subr.mxu0 0.0
    %1743 = vmatpush1.msra.mxu0 0.0
    %1744 = vmatprep.subr.mxu0 0.0
    %1745 = vmatpush1.msra.mxu0 0.0
    %1746 = vmatprep.subr.mxu0 0.0
    %1747 = vmatpush1.msra.mxu0 0.0
    %1748 = vmatprep.subr.mxu0 0.0
    %1749 = vmatpush1.msra.mxu0 0.0
    %1750 = vmatprep.subr.mxu0 0.0
    %1751 = vmatpush1.msra.mxu0 0.0
    %1752 = vmatprep.subr.mxu0 0.0
    %1753 = vmatpush1.msra.mxu0 0.0
    %1754 = vmatprep.subr.mxu0 0.0
    %1755 = vmatpush1.msra.mxu0 0.0
    %1756 = vmatprep.subr.mxu0 0.0
    %1757 = vmatpush1.msra.mxu0 0.0
    %1758 = vmatprep.subr.mxu0 0.0
    %1759 = vmatpush1.msra.mxu0 0.0
    %1760 = vmatprep.subr.mxu0 0.0
    %1761 = vmatpush1.msra.mxu0 0.0
    %1762 = vmatprep.subr.mxu0 0.0
    %1763 = vmatpush1.msra.mxu0 0.0
    %1764 = vmatprep.subr.mxu0 0.0
    %1765 = vmatpush1.msra.mxu0 0.0
    %1766 = vmatprep.subr.mxu0 0.0
    %1767 = vmatpush1.msra.mxu0 0.0
    %1768 = vmatprep.subr.mxu0 0.0
    %1769 = vmatpush1.msra.mxu0 0.0
    %1770 = vmatprep.subr.mxu0 0.0
    %1771 = vmatpush1.msra.mxu0 0.0
    %1772 = vmatprep.subr.mxu0 0.0
    %1773 = vmatpush1.msra.mxu0 0.0
    %1774 = vmatprep.subr.mxu0 0.0
    %1775 = vmatpush1.msra.mxu0 0.0
    %1776 = vmatprep.subr.mxu0 0.0
    %1777 = vmatpush1.msra.mxu0 0.0
    %1778 = vmatprep.subr.mxu0 0.0
    %1779 = vmatpush1.msra.mxu0 0.0
    %1780 = vmatprep.subr.mxu0 0.0
    %1781 = vmatpush1.msra.mxu0 0.0
    %1782 = vmatprep.subr.mxu0 0.0
    %1783 = vmatpush1.msra.mxu0 0.0
    %1784 = vmatprep.subr.mxu0 0.0
    %1785 = vmatpush1.msra.mxu0 0.0
    %1786 = vmatprep.subr.mxu0 0.0
    %1787 = vmatpush1.msra.mxu0 0.0
    %1788 = vmatprep.subr.mxu0 0.0
    %1789 = vmatpush1.msra.mxu0 0.0
    %1790 = vmatprep.mubr.f32.mxu0 0.0
    %1791 = vmatmul.mubr.f32.gmra.mrb[0].mxu0 %v1724
    %v1792 = vpop.f32.mrb[0].mxu0
    %v1793 = vadd.f32 0.0, %v1792
    %v1794 = vpop.f32.mrb[0].mxu0
    %v1795 = vadd.f32 0.0, %v1794
    %1796 = vdwg.mxu0
    %v1797 = vadd.f32 %v157, %v1793
    %v1798 = vxor.u32 %v1797, 2147483648
    %v1799 = vmul.f32 %v1798, 1.442695
    %v1800 = vpow.pop %v1799
    %v1801 = vadd.f32 %v1800, 1.0
    %v1802 = vrcp.pop %v1801
    %v1803 = vmul.f32 1.0, %v1802
    %v1804 = vadd.f32 %v1793, %v358
    %v1805 = vadd.f32 %v1795, %v358
    %1808 = vrot.lane.b32.xlu0 %v1804, 28
    %v1809 = vpop.permute.xlu0 %1808
    %1810 = vrot.lane.b32.xlu0 %v1805, 28
    %v1811 = vpop.permute.xlu0 %1810
    %v1812 = vsel %vm368, %v1809, %v1811
    %v1814 = vmul.f32 %v1803, %v1812
    %1816 = vrot.lane.b32.xlu0 %v1814, 100
    %v1817 = vpop.permute.xlu0 %1816
    %v1819 = vadd.f32 %v157, %v1817
    %v1820 = vadd.f32 %v159, %v1817
    %v1821 = vtanh.pop %v1819
    %v1822 = vtanh.pop %v1820
    %v1823 = vsub.f32 1.0, %v1803
    %1826 = vrot.lane.b32.xlu0 %v1821, 78
    %v1827 = vpop.permute.xlu0 %1826
    %1828 = vrot.lane.b32.xlu0 %v1822, 78
    %v1829 = vpop.permute.xlu0 %1828
    %v1830 = vsel %vm387, %v1827, %v1829
    %v1832 = vmul.f32 %v1823, %v1830
    %v1834 = vmul.f32 %v1803, %v1721
    %v1835 = vadd.f32 %v1832, %v1834
    %1837 = vrot.lane.b32.xlu0 %v1835, 78
    %v1838 = vpop.permute.xlu0 %1837
    %v1839 = vsel %vm268, %v1838, 0
    %1841 = vmatprep.subr.mxu0 %v18
    %1842 = vmatpush1.msra.mxu0 %v17
    %1843 = vmatprep.subr.mxu0 %v20
    %1844 = vmatpush1.msra.mxu0 %v19
    %1845 = vmatprep.subr.mxu0 %v22
    %1846 = vmatpush1.msra.mxu0 %v21
    %1847 = vmatprep.subr.mxu0 %v24
    %1848 = vmatpush1.msra.mxu0 %v23
    %1849 = vmatprep.subr.mxu0 %v26
    %1850 = vmatpush1.msra.mxu0 %v25
    %1851 = vmatprep.subr.mxu0 %v28
    %1852 = vmatpush1.msra.mxu0 %v27
    %1853 = vmatprep.subr.mxu0 %v276
    %1854 = vmatpush1.msra.mxu0 %v273
    %1855 = vmatprep.subr.mxu0 0.0
    %1856 = vmatpush1.msra.mxu0 0.0
    %1857 = vmatprep.subr.mxu0 0.0
    %1858 = vmatpush1.msra.mxu0 0.0
    %1859 = vmatprep.subr.mxu0 0.0
    %1860 = vmatpush1.msra.mxu0 0.0
    %1861 = vmatprep.subr.mxu0 0.0
    %1862 = vmatpush1.msra.mxu0 0.0
    %1863 = vmatprep.subr.mxu0 0.0
    %1864 = vmatpush1.msra.mxu0 0.0
    %1865 = vmatprep.subr.mxu0 0.0
    %1866 = vmatpush1.msra.mxu0 0.0
    %1867 = vmatprep.subr.mxu0 0.0
    %1868 = vmatpush1.msra.mxu0 0.0
    %1869 = vmatprep.subr.mxu0 0.0
    %1870 = vmatpush1.msra.mxu0 0.0
    %1871 = vmatprep.subr.mxu0 0.0
    %1872 = vmatpush1.msra.mxu0 0.0
    %1873 = vmatprep.subr.mxu0 0.0
    %1874 = vmatpush1.msra.mxu0 0.0
    %1875 = vmatprep.subr.mxu0 0.0
    %1876 = vmatpush1.msra.mxu0 0.0
    %1877 = vmatprep.subr.mxu0 0.0
    %1878 = vmatpush1.msra.mxu0 0.0
    %1879 = vmatprep.subr.mxu0 0.0
    %1880 = vmatpush1.msra.mxu0 0.0
    %1881 = vmatprep.subr.mxu0 0.0
    %1882 = vmatpush1.msra.mxu0 0.0
    %1883 = vmatprep.subr.mxu0 0.0
    %1884 = vmatpush1.msra.mxu0 0.0
    %1885 = vmatprep.subr.mxu0 0.0
    %1886 = vmatpush1.msra.mxu0 0.0
    %1887 = vmatprep.subr.mxu0 0.0
    %1888 = vmatpush1.msra.mxu0 0.0
    %1889 = vmatprep.subr.mxu0 0.0
    %1890 = vmatpush1.msra.mxu0 0.0
    %1891 = vmatprep.subr.mxu0 0.0
    %1892 = vmatpush1.msra.mxu0 0.0
    %1893 = vmatprep.subr.mxu0 0.0
    %1894 = vmatpush1.msra.mxu0 0.0
    %1895 = vmatprep.subr.mxu0 0.0
    %1896 = vmatpush1.msra.mxu0 0.0
    %1897 = vmatprep.subr.mxu0 0.0
    %1898 = vmatpush1.msra.mxu0 0.0
    %1899 = vmatprep.subr.mxu0 0.0
    %1900 = vmatpush1.msra.mxu0 0.0
    %1901 = vmatprep.subr.mxu0 0.0
    %1902 = vmatpush1.msra.mxu0 0.0
    %1903 = vmatprep.subr.mxu0 0.0
    %1904 = vmatpush1.msra.mxu0 0.0
    %1905 = vmatprep.mubr.f32.mxu0 0.0
    %1906 = vmatmul.mubr.f32.gmra.mrb[0].mxu0 %v1839
    %v1907 = vpop.f32.mrb[0].mxu0
    %v1908 = vadd.f32 0.0, %v1907
    %v1909 = vpop.f32.mrb[0].mxu0
    %v1910 = vadd.f32 0.0, %v1909
    %1911 = vdwg.mxu0
    %v1913 = vrot.slane %v1908, 6
    %v1915 = vadd.f32 %v157, %v1913
    %v1916 = vxor.u32 %v1915, 2147483648
    %v1917 = vmul.f32 %v1916, 1.442695
    %v1918 = vpow.pop %v1917
    %v1919 = vadd.f32 %v1918, 1.0
    %v1920 = vrcp.pop %v1919
    %v1921 = vmul.f32 1.0, %v1920
    %v1922 = vadd.f32 %v1908, %v358
    %v1923 = vadd.f32 %v1910, %v358
    %v1926 = vrot.slane %v1922, 6
    %v1927 = vrot.slane %v1923, 6
    %1928 = vrot.lane.b32.xlu0 %v1926, 28
    %v1929 = vpop.permute.xlu0 %1928
    %1930 = vrot.lane.b32.xlu0 %v1927, 28
    %v1931 = vpop.permute.xlu0 %1930
    %v1932 = vsel %vm368, %v1929, %v1931
    %v1934 = vmul.f32 %v1921, %v1932
    %1936 = vrot.lane.b32.xlu0 %v1934, 100
    %v1937 = vpop.permute.xlu0 %1936
    %v1939 = vadd.f32 %v157, %v1937
    %v1940 = vadd.f32 %v159, %v1937
    %v1941 = vtanh.pop %v1939
    %v1942 = vtanh.pop %v1940
    %v1943 = vsub.f32 1.0, %v1921
    %1946 = vrot.lane.b32.xlu0 %v1941, 78
    %v1947 = vpop.permute.xlu0 %1946
    %1948 = vrot.lane.b32.xlu0 %v1942, 78
    %v1949 = vpop.permute.xlu0 %1948
    %v1950 = vsel %vm387, %v1947, %v1949
    %v1952 = vmul.f32 %v1943, %v1950
    %v1953 = vrot.slane %v1835, 6
    %v1955 = vmul.f32 %v1921, %v1953
    %v1956 = vadd.f32 %v1952, %v1955
    %v1958 = vrot.slane %v1956, 2
    %1959 = vrot.lane.b32.xlu0 %v1958, 78
    %v1960 = vpop.permute.xlu0 %1959
    %v1961 = vsel %vm268, %v1960, 0
    %1963 = vmatprep.subr.mxu0 %v18
    %1964 = vmatpush1.msra.mxu0 %v17
    %1965 = vmatprep.subr.mxu0 %v20
    %1966 = vmatpush1.msra.mxu0 %v19
    %1967 = vmatprep.subr.mxu0 %v22
    %1968 = vmatpush1.msra.mxu0 %v21
    %1969 = vmatprep.subr.mxu0 %v24
    %1970 = vmatpush1.msra.mxu0 %v23
    %1971 = vmatprep.subr.mxu0 %v26
    %1972 = vmatpush1.msra.mxu0 %v25
    %1973 = vmatprep.subr.mxu0 %v28
    %1974 = vmatpush1.msra.mxu0 %v27
    %1975 = vmatprep.subr.mxu0 %v276
    %1976 = vmatpush1.msra.mxu0 %v273
    %1977 = vmatprep.subr.mxu0 0.0
    %1978 = vmatpush1.msra.mxu0 0.0
    %1979 = vmatprep.subr.mxu0 0.0
    %1980 = vmatpush1.msra.mxu0 0.0
    %1981 = vmatprep.subr.mxu0 0.0
    %1982 = vmatpush1.msra.mxu0 0.0
    %1983 = vmatprep.subr.mxu0 0.0
    %1984 = vmatpush1.msra.mxu0 0.0
    %1985 = vmatprep.subr.mxu0 0.0
    %1986 = vmatpush1.msra.mxu0 0.0
    %1987 = vmatprep.subr.mxu0 0.0
    %1988 = vmatpush1.msra.mxu0 0.0
    %1989 = vmatprep.subr.mxu0 0.0
    %1990 = vmatpush1.msra.mxu0 0.0
    %1991 = vmatprep.subr.mxu0 0.0
    %1992 = vmatpush1.msra.mxu0 0.0
    %1993 = vmatprep.subr.mxu0 0.0
    %1994 = vmatpush1.msra.mxu0 0.0
    %1995 = vmatprep.subr.mxu0 0.0
    %1996 = vmatpush1.msra.mxu0 0.0
    %1997 = vmatprep.subr.mxu0 0.0
    %1998 = vmatpush1.msra.mxu0 0.0
    %1999 = vmatprep.subr.mxu0 0.0
    %2000 = vmatpush1.msra.mxu0 0.0
    %2001 = vmatprep.subr.mxu0 0.0
    %2002 = vmatpush1.msra.mxu0 0.0
    %2003 = vmatprep.subr.mxu0 0.0
    %2004 = vmatpush1.msra.mxu0 0.0
    %2005 = vmatprep.subr.mxu0 0.0
    %2006 = vmatpush1.msra.mxu0 0.0
    %2007 = vmatprep.subr.mxu0 0.0
    %2008 = vmatpush1.msra.mxu0 0.0
    %2009 = vmatprep.subr.mxu0 0.0
    %2010 = vmatpush1.msra.mxu0 0.0
    %2011 = vmatprep.subr.mxu0 0.0
    %2012 = vmatpush1.msra.mxu0 0.0
    %2013 = vmatprep.subr.mxu0 0.0
    %2014 = vmatpush1.msra.mxu0 0.0
    %2015 = vmatprep.subr.mxu0 0.0
    %2016 = vmatpush1.msra.mxu0 0.0
    %2017 = vmatprep.subr.mxu0 0.0
    %2018 = vmatpush1.msra.mxu0 0.0
    %2019 = vmatprep.subr.mxu0 0.0
    %2020 = vmatpush1.msra.mxu0 0.0
    %2021 = vmatprep.subr.mxu0 0.0
    %2022 = vmatpush1.msra.mxu0 0.0
    %2023 = vmatprep.subr.mxu0 0.0
    %2024 = vmatpush1.msra.mxu0 0.0
    %2025 = vmatprep.subr.mxu0 0.0
    %2026 = vmatpush1.msra.mxu0 0.0
    %2027 = vmatprep.mubr.f32.mxu0 0.0
    %2028 = vmatmul.mubr.f32.gmra.mrb[0].mxu0 %v1961
    %v2029 = vpop.f32.mrb[0].mxu0
    %v2030 = vadd.f32 0.0, %v2029
    %v2031 = vpop.f32.mrb[0].mxu0
    %v2032 = vadd.f32 0.0, %v2031
    %2033 = vdwg.mxu0
    %v2035 = vrot.slane %v2030, 4
    %v2037 = vadd.f32 %v157, %v2035
    %v2038 = vxor.u32 %v2037, 2147483648
    %v2039 = vmul.f32 %v2038, 1.442695
    %v2040 = vpow.pop %v2039
    %v2041 = vadd.f32 %v2040, 1.0
    %v2042 = vrcp.pop %v2041
    %v2043 = vmul.f32 1.0, %v2042
    %v2044 = vadd.f32 %v2030, %v358
    %v2045 = vadd.f32 %v2032, %v358
    %v2048 = vrot.slane %v2044, 4
    %v2049 = vrot.slane %v2045, 4
    %2050 = vrot.lane.b32.xlu0 %v2048, 28
    %v2051 = vpop.permute.xlu0 %2050
    %2052 = vrot.lane.b32.xlu0 %v2049, 28
    %v2053 = vpop.permute.xlu0 %2052
    %v2054 = vsel %vm368, %v2051, %v2053
    %v2056 = vmul.f32 %v2043, %v2054
    %2058 = vrot.lane.b32.xlu0 %v2056, 100
    %v2059 = vpop.permute.xlu0 %2058
    %v2061 = vadd.f32 %v157, %v2059
    %v2062 = vadd.f32 %v159, %v2059
    %v2063 = vtanh.pop %v2061
    %v2064 = vtanh.pop %v2062
    %v2065 = vsub.f32 1.0, %v2043
    %2068 = vrot.lane.b32.xlu0 %v2063, 78
    %v2069 = vpop.permute.xlu0 %2068
    %2070 = vrot.lane.b32.xlu0 %v2064, 78
    %v2071 = vpop.permute.xlu0 %2070
    %v2072 = vsel %vm387, %v2069, %v2071
    %v2074 = vmul.f32 %v2065, %v2072
    %v2075 = vrot.slane %v1956, 6
    %v2077 = vmul.f32 %v2043, %v2075
    %v2078 = vadd.f32 %v2074, %v2077
    %v2080 = vrot.slane %v2078, 4
    %2081 = vrot.lane.b32.xlu0 %v2080, 78
    %v2082 = vpop.permute.xlu0 %2081
    %v2083 = vsel %vm268, %v2082, 0
    %2085 = vmatprep.subr.mxu0 %v18
    %2086 = vmatpush1.msra.mxu0 %v17
    %2087 = vmatprep.subr.mxu0 %v20
    %2088 = vmatpush1.msra.mxu0 %v19
    %2089 = vmatprep.subr.mxu0 %v22
    %2090 = vmatpush1.msra.mxu0 %v21
    %2091 = vmatprep.subr.mxu0 %v24
    %2092 = vmatpush1.msra.mxu0 %v23
    %2093 = vmatprep.subr.mxu0 %v26
    %2094 = vmatpush1.msra.mxu0 %v25
    %2095 = vmatprep.subr.mxu0 %v28
    %2096 = vmatpush1.msra.mxu0 %v27
    %2097 = vmatprep.subr.mxu0 %v276
    %2098 = vmatpush1.msra.mxu0 %v273
    %2099 = vmatprep.subr.mxu0 0.0
    %2100 = vmatpush1.msra.mxu0 0.0
    %2101 = vmatprep.subr.mxu0 0.0
    %2102 = vmatpush1.msra.mxu0 0.0
    %2103 = vmatprep.subr.mxu0 0.0
    %2104 = vmatpush1.msra.mxu0 0.0
    %2105 = vmatprep.subr.mxu0 0.0
    %2106 = vmatpush1.msra.mxu0 0.0
    %2107 = vmatprep.subr.mxu0 0.0
    %2108 = vmatpush1.msra.mxu0 0.0
    %2109 = vmatprep.subr.mxu0 0.0
    %2110 = vmatpush1.msra.mxu0 0.0
    %2111 = vmatprep.subr.mxu0 0.0
    %2112 = vmatpush1.msra.mxu0 0.0
    %2113 = vmatprep.subr.mxu0 0.0
    %2114 = vmatpush1.msra.mxu0 0.0
    %2115 = vmatprep.subr.mxu0 0.0
    %2116 = vmatpush1.msra.mxu0 0.0
    %2117 = vmatprep.subr.mxu0 0.0
    %2118 = vmatpush1.msra.mxu0 0.0
    %2119 = vmatprep.subr.mxu0 0.0
    %2120 = vmatpush1.msra.mxu0 0.0
    %2121 = vmatprep.subr.mxu0 0.0
    %2122 = vmatpush1.msra.mxu0 0.0
    %2123 = vmatprep.subr.mxu0 0.0
    %2124 = vmatpush1.msra.mxu0 0.0
    %2125 = vmatprep.subr.mxu0 0.0
    %2126 = vmatpush1.msra.mxu0 0.0
    %2127 = vmatprep.subr.mxu0 0.0
    %2128 = vmatpush1.msra.mxu0 0.0
    %2129 = vmatprep.subr.mxu0 0.0
    %2130 = vmatpush1.msra.mxu0 0.0
    %2131 = vmatprep.subr.mxu0 0.0
    %2132 = vmatpush1.msra.mxu0 0.0
    %2133 = vmatprep.subr.mxu0 0.0
    %2134 = vmatpush1.msra.mxu0 0.0
    %2135 = vmatprep.subr.mxu0 0.0
    %2136 = vmatpush1.msra.mxu0 0.0
    %2137 = vmatprep.subr.mxu0 0.0
    %2138 = vmatpush1.msra.mxu0 0.0
    %2139 = vmatprep.subr.mxu0 0.0
    %2140 = vmatpush1.msra.mxu0 0.0
    %2141 = vmatprep.subr.mxu0 0.0
    %2142 = vmatpush1.msra.mxu0 0.0
    %2143 = vmatprep.subr.mxu0 0.0
    %2144 = vmatpush1.msra.mxu0 0.0
    %2145 = vmatprep.subr.mxu0 0.0
    %2146 = vmatpush1.msra.mxu0 0.0
    %2147 = vmatprep.subr.mxu0 0.0
    %2148 = vmatpush1.msra.mxu0 0.0
    %2149 = vmatprep.mubr.f32.mxu0 0.0
    %2150 = vmatmul.mubr.f32.gmra.mrb[0].mxu0 %v2083
    %v2151 = vpop.f32.mrb[0].mxu0
    %v2152 = vadd.f32 0.0, %v2151
    %v2153 = vpop.f32.mrb[0].mxu0
    %v2154 = vadd.f32 0.0, %v2153
    %2155 = vdwg.mxu0
    %v2157 = vrot.slane %v2152, 2
    %v2159 = vadd.f32 %v157, %v2157
    %v2160 = vxor.u32 %v2159, 2147483648
    %v2161 = vmul.f32 %v2160, 1.442695
    %v2162 = vpow.pop %v2161
    %v2163 = vadd.f32 %v2162, 1.0
    %v2164 = vrcp.pop %v2163
    %v2165 = vmul.f32 1.0, %v2164
    %v2166 = vadd.f32 %v2152, %v358
    %v2167 = vadd.f32 %v2154, %v358
    %v2170 = vrot.slane %v2166, 2
    %v2171 = vrot.slane %v2167, 2
    %2172 = vrot.lane.b32.xlu0 %v2170, 28
    %v2173 = vpop.permute.xlu0 %2172
    %2174 = vrot.lane.b32.xlu0 %v2171, 28
    %v2175 = vpop.permute.xlu0 %2174
    %v2176 = vsel %vm368, %v2173, %v2175
    %v2178 = vmul.f32 %v2165, %v2176
    %2180 = vrot.lane.b32.xlu0 %v2178, 100
    %v2181 = vpop.permute.xlu0 %2180
    %v2183 = vadd.f32 %v157, %v2181
    %v2184 = vadd.f32 %v159, %v2181
    %v2185 = vtanh.pop %v2183
    %v2186 = vtanh.pop %v2184
    %v2187 = vsub.f32 1.0, %v2165
    %2190 = vrot.lane.b32.xlu0 %v2185, 78
    %v2191 = vpop.permute.xlu0 %2190
    %2192 = vrot.lane.b32.xlu0 %v2186, 78
    %v2193 = vpop.permute.xlu0 %2192
    %v2194 = vsel %vm387, %v2191, %v2193
    %v2196 = vmul.f32 %v2187, %v2194
    %v2197 = vrot.slane %v2078, 6
    %v2199 = vmul.f32 %v2165, %v2197
    %v2200 = vadd.f32 %v2196, %v2199
    %v2202 = vrot.slane %v2200, 6
    %2203 = vrot.lane.b32.xlu0 %v2202, 78
    %v2204 = vpop.permute.xlu0 %2203
    %v2205 = vsel %vm268, %v2204, 0
    %2207 = vmatprep.subr.mxu0 %v18
    %2208 = vmatpush1.msra.mxu0 %v17
    %2209 = vmatprep.subr.mxu0 %v20
    %2210 = vmatpush1.msra.mxu0 %v19
    %2211 = vmatprep.subr.mxu0 %v22
    %2212 = vmatpush1.msra.mxu0 %v21
    %2213 = vmatprep.subr.mxu0 %v24
    %2214 = vmatpush1.msra.mxu0 %v23
    %2215 = vmatprep.subr.mxu0 %v26
    %2216 = vmatpush1.msra.mxu0 %v25
    %2217 = vmatprep.subr.mxu0 %v28
    %2218 = vmatpush1.msra.mxu0 %v27
    %2219 = vmatprep.subr.mxu0 %v276
    %2220 = vmatpush1.msra.mxu0 %v273
    %2221 = vmatprep.subr.mxu0 0.0
    %2222 = vmatpush1.msra.mxu0 0.0
    %2223 = vmatprep.subr.mxu0 0.0
    %2224 = vmatpush1.msra.mxu0 0.0
    %2225 = vmatprep.subr.mxu0 0.0
    %2226 = vmatpush1.msra.mxu0 0.0
    %2227 = vmatprep.subr.mxu0 0.0
    %2228 = vmatpush1.msra.mxu0 0.0
    %2229 = vmatprep.subr.mxu0 0.0
    %2230 = vmatpush1.msra.mxu0 0.0
    %2231 = vmatprep.subr.mxu0 0.0
    %2232 = vmatpush1.msra.mxu0 0.0
    %2233 = vmatprep.subr.mxu0 0.0
    %2234 = vmatpush1.msra.mxu0 0.0
    %2235 = vmatprep.subr.mxu0 0.0
    %2236 = vmatpush1.msra.mxu0 0.0
    %2237 = vmatprep.subr.mxu0 0.0
    %2238 = vmatpush1.msra.mxu0 0.0
    %2239 = vmatprep.subr.mxu0 0.0
    %2240 = vmatpush1.msra.mxu0 0.0
    %2241 = vmatprep.subr.mxu0 0.0
    %2242 = vmatpush1.msra.mxu0 0.0
    %2243 = vmatprep.subr.mxu0 0.0
    %2244 = vmatpush1.msra.mxu0 0.0
    %2245 = vmatprep.subr.mxu0 0.0
    %2246 = vmatpush1.msra.mxu0 0.0
    %2247 = vmatprep.subr.mxu0 0.0
    %2248 = vmatpush1.msra.mxu0 0.0
    %2249 = vmatprep.subr.mxu0 0.0
    %2250 = vmatpush1.msra.mxu0 0.0
    %2251 = vmatprep.subr.mxu0 0.0
    %2252 = vmatpush1.msra.mxu0 0.0
    %2253 = vmatprep.subr.mxu0 0.0
    %2254 = vmatpush1.msra.mxu0 0.0
    %2255 = vmatprep.subr.mxu0 0.0
    %2256 = vmatpush1.msra.mxu0 0.0
    %2257 = vmatprep.subr.mxu0 0.0
    %2258 = vmatpush1.msra.mxu0 0.0
    %2259 = vmatprep.subr.mxu0 0.0
    %2260 = vmatpush1.msra.mxu0 0.0
    %2261 = vmatprep.subr.mxu0 0.0
    %2262 = vmatpush1.msra.mxu0 0.0
    %2263 = vmatprep.subr.mxu0 0.0
    %2264 = vmatpush1.msra.mxu0 0.0
    %2265 = vmatprep.subr.mxu0 0.0
    %2266 = vmatpush1.msra.mxu0 0.0
    %2267 = vmatprep.subr.mxu0 0.0
    %2268 = vmatpush1.msra.mxu0 0.0
    %2269 = vmatprep.subr.mxu0 0.0
    %2270 = vmatpush1.msra.mxu0 0.0
    %2271 = vmatprep.mubr.f32.mxu0 0.0
    %2272 = vmatmul.mubr.f32.gmra.mrb[0].mxu0 %v2205
    %v2273 = vpop.f32.mrb[0].mxu0
    %v2274 = vadd.f32 0.0, %v2273
    %v2275 = vpop.f32.mrb[0].mxu0
    %v2276 = vadd.f32 0.0, %v2275
    %2277 = vdwg.mxu0
    %v2278 = vadd.f32 %v163, %v2274
    %v2279 = vxor.u32 %v2278, 2147483648
    %v2280 = vmul.f32 %v2279, 1.442695
    %v2281 = vpow.pop %v2280
    %v2282 = vadd.f32 %v2281, 1.0
    %v2283 = vrcp.pop %v2282
    %v2284 = vmul.f32 1.0, %v2283
    %v2285 = vadd.f32 %v2274, %v358
    %v2286 = vadd.f32 %v2276, %v358
    %2289 = vrot.lane.b32.xlu0 %v2285, 28
    %v2290 = vpop.permute.xlu0 %2289
    %2291 = vrot.lane.b32.xlu0 %v2286, 28
    %v2292 = vpop.permute.xlu0 %2291
    %v2293 = vsel %vm368, %v2290, %v2292
    %v2295 = vmul.f32 %v2284, %v2293
    %2297 = vrot.lane.b32.xlu0 %v2295, 100
    %v2298 = vpop.permute.xlu0 %2297
    %v2300 = vadd.f32 %v163, %v2298
    %v2301 = vadd.f32 %v165, %v2298
    %v2302 = vtanh.pop %v2300
    %v2303 = vtanh.pop %v2301
    %v2304 = vsub.f32 1.0, %v2284
    %2307 = vrot.lane.b32.xlu0 %v2302, 78
    %v2308 = vpop.permute.xlu0 %2307
    %2309 = vrot.lane.b32.xlu0 %v2303, 78
    %v2310 = vpop.permute.xlu0 %2309
    %v2311 = vsel %vm387, %v2308, %v2310
    %v2313 = vmul.f32 %v2304, %v2311
    %v2315 = vmul.f32 %v2284, %v2202
    %v2316 = vadd.f32 %v2313, %v2315
    %2318 = vrot.lane.b32.xlu0 %v2316, 78
    %v2319 = vpop.permute.xlu0 %2318
    %v2320 = vsel %vm268, %v2319, 0
    %2322 = vmatprep.subr.mxu0 %v18
    %2323 = vmatpush1.msra.mxu0 %v17
    %2324 = vmatprep.subr.mxu0 %v20
    %2325 = vmatpush1.msra.mxu0 %v19
    %2326 = vmatprep.subr.mxu0 %v22
    %2327 = vmatpush1.msra.mxu0 %v21
    %2328 = vmatprep.subr.mxu0 %v24
    %2329 = vmatpush1.msra.mxu0 %v23
    %2330 = vmatprep.subr.mxu0 %v26
    %2331 = vmatpush1.msra.mxu0 %v25
    %2332 = vmatprep.subr.mxu0 %v28
    %2333 = vmatpush1.msra.mxu0 %v27
    %2334 = vmatprep.subr.mxu0 %v276
    %2335 = vmatpush1.msra.mxu0 %v273
    %2336 = vmatprep.subr.mxu0 0.0
    %2337 = vmatpush1.msra.mxu0 0.0
    %2338 = vmatprep.subr.mxu0 0.0
    %2339 = vmatpush1.msra.mxu0 0.0
    %2340 = vmatprep.subr.mxu0 0.0
    %2341 = vmatpush1.msra.mxu0 0.0
    %2342 = vmatprep.subr.mxu0 0.0
    %2343 = vmatpush1.msra.mxu0 0.0
    %2344 = vmatprep.subr.mxu0 0.0
    %2345 = vmatpush1.msra.mxu0 0.0
    %2346 = vmatprep.subr.mxu0 0.0
    %2347 = vmatpush1.msra.mxu0 0.0
    %2348 = vmatprep.subr.mxu0 0.0
    %2349 = vmatpush1.msra.mxu0 0.0
    %2350 = vmatprep.subr.mxu0 0.0
    %2351 = vmatpush1.msra.mxu0 0.0
    %2352 = vmatprep.subr.mxu0 0.0
    %2353 = vmatpush1.msra.mxu0 0.0
    %2354 = vmatprep.subr.mxu0 0.0
    %2355 = vmatpush1.msra.mxu0 0.0
    %2356 = vmatprep.subr.mxu0 0.0
    %2357 = vmatpush1.msra.mxu0 0.0
    %2358 = vmatprep.subr.mxu0 0.0
    %2359 = vmatpush1.msra.mxu0 0.0
    %2360 = vmatprep.subr.mxu0 0.0
    %2361 = vmatpush1.msra.mxu0 0.0
    %2362 = vmatprep.subr.mxu0 0.0
    %2363 = vmatpush1.msra.mxu0 0.0
    %2364 = vmatprep.subr.mxu0 0.0
    %2365 = vmatpush1.msra.mxu0 0.0
    %2366 = vmatprep.subr.mxu0 0.0
    %2367 = vmatpush1.msra.mxu0 0.0
    %2368 = vmatprep.subr.mxu0 0.0
    %2369 = vmatpush1.msra.mxu0 0.0
    %2370 = vmatprep.subr.mxu0 0.0
    %2371 = vmatpush1.msra.mxu0 0.0
    %2372 = vmatprep.subr.mxu0 0.0
    %2373 = vmatpush1.msra.mxu0 0.0
    %2374 = vmatprep.subr.mxu0 0.0
    %2375 = vmatpush1.msra.mxu0 0.0
    %2376 = vmatprep.subr.mxu0 0.0
    %2377 = vmatpush1.msra.mxu0 0.0
    %2378 = vmatprep.subr.mxu0 0.0
    %2379 = vmatpush1.msra.mxu0 0.0
    %2380 = vmatprep.subr.mxu0 0.0
    %2381 = vmatpush1.msra.mxu0 0.0
    %2382 = vmatprep.subr.mxu0 0.0
    %2383 = vmatpush1.msra.mxu0 0.0
    %2384 = vmatprep.subr.mxu0 0.0
    %2385 = vmatpush1.msra.mxu0 0.0
    %2386 = vmatprep.mubr.f32.mxu0 0.0
    %2387 = vmatmul.mubr.f32.gmra.mrb[0].mxu0 %v2320
    %v2388 = vpop.f32.mrb[0].mxu0
    %v2389 = vadd.f32 0.0, %v2388
    %v2390 = vpop.f32.mrb[0].mxu0
    %v2391 = vadd.f32 0.0, %v2390
    %2392 = vdwg.mxu0
    %v2394 = vrot.slane %v2389, 6
    %v2396 = vadd.f32 %v163, %v2394
    %v2397 = vxor.u32 %v2396, 2147483648
    %v2398 = vmul.f32 %v2397, 1.442695
    %v2399 = vpow.pop %v2398
    %v2400 = vadd.f32 %v2399, 1.0
    %v2401 = vrcp.pop %v2400
    %v2402 = vmul.f32 1.0, %v2401
    %v2403 = vadd.f32 %v2389, %v358
    %v2404 = vadd.f32 %v2391, %v358
    %v2407 = vrot.slane %v2403, 6
    %v2408 = vrot.slane %v2404, 6
    %2409 = vrot.lane.b32.xlu0 %v2407, 28
    %v2410 = vpop.permute.xlu0 %2409
    %2411 = vrot.lane.b32.xlu0 %v2408, 28
    %v2412 = vpop.permute.xlu0 %2411
    %v2413 = vsel %vm368, %v2410, %v2412
    %v2415 = vmul.f32 %v2402, %v2413
    %2417 = vrot.lane.b32.xlu0 %v2415, 100
    %v2418 = vpop.permute.xlu0 %2417
    %v2420 = vadd.f32 %v163, %v2418
    %v2421 = vadd.f32 %v165, %v2418
    %v2422 = vtanh.pop %v2420
    %v2423 = vtanh.pop %v2421
    %v2424 = vsub.f32 1.0, %v2402
    %2427 = vrot.lane.b32.xlu0 %v2422, 78
    %v2428 = vpop.permute.xlu0 %2427
    %2429 = vrot.lane.b32.xlu0 %v2423, 78
    %v2430 = vpop.permute.xlu0 %2429
    %v2431 = vsel %vm387, %v2428, %v2430
    %v2433 = vmul.f32 %v2424, %v2431
    %v2434 = vrot.slane %v2316, 6
    %v2436 = vmul.f32 %v2402, %v2434
    %v2437 = vadd.f32 %v2433, %v2436
    %v2439 = vrot.slane %v2437, 2
    %2440 = vrot.lane.b32.xlu0 %v2439, 78
    %v2441 = vpop.permute.xlu0 %2440
    %v2442 = vsel %vm268, %v2441, 0
    %2444 = vmatprep.subr.mxu0 %v18
    %2445 = vmatpush1.msra.mxu0 %v17
    %2446 = vmatprep.subr.mxu0 %v20
    %2447 = vmatpush1.msra.mxu0 %v19
    %2448 = vmatprep.subr.mxu0 %v22
    %2449 = vmatpush1.msra.mxu0 %v21
    %2450 = vmatprep.subr.mxu0 %v24
    %2451 = vmatpush1.msra.mxu0 %v23
    %2452 = vmatprep.subr.mxu0 %v26
    %2453 = vmatpush1.msra.mxu0 %v25
    %2454 = vmatprep.subr.mxu0 %v28
    %2455 = vmatpush1.msra.mxu0 %v27
    %2456 = vmatprep.subr.mxu0 %v276
    %2457 = vmatpush1.msra.mxu0 %v273
    %2458 = vmatprep.subr.mxu0 0.0
    %2459 = vmatpush1.msra.mxu0 0.0
    %2460 = vmatprep.subr.mxu0 0.0
    %2461 = vmatpush1.msra.mxu0 0.0
    %2462 = vmatprep.subr.mxu0 0.0
    %2463 = vmatpush1.msra.mxu0 0.0
    %2464 = vmatprep.subr.mxu0 0.0
    %2465 = vmatpush1.msra.mxu0 0.0
    %2466 = vmatprep.subr.mxu0 0.0
    %2467 = vmatpush1.msra.mxu0 0.0
    %2468 = vmatprep.subr.mxu0 0.0
    %2469 = vmatpush1.msra.mxu0 0.0
    %2470 = vmatprep.subr.mxu0 0.0
    %2471 = vmatpush1.msra.mxu0 0.0
    %2472 = vmatprep.subr.mxu0 0.0
    %2473 = vmatpush1.msra.mxu0 0.0
    %2474 = vmatprep.subr.mxu0 0.0
    %2475 = vmatpush1.msra.mxu0 0.0
    %2476 = vmatprep.subr.mxu0 0.0
    %2477 = vmatpush1.msra.mxu0 0.0
    %2478 = vmatprep.subr.mxu0 0.0
    %2479 = vmatpush1.msra.mxu0 0.0
    %2480 = vmatprep.subr.mxu0 0.0
    %2481 = vmatpush1.msra.mxu0 0.0
    %2482 = vmatprep.subr.mxu0 0.0
    %2483 = vmatpush1.msra.mxu0 0.0
    %2484 = vmatprep.subr.mxu0 0.0
    %2485 = vmatpush1.msra.mxu0 0.0
    %2486 = vmatprep.subr.mxu0 0.0
    %2487 = vmatpush1.msra.mxu0 0.0
    %2488 = vmatprep.subr.mxu0 0.0
    %2489 = vmatpush1.msra.mxu0 0.0
    %2490 = vmatprep.subr.mxu0 0.0
    %2491 = vmatpush1.msra.mxu0 0.0
    %2492 = vmatprep.subr.mxu0 0.0
    %2493 = vmatpush1.msra.mxu0 0.0
    %2494 = vmatprep.subr.mxu0 0.0
    %2495 = vmatpush1.msra.mxu0 0.0
    %2496 = vmatprep.subr.mxu0 0.0
    %2497 = vmatpush1.msra.mxu0 0.0
    %2498 = vmatprep.subr.mxu0 0.0
    %2499 = vmatpush1.msra.mxu0 0.0
    %2500 = vmatprep.subr.mxu0 0.0
    %2501 = vmatpush1.msra.mxu0 0.0
    %2502 = vmatprep.subr.mxu0 0.0
    %2503 = vmatpush1.msra.mxu0 0.0
    %2504 = vmatprep.subr.mxu0 0.0
    %2505 = vmatpush1.msra.mxu0 0.0
    %2506 = vmatprep.subr.mxu0 0.0
    %2507 = vmatpush1.msra.mxu0 0.0
    %2508 = vmatprep.mubr.f32.mxu0 0.0
    %2509 = vmatmul.mubr.f32.gmra.mrb[0].mxu0 %v2442
    %v2510 = vpop.f32.mrb[0].mxu0
    %v2511 = vadd.f32 0.0, %v2510
    %v2512 = vpop.f32.mrb[0].mxu0
    %v2513 = vadd.f32 0.0, %v2512
    %2514 = vdwg.mxu0
    %v2516 = vrot.slane %v2511, 4
    %v2518 = vadd.f32 %v163, %v2516
    %v2519 = vxor.u32 %v2518, 2147483648
    %v2520 = vmul.f32 %v2519, 1.442695
    %v2521 = vpow.pop %v2520
    %v2522 = vadd.f32 %v2521, 1.0
    %v2523 = vrcp.pop %v2522
    %v2524 = vmul.f32 1.0, %v2523
    %v2525 = vadd.f32 %v2511, %v358
    %v2526 = vadd.f32 %v2513, %v358
    %v2529 = vrot.slane %v2525, 4
    %v2530 = vrot.slane %v2526, 4
    %2531 = vrot.lane.b32.xlu0 %v2529, 28
    %v2532 = vpop.permute.xlu0 %2531
    %2533 = vrot.lane.b32.xlu0 %v2530, 28
    %v2534 = vpop.permute.xlu0 %2533
    %v2535 = vsel %vm368, %v2532, %v2534
    %v2537 = vmul.f32 %v2524, %v2535
    %2539 = vrot.lane.b32.xlu0 %v2537, 100
    %v2540 = vpop.permute.xlu0 %2539
    %v2542 = vadd.f32 %v163, %v2540
    %v2543 = vadd.f32 %v165, %v2540
    %v2544 = vtanh.pop %v2542
    %v2545 = vtanh.pop %v2543
    %v2546 = vsub.f32 1.0, %v2524
    %2549 = vrot.lane.b32.xlu0 %v2544, 78
    %v2550 = vpop.permute.xlu0 %2549
    %2551 = vrot.lane.b32.xlu0 %v2545, 78
    %v2552 = vpop.permute.xlu0 %2551
    %v2553 = vsel %vm387, %v2550, %v2552
    %v2555 = vmul.f32 %v2546, %v2553
    %v2556 = vrot.slane %v2437, 6
    %v2558 = vmul.f32 %v2524, %v2556
    %v2559 = vadd.f32 %v2555, %v2558
    %v2561 = vrot.slane %v2559, 4
    %2562 = vrot.lane.b32.xlu0 %v2561, 78
    %v2563 = vpop.permute.xlu0 %2562
    %v2564 = vsel %vm268, %v2563, 0
    %2566 = vmatprep.subr.mxu0 %v18
    %2567 = vmatpush1.msra.mxu0 %v17
    %2568 = vmatprep.subr.mxu0 %v20
    %2569 = vmatpush1.msra.mxu0 %v19
    %2570 = vmatprep.subr.mxu0 %v22
    %2571 = vmatpush1.msra.mxu0 %v21
    %2572 = vmatprep.subr.mxu0 %v24
    %2573 = vmatpush1.msra.mxu0 %v23
    %2574 = vmatprep.subr.mxu0 %v26
    %2575 = vmatpush1.msra.mxu0 %v25
    %2576 = vmatprep.subr.mxu0 %v28
    %2577 = vmatpush1.msra.mxu0 %v27
    %2578 = vmatprep.subr.mxu0 %v276
    %2579 = vmatpush1.msra.mxu0 %v273
    %2580 = vmatprep.subr.mxu0 0.0
    %2581 = vmatpush1.msra.mxu0 0.0
    %2582 = vmatprep.subr.mxu0 0.0
    %2583 = vmatpush1.msra.mxu0 0.0
    %2584 = vmatprep.subr.mxu0 0.0
    %2585 = vmatpush1.msra.mxu0 0.0
    %2586 = vmatprep.subr.mxu0 0.0
    %2587 = vmatpush1.msra.mxu0 0.0
    %2588 = vmatprep.subr.mxu0 0.0
    %2589 = vmatpush1.msra.mxu0 0.0
    %2590 = vmatprep.subr.mxu0 0.0
    %2591 = vmatpush1.msra.mxu0 0.0
    %2592 = vmatprep.subr.mxu0 0.0
    %2593 = vmatpush1.msra.mxu0 0.0
    %2594 = vmatprep.subr.mxu0 0.0
    %2595 = vmatpush1.msra.mxu0 0.0
    %2596 = vmatprep.subr.mxu0 0.0
    %2597 = vmatpush1.msra.mxu0 0.0
    %2598 = vmatprep.subr.mxu0 0.0
    %2599 = vmatpush1.msra.mxu0 0.0
    %2600 = vmatprep.subr.mxu0 0.0
    %2601 = vmatpush1.msra.mxu0 0.0
    %2602 = vmatprep.subr.mxu0 0.0
    %2603 = vmatpush1.msra.mxu0 0.0
    %2604 = vmatprep.subr.mxu0 0.0
    %2605 = vmatpush1.msra.mxu0 0.0
    %2606 = vmatprep.subr.mxu0 0.0
    %2607 = vmatpush1.msra.mxu0 0.0
    %2608 = vmatprep.subr.mxu0 0.0
    %2609 = vmatpush1.msra.mxu0 0.0
    %2610 = vmatprep.subr.mxu0 0.0
    %2611 = vmatpush1.msra.mxu0 0.0
    %2612 = vmatprep.subr.mxu0 0.0
    %2613 = vmatpush1.msra.mxu0 0.0
    %2614 = vmatprep.subr.mxu0 0.0
    %2615 = vmatpush1.msra.mxu0 0.0
    %2616 = vmatprep.subr.mxu0 0.0
    %2617 = vmatpush1.msra.mxu0 0.0
    %2618 = vmatprep.subr.mxu0 0.0
    %2619 = vmatpush1.msra.mxu0 0.0
    %2620 = vmatprep.subr.mxu0 0.0
    %2621 = vmatpush1.msra.mxu0 0.0
    %2622 = vmatprep.subr.mxu0 0.0
    %2623 = vmatpush1.msra.mxu0 0.0
    %2624 = vmatprep.subr.mxu0 0.0
    %2625 = vmatpush1.msra.mxu0 0.0
    %2626 = vmatprep.subr.mxu0 0.0
    %2627 = vmatpush1.msra.mxu0 0.0
    %2628 = vmatprep.subr.mxu0 0.0
    %2629 = vmatpush1.msra.mxu0 0.0
    %2630 = vmatprep.mubr.f32.mxu0 0.0
    %2631 = vmatmul.mubr.f32.gmra.mrb[0].mxu0 %v2564
    %v2632 = vpop.f32.mrb[0].mxu0
    %v2633 = vadd.f32 0.0, %v2632
    %v2634 = vpop.f32.mrb[0].mxu0
    %v2635 = vadd.f32 0.0, %v2634
    %2636 = vdwg.mxu0
    %v2638 = vrot.slane %v2633, 2
    %v2640 = vadd.f32 %v163, %v2638
    %v2641 = vxor.u32 %v2640, 2147483648
    %v2642 = vmul.f32 %v2641, 1.442695
    %v2643 = vpow.pop %v2642
    %v2644 = vadd.f32 %v2643, 1.0
    %v2645 = vrcp.pop %v2644
    %v2646 = vmul.f32 1.0, %v2645
    %v2647 = vadd.f32 %v2633, %v358
    %v2648 = vadd.f32 %v2635, %v358
    %v2651 = vrot.slane %v2647, 2
    %v2652 = vrot.slane %v2648, 2
    %2653 = vrot.lane.b32.xlu0 %v2651, 28
    %v2654 = vpop.permute.xlu0 %2653
    %2655 = vrot.lane.b32.xlu0 %v2652, 28
    %v2656 = vpop.permute.xlu0 %2655
    %v2657 = vsel %vm368, %v2654, %v2656
    %v2659 = vmul.f32 %v2646, %v2657
    %2661 = vrot.lane.b32.xlu0 %v2659, 100
    %v2662 = vpop.permute.xlu0 %2661
    %v2664 = vadd.f32 %v163, %v2662
    %v2665 = vadd.f32 %v165, %v2662
    %v2666 = vtanh.pop %v2664
    %v2667 = vtanh.pop %v2665
    %v2668 = vsub.f32 1.0, %v2646
    %2671 = vrot.lane.b32.xlu0 %v2666, 78
    %v2672 = vpop.permute.xlu0 %2671
    %2673 = vrot.lane.b32.xlu0 %v2667, 78
    %v2674 = vpop.permute.xlu0 %2673
    %v2675 = vsel %vm387, %v2672, %v2674
    %v2677 = vmul.f32 %v2668, %v2675
    %v2678 = vrot.slane %v2559, 6
    %v2680 = vmul.f32 %v2646, %v2678
    %v2681 = vadd.f32 %v2677, %v2680
    %v2682 = vsel %vm65, %v392, %v513
    %vm2683 = vcmask 1043456
    %v2684 = vsel %vm2683, %v2682, %v635
    %vm2685 = vcmask 1045504
    %v2686 = vsel %vm2685, %v2684, %v757
    %v2687 = vsel %vm65, %v873, %v994
    %v2688 = vsel %vm2683, %v2687, %v1116
    %v2689 = vsel %vm2685, %v2688, %v1238
    %v2690 = vsel %vm65, %v1354, %v1475
    %v2691 = vsel %vm2683, %v2690, %v1597
    %v2692 = vsel %vm2685, %v2691, %v1719
    %v2693 = vsel %vm65, %v1835, %v1956
    %v2694 = vsel %vm2683, %v2693, %v2078
    %v2695 = vsel %vm2685, %v2694, %v2200
    %v2696 = vsel %vm65, %v2316, %v2437
    %v2697 = vsel %vm2683, %v2696, %v2559
    %v2698 = vsel %vm2685, %v2697, %v2681
    %v2699 = vmax.f32 %v2686, 0.0
    %v2700 = vmax.f32 %v2689, 0.0
    %v2701 = vmax.f32 %v2692, 0.0
    %v2702 = vmax.f32 %v2695, 0.0
    %v2703 = vmax.f32 %v2698, 0.0
    %v2704 = vld [vmem:[%s1 + $0xb0] sm:$0xff]
    %v2705 = vld [vmem:[%s1 + $0xc0] sm:$0xff]
    %v2706 = vld [vmem:[%s1 + $0xd0] sm:$0xff]
    %v2707 = vld [vmem:[%s1 + $0xe0] sm:$0xff]
    %v2708 = vld [vmem:[%s1 + $0xf0] sm:$0xff]
    %v2709 = vld [vmem:[%s1 + $0x100] sm:$0xff]
    %v2710 = vld [vmem:[%s1 + $0x110] sm:$0x3]
    %v2711 = vld [vmem:[%s1 + $0x120] ss:$0 sm:$0xff]
    %2717 = vrot.lane.b32.xlu0 %v2699, 78
    %v2718 = vpop.permute.xlu0 %2717
    %2719 = vrot.lane.b32.xlu0 %v2700, 78
    %v2720 = vpop.permute.xlu0 %2719
    %2721 = vrot.lane.b32.xlu0 %v2701, 78
    %v2722 = vpop.permute.xlu0 %2721
    %2723 = vrot.lane.b32.xlu0 %v2702, 78
    %v2724 = vpop.permute.xlu0 %2723
    %2725 = vrot.lane.b32.xlu0 %v2703, 78
    %v2726 = vpop.permute.xlu0 %2725
    %v2727 = vsel %vm268, %v2718, 0
    %v2729 = vsel %vm268, %v2720, 0
    %v2731 = vsel %vm268, %v2722, 0
    %v2733 = vsel %vm268, %v2724, 0
    %v2735 = vsel %vm268, %v2726, 0
    %v2738 = vsel %vm65, %v2710, 0
    %2740 = vmatprep.subr.mxu0 0.0
    %2741 = vmatpush1.msra.mxu0 %v2704
    %2742 = vmatprep.subr.mxu0 0.0
    %2743 = vmatpush1.msra.mxu0 %v2705
    %2744 = vmatprep.subr.mxu0 0.0
    %2745 = vmatpush1.msra.mxu0 %v2706
    %2746 = vmatprep.subr.mxu0 0.0
    %2747 = vmatpush1.msra.mxu0 %v2707
    %2748 = vmatprep.subr.mxu0 0.0
    %2749 = vmatpush1.msra.mxu0 %v2708
    %2750 = vmatprep.subr.mxu0 0.0
    %2751 = vmatpush1.msra.mxu0 %v2709
    %2752 = vmatprep.subr.mxu0 0.0
    %2753 = vmatpush1.msra.mxu0 %v2738
    %2754 = vmatprep.subr.mxu0 0.0
    %2755 = vmatpush1.msra.mxu0 0.0
    %2756 = vmatprep.subr.mxu0 0.0
    %2757 = vmatpush1.msra.mxu0 0.0
    %2758 = vmatprep.subr.mxu0 0.0
    %2759 = vmatpush1.msra.mxu0 0.0
    %2760 = vmatprep.subr.mxu0 0.0
    %2761 = vmatpush1.msra.mxu0 0.0
    %2762 = vmatprep.subr.mxu0 0.0
    %2763 = vmatpush1.msra.mxu0 0.0
    %2764 = vmatprep.subr.mxu0 0.0
    %2765 = vmatpush1.msra.mxu0 0.0
    %2766 = vmatprep.subr.mxu0 0.0
    %2767 = vmatpush1.msra.mxu0 0.0
    %2768 = vmatprep.subr.mxu0 0.0
    %2769 = vmatpush1.msra.mxu0 0.0
    %2770 = vmatprep.subr.mxu0 0.0
    %2771 = vmatpush1.msra.mxu0 0.0
    %2772 = vmatprep.subr.mxu0 0.0
    %2773 = vmatpush1.msra.mxu0 0.0
    %2774 = vmatprep.subr.mxu0 0.0
    %2775 = vmatpush1.msra.mxu0 0.0
    %2776 = vmatprep.subr.mxu0 0.0
    %2777 = vmatpush1.msra.mxu0 0.0
    %2778 = vmatprep.subr.mxu0 0.0
    %2779 = vmatpush1.msra.mxu0 0.0
    %2780 = vmatprep.subr.mxu0 0.0
    %2781 = vmatpush1.msra.mxu0 0.0
    %2782 = vmatprep.subr.mxu0 0.0
    %2783 = vmatpush1.msra.mxu0 0.0
    %2784 = vmatprep.subr.mxu0 0.0
    %2785 = vmatpush1.msra.mxu0 0.0
    %2786 = vmatprep.subr.mxu0 0.0
    %2787 = vmatpush1.msra.mxu0 0.0
    %2788 = vmatprep.subr.mxu0 0.0
    %2789 = vmatpush1.msra.mxu0 0.0
    %2790 = vmatprep.subr.mxu0 0.0
    %2791 = vmatpush1.msra.mxu0 0.0
    %2792 = vmatprep.subr.mxu0 0.0
    %2793 = vmatpush1.msra.mxu0 0.0
    %2794 = vmatprep.subr.mxu0 0.0
    %2795 = vmatpush1.msra.mxu0 0.0
    %2796 = vmatprep.subr.mxu0 0.0
    %2797 = vmatpush1.msra.mxu0 0.0
    %2798 = vmatprep.subr.mxu0 0.0
    %2799 = vmatpush1.msra.mxu0 0.0
    %2800 = vmatprep.subr.mxu0 0.0
    %2801 = vmatpush1.msra.mxu0 0.0
    %2802 = vmatprep.subr.mxu0 0.0
    %2803 = vmatpush1.msra.mxu0 0.0
    %2804 = vmatprep.mubr.f32.mxu0 0.0
    %2805 = vmatmul.mubr.f32.gmra.mrb[0].mxu0 %v2727
    %v2806 = vpop.f32.mrb[0].mxu0
    %v2807 = vadd.f32 %v2711, %v2806
    %v2808 = vpop.f32.mrb[0].mxu0
    %2809 = vmatprep.mubr.f32.mxu0 0.0
    %2810 = vmatmul.mubr.f32.gmra.mrb[0].mxu0 %v2729
    %v2811 = vpop.f32.mrb[0].mxu0
    %v2812 = vadd.f32 %v2711, %v2811
    %v2813 = vpop.f32.mrb[0].mxu0
    %2814 = vmatprep.mubr.f32.mxu0 0.0
    %2815 = vmatmul.mubr.f32.gmra.mrb[0].mxu0 %v2731
    %v2816 = vpop.f32.mrb[0].mxu0
    %v2817 = vadd.f32 %v2711, %v2816
    %v2818 = vpop.f32.mrb[0].mxu0
    %2819 = vmatprep.mubr.f32.mxu0 0.0
    %2820 = vmatmul.mubr.f32.gmra.mrb[0].mxu0 %v2733
    %v2821 = vpop.f32.mrb[0].mxu0
    %v2822 = vadd.f32 %v2711, %v2821
    %v2823 = vpop.f32.mrb[0].mxu0
    %2824 = vmatprep.mubr.f32.mxu0 0.0
    %2825 = vmatmul.mubr.f32.gmra.mrb[0].mxu0 %v2735
    %v2826 = vpop.f32.mrb[0].mxu0
    %v2827 = vadd.f32 %v2711, %v2826
    %v2828 = vpop.f32.mrb[0].mxu0
    %2829 = vdwg.mxu0
    %v2830 = vld [vmem:[%s1 + $0x160] sm:$0xff]
    %v2831 = vld [vmem:[%s1 + $0x170] sm:$0xff]
    %v2832 = vld [vmem:[%s1 + $0x180] sm:$0xff]
    %v2833 = vld [vmem:[%s1 + $0x190] sm:$0xff]
    %v2834 = vld [vmem:[%s1 + $0x1a0] sm:$0xff]
    %v2835 = vld [vmem:[%s1 + $0x1b0] sm:$0xff]
    %v2836 = vld [vmem:[%s1 + $0x1c0] sm:$0x3]
    %v2837 = vld [vmem:[%s1 + $0x1d0] ss:$0 sm:$0xff]
    %v2839 = vsel %vm65, %v2836, 0
    %2841 = vmatprep.subr.mxu0 0.0
    %2842 = vmatpush1.msra.mxu0 %v2830
    %2843 = vmatprep.subr.mxu0 0.0
    %2844 = vmatpush1.msra.mxu0 %v2831
    %2845 = vmatprep.subr.mxu0 0.0
    %2846 = vmatpush1.msra.mxu0 %v2832
    %2847 = vmatprep.subr.mxu0 0.0
    %2848 = vmatpush1.msra.mxu0 %v2833
    %2849 = vmatprep.subr.mxu0 0.0
    %2850 = vmatpush1.msra.mxu0 %v2834
    %2851 = vmatprep.subr.mxu0 0.0
    %2852 = vmatpush1.msra.mxu0 %v2835
    %2853 = vmatprep.subr.mxu0 0.0
    %2854 = vmatpush1.msra.mxu0 %v2839
    %2855 = vmatprep.subr.mxu0 0.0
    %2856 = vmatpush1.msra.mxu0 0.0
    %2857 = vmatprep.subr.mxu0 0.0
    %2858 = vmatpush1.msra.mxu0 0.0
    %2859 = vmatprep.subr.mxu0 0.0
    %2860 = vmatpush1.msra.mxu0 0.0
    %2861 = vmatprep.subr.mxu0 0.0
    %2862 = vmatpush1.msra.mxu0 0.0
    %2863 = vmatprep.subr.mxu0 0.0
    %2864 = vmatpush1.msra.mxu0 0.0
    %2865 = vmatprep.subr.mxu0 0.0
    %2866 = vmatpush1.msra.mxu0 0.0
    %2867 = vmatprep.subr.mxu0 0.0
    %2868 = vmatpush1.msra.mxu0 0.0
    %2869 = vmatprep.subr.mxu0 0.0
    %2870 = vmatpush1.msra.mxu0 0.0
    %2871 = vmatprep.subr.mxu0 0.0
    %2872 = vmatpush1.msra.mxu0 0.0
    %2873 = vmatprep.subr.mxu0 0.0
    %2874 = vmatpush1.msra.mxu0 0.0
    %2875 = vmatprep.subr.mxu0 0.0
    %2876 = vmatpush1.msra.mxu0 0.0
    %2877 = vmatprep.subr.mxu0 0.0
    %2878 = vmatpush1.msra.mxu0 0.0
    %2879 = vmatprep.subr.mxu0 0.0
    %2880 = vmatpush1.msra.mxu0 0.0
    %2881 = vmatprep.subr.mxu0 0.0
    %2882 = vmatpush1.msra.mxu0 0.0
    %2883 = vmatprep.subr.mxu0 0.0
    %2884 = vmatpush1.msra.mxu0 0.0
    %2885 = vmatprep.subr.mxu0 0.0
    %2886 = vmatpush1.msra.mxu0 0.0
    %2887 = vmatprep.subr.mxu0 0.0
    %2888 = vmatpush1.msra.mxu0 0.0
    %2889 = vmatprep.subr.mxu0 0.0
    %2890 = vmatpush1.msra.mxu0 0.0
    %2891 = vmatprep.subr.mxu0 0.0
    %2892 = vmatpush1.msra.mxu0 0.0
    %2893 = vmatprep.subr.mxu0 0.0
    %2894 = vmatpush1.msra.mxu0 0.0
    %2895 = vmatprep.subr.mxu0 0.0
    %2896 = vmatpush1.msra.mxu0 0.0
    %2897 = vmatprep.subr.mxu0 0.0
    %2898 = vmatpush1.msra.mxu0 0.0
    %2899 = vmatprep.subr.mxu0 0.0
    %2900 = vmatpush1.msra.mxu0 0.0
    %2901 = vmatprep.subr.mxu0 0.0
    %2902 = vmatpush1.msra.mxu0 0.0
    %2903 = vmatprep.subr.mxu0 0.0
    %2904 = vmatpush1.msra.mxu0 0.0
    %2905 = vmatprep.mubr.f32.mxu0 0.0
    %2906 = vmatmul.mubr.f32.gmra.mrb[0].mxu0 %v2727
    %v2907 = vpop.f32.mrb[0].mxu0
    %v2908 = vadd.f32 %v2837, %v2907
    %v2909 = vpop.f32.mrb[0].mxu0
    %2910 = vmatprep.mubr.f32.mxu0 0.0
    %2911 = vmatmul.mubr.f32.gmra.mrb[0].mxu0 %v2729
    %v2912 = vpop.f32.mrb[0].mxu0
    %v2913 = vadd.f32 %v2837, %v2912
    %v2914 = vpop.f32.mrb[0].mxu0
    %2915 = vmatprep.mubr.f32.mxu0 0.0
    %2916 = vmatmul.mubr.f32.gmra.mrb[0].mxu0 %v2731
    %v2917 = vpop.f32.mrb[0].mxu0
    %v2918 = vadd.f32 %v2837, %v2917
    %v2919 = vpop.f32.mrb[0].mxu0
    %2920 = vmatprep.mubr.f32.mxu0 0.0
    %2921 = vmatmul.mubr.f32.gmra.mrb[0].mxu0 %v2733
    %v2922 = vpop.f32.mrb[0].mxu0
    %v2923 = vadd.f32 %v2837, %v2922
    %v2924 = vpop.f32.mrb[0].mxu0
    %2925 = vmatprep.mubr.f32.mxu0 0.0
    %2926 = vmatmul.mubr.f32.gmra.mrb[0].mxu0 %v2735
    %v2927 = vpop.f32.mrb[0].mxu0
    %v2928 = vadd.f32 %v2837, %v2927
    %v2929 = vpop.f32.mrb[0].mxu0
    %2930 = vdwg.mxu0
    %v2931 = vtanh.pop %v2908
    %v2932 = vtanh.pop %v2913
    %v2933 = vtanh.pop %v2918
    %v2934 = vtanh.pop %v2923
    %v2935 = vtanh.pop %v2928
    %v2936 = vadd.f32 %v263, %v2931
    %v2937 = vadd.f32 %v264, %v2932
    %v2938 = vadd.f32 %v265, %v2933
    %v2939 = vadd.f32 %v266, %v2934
    %v2940 = vadd.f32 %v267, %v2935
    %v2941 = vtanh.pop %v2936
    %v2942 = vtanh.pop %v2937
    %v2943 = vtanh.pop %v2938
    %v2944 = vtanh.pop %v2939
    %v2945 = vtanh.pop %v2940
    %v2946 = vld [vmem:[%s1 + $0x1e0] sm:$0xff]
    %v2947 = vld [vmem:[%s1 + $0x1f0] sm:$0xff]
    %vm2948 = vcmask 130048
    %v2950 = vsel %vm2948, %v2941, 0
    %v2953 = vsel %vm2948, %v2942, 0
    %v2956 = vsel %vm2948, %v2943, 0
    %v2959 = vsel %vm2948, %v2944, 0
    %v2962 = vsel %vm2948, %v2945, 0
    %2964 = vmatprep.subr.mxu0 0.0
    %2965 = vmatpush1.msra.mxu0 %v2946
    %2966 = vmatprep.subr.mxu0 0.0
    %2967 = vmatpush1.msra.mxu0 %v2947
    %2968 = vmatprep.subr.mxu0 0.0
    %2969 = vmatpush1.msra.mxu0 0.0
    %2970 = vmatprep.subr.mxu0 0.0
    %2971 = vmatpush1.msra.mxu0 0.0
    %2972 = vmatprep.subr.mxu0 0.0
    %2973 = vmatpush1.msra.mxu0 0.0
    %2974 = vmatprep.subr.mxu0 0.0
    %2975 = vmatpush1.msra.mxu0 0.0
    %2976 = vmatprep.subr.mxu0 0.0
    %2977 = vmatpush1.msra.mxu0 0.0
    %2978 = vmatprep.subr.mxu0 0.0
    %2979 = vmatpush1.msra.mxu0 0.0
    %2980 = vmatprep.subr.mxu0 0.0
    %2981 = vmatpush1.msra.mxu0 0.0
    %2982 = vmatprep.subr.mxu0 0.0
    %2983 = vmatpush1.msra.mxu0 0.0
    %2984 = vmatprep.subr.mxu0 0.0
    %2985 = vmatpush1.msra.mxu0 0.0
    %2986 = vmatprep.subr.mxu0 0.0
    %2987 = vmatpush1.msra.mxu0 0.0
    %2988 = vmatprep.subr.mxu0 0.0
    %2989 = vmatpush1.msra.mxu0 0.0
    %2990 = vmatprep.subr.mxu0 0.0
    %2991 = vmatpush1.msra.mxu0 0.0
    %2992 = vmatprep.subr.mxu0 0.0
    %2993 = vmatpush1.msra.mxu0 0.0
    %2994 = vmatprep.subr.mxu0 0.0
    %2995 = vmatpush1.msra.mxu0 0.0
    %2996 = vmatprep.subr.mxu0 0.0
    %2997 = vmatpush1.msra.mxu0 0.0
    %2998 = vmatprep.subr.mxu0 0.0
    %2999 = vmatpush1.msra.mxu0 0.0
    %3000 = vmatprep.subr.mxu0 0.0
    %3001 = vmatpush1.msra.mxu0 0.0
    %3002 = vmatprep.subr.mxu0 0.0
    %3003 = vmatpush1.msra.mxu0 0.0
    %3004 = vmatprep.subr.mxu0 0.0
    %3005 = vmatpush1.msra.mxu0 0.0
    %3006 = vmatprep.subr.mxu0 0.0
    %3007 = vmatpush1.msra.mxu0 0.0
    %3008 = vmatprep.subr.mxu0 0.0
    %3009 = vmatpush1.msra.mxu0 0.0
    %3010 = vmatprep.subr.mxu0 0.0
    %3011 = vmatpush1.msra.mxu0 0.0
    %3012 = vmatprep.subr.mxu0 0.0
    %3013 = vmatpush1.msra.mxu0 0.0
    %3014 = vmatprep.subr.mxu0 0.0
    %3015 = vmatpush1.msra.mxu0 0.0
    %3016 = vmatprep.subr.mxu0 0.0
    %3017 = vmatpush1.msra.mxu0 0.0
    %3018 = vmatprep.subr.mxu0 0.0
    %3019 = vmatpush1.msra.mxu0 0.0
    %3020 = vmatprep.subr.mxu0 0.0
    %3021 = vmatpush1.msra.mxu0 0.0
    %3022 = vmatprep.subr.mxu0 0.0
    %3023 = vmatpush1.msra.mxu0 0.0
    %3024 = vmatprep.subr.mxu0 0.0
    %3025 = vmatpush1.msra.mxu0 0.0
    %3026 = vmatprep.subr.mxu0 0.0
    %3027 = vmatpush1.msra.mxu0 0.0
    %3028 = vmatprep.mubr.f32.mxu0 0.0
    %3029 = vmatmul.mubr.f32.gmra.mrb[0].mxu0 %v2950
    %v3030 = vpop.f32.mrb[0].mxu0
    %v3031 = vadd.f32 0.0, %v3030
    %v3032 = vpop.f32.mrb[0].mxu0
    %3033 = vmatprep.mubr.f32.mxu0 0.0
    %3034 = vmatmul.mubr.f32.gmra.mrb[0].mxu0 %v2953
    %v3035 = vpop.f32.mrb[0].mxu0
    %v3036 = vadd.f32 0.0, %v3035
    %v3037 = vpop.f32.mrb[0].mxu0
    %3038 = vmatprep.mubr.f32.mxu0 0.0
    %3039 = vmatmul.mubr.f32.gmra.mrb[0].mxu0 %v2956
    %v3040 = vpop.f32.mrb[0].mxu0
    %v3041 = vadd.f32 0.0, %v3040
    %v3042 = vpop.f32.mrb[0].mxu0
    %3043 = vmatprep.mubr.f32.mxu0 0.0
    %3044 = vmatmul.mubr.f32.gmra.mrb[0].mxu0 %v2959
    %v3045 = vpop.f32.mrb[0].mxu0
    %v3046 = vadd.f32 0.0, %v3045
    %v3047 = vpop.f32.mrb[0].mxu0
    %3048 = vmatprep.mubr.f32.mxu0 0.0
    %3049 = vmatmul.mubr.f32.gmra.mrb[0].mxu0 %v2962
    %v3050 = vpop.f32.mrb[0].mxu0
    %v3051 = vadd.f32 0.0, %v3050
    %v3052 = vpop.f32.mrb[0].mxu0
    %3053 = vdwg.mxu0
    %vm3054 = vcmask 7168
    %v3055 = vsel %vm3054, %v3031, -inf
    %v3056 = vsel %vm3054, %v3036, -inf
    %v3057 = vsel %vm3054, %v3041, -inf
    %v3058 = vsel %vm3054, %v3046, -inf
    %v3059 = vsel %vm3054, %v3051, -inf
    %v3060 = vmax.f32 %v3055, %v3059
    %v3061 = vmax.f32 %v3060, %v3056
    %v3062 = vmax.f32 %v3057, %v3058
    %v3063 = vmax.f32 %v3061, %v3062
    %v3064 = vrot.slane %v3063, 4
    %v3065 = vmax.f32 %v3063, %v3064
    %v3066 = vrot.slane %v3065, 2
    %v3067 = vmax.f32 %v3065, %v3066
    %v3068 = vrot.slane %v3067, 1
    %v3069 = vmax.f32 %v3067, %v3068
    %v3070 = vsub.f32 %v3031, %v3069
    %v3071 = vsub.f32 %v3036, %v3069
    %v3072 = vsub.f32 %v3041, %v3069
    %v3073 = vsub.f32 %v3046, %v3069
    %v3074 = vsub.f32 %v3051, %v3069
    %v3075 = vmul.f32 %v3070, 1.442695
    %v3076 = vpow.pop %v3075
    %v3077 = vmul.f32 %v3071, 1.442695
    %v3078 = vpow.pop %v3077
    %v3079 = vmul.f32 %v3072, 1.442695
    %v3080 = vpow.pop %v3079
    %v3081 = vmul.f32 %v3073, 1.442695
    %v3082 = vpow.pop %v3081
    %v3083 = vmul.f32 %v3074, 1.442695
    %v3084 = vpow.pop %v3083
    %v3085 = vsub.f32 %v12, %v2807
    %v3086 = vsub.f32 %v13, %v2812
    %v3087 = vsub.f32 %v14, %v2817
    %v3088 = vsub.f32 %v15, %v2822
    %v3089 = vsub.f32 %v16, %v2827
    %3091 = vset.pattern.permute.xlu0 0
    %3092 = vperm.xlu0 %3091, %v3076
    %v3093 = vpop.permute.xlu0 %3092
    %3096 = vset.pattern.permute.xlu0 0
    %3097 = vperm.xlu0 %3096, %v3078
    %v3098 = vpop.permute.xlu0 %3097
    %3101 = vset.pattern.permute.xlu0 0
    %3102 = vperm.xlu0 %3101, %v3080
    %v3103 = vpop.permute.xlu0 %3102
    %3106 = vset.pattern.permute.xlu0 0
    %3107 = vperm.xlu0 %3106, %v3082
    %v3108 = vpop.permute.xlu0 %3107
    %3111 = vset.pattern.permute.xlu0 0
    %3112 = vperm.xlu0 %3111, %v3084
    %v3113 = vpop.permute.xlu0 %3112
    %v3115 = vmul.f32 %v3093, %v3085
    %v3116 = vmul.f32 %v3098, %v3086
    %v3117 = vmul.f32 %v3103, %v3087
    %v3118 = vmul.f32 %v3108, %v3088
    %v3119 = vmul.f32 %v3113, %v3089
    %3125 = vrot.lane.b32.xlu0 %v3115, 1
    %v3126 = vpop.permute.xlu0 %3125
    %3127 = vrot.lane.b32.xlu0 %v3116, 1
    %v3128 = vpop.permute.xlu0 %3127
    %3129 = vrot.lane.b32.xlu0 %v3117, 1
    %v3130 = vpop.permute.xlu0 %3129
    %3131 = vrot.lane.b32.xlu0 %v3118, 1
    %v3132 = vpop.permute.xlu0 %3131
    %3133 = vrot.lane.b32.xlu0 %v3119, 1
    %v3134 = vpop.permute.xlu0 %3133
    %3145 = vrot.lane.b32.xlu0 %v2807, 11
    %v3146 = vpop.permute.xlu0 %3145
    %3147 = vrot.lane.b32.xlu0 %v2812, 11
    %v3148 = vpop.permute.xlu0 %3147
    %3149 = vrot.lane.b32.xlu0 %v2817, 11
    %v3150 = vpop.permute.xlu0 %3149
    %3151 = vrot.lane.b32.xlu0 %v2822, 11
    %v3152 = vpop.permute.xlu0 %3151
    %3153 = vrot.lane.b32.xlu0 %v2827, 11
    %v3154 = vpop.permute.xlu0 %3153
    %v3160 = vsel %vm3054, %v3076, %v3126
    %v3161 = vsel %vm3054, %v3078, %v3128
    %v3162 = vsel %vm3054, %v3080, %v3130
    %v3163 = vsel %vm3054, %v3082, %v3132
    %v3164 = vsel %vm3054, %v3084, %v3134
    %vm3165 = vcmask 89088
    %v3166 = vsel %vm3165, %v3160, %v3146
    %v3167 = vsel %vm3165, %v3161, %v3148
    %v3168 = vsel %vm3165, %v3162, %v3150
    %v3169 = vsel %vm3165, %v3163, %v3152
    %v3170 = vsel %vm3165, %v3164, %v3154
    %v3171 = vlaneseq
    %v3172 = vand.u32 %v3171, 127
    %v3173 = vlaneseq
    %v3174 = vshrl.u32 %v3173, 7
    %vm3175 = vcmp.lt.s32.totalorder %v3172, 0
    %v3176 = vsub.s32 0, %v3172
    %v3177 = vsel %vm3175, %v3176, %v3172
    %v3178 = vshrl.u32 %v3177, 1
    %v3179 = vand.u32 %v3177, 1
    %v3180 = vsub.s32 0, %v3179
    %v3181 = vsel %vm3175, %v3180, %v3179
    %vm3182 = vcmp.ne.s32.totalorder %v3181, 0
    %vm3183 = vcmp.lt.s32.totalorder %v3181, 0
    %vm3184 = vmand %vm3183, %vm3182
    %v3185 = vadd.s32 %v3181, 2
    %v3186 = vsel %vm3184, %v3185, %v3181
    %vm3187 = vcmp.eq.s32.totalorder %v3186, %v3174
    %v3188 = vsel %vm3187, 1, 0
    %v3189 = vcvt.s32.f32 %v3188
    %vm3190 = vcmask 326656
    %v3192 = vsel %vm3190, %v3189, 0
    %3194 = vmatprep.subr.mxu0 0.0
    %3195 = vmatpush1.msra.mxu0 %v3166
    %3196 = vmatprep.subr.mxu0 0.0
    %3197 = vmatpush1.msra.mxu0 %v3167
    %3198 = vmatprep.subr.mxu0 0.0
    %3199 = vmatpush1.msra.mxu0 %v3168
    %3200 = vmatprep.subr.mxu0 0.0
    %3201 = vmatpush1.msra.mxu0 %v3169
    %3202 = vmatprep.subr.mxu0 0.0
    %3203 = vmatpush1.msra.mxu0 %v3170
    %3204 = vmatprep.subr.mxu0 0.0
    %3205 = vmatpush1.msra.mxu0 0.0
    %3206 = vmatprep.subr.mxu0 0.0
    %3207 = vmatpush1.msra.mxu0 0.0
    %3208 = vmatprep.subr.mxu0 0.0
    %3209 = vmatpush1.msra.mxu0 0.0
    %3210 = vmatprep.subr.mxu0 0.0
    %3211 = vmatpush1.msra.mxu0 0.0
    %3212 = vmatprep.subr.mxu0 0.0
    %3213 = vmatpush1.msra.mxu0 0.0
    %3214 = vmatprep.subr.mxu0 0.0
    %3215 = vmatpush1.msra.mxu0 0.0
    %3216 = vmatprep.subr.mxu0 0.0
    %3217 = vmatpush1.msra.mxu0 0.0
    %3218 = vmatprep.subr.mxu0 0.0
    %3219 = vmatpush1.msra.mxu0 0.0
    %3220 = vmatprep.subr.mxu0 0.0
    %3221 = vmatpush1.msra.mxu0 0.0
    %3222 = vmatprep.subr.mxu0 0.0
    %3223 = vmatpush1.msra.mxu0 0.0
    %3224 = vmatprep.subr.mxu0 0.0
    %3225 = vmatpush1.msra.mxu0 0.0
    %3226 = vmatprep.subr.mxu0 0.0
    %3227 = vmatpush1.msra.mxu0 0.0
    %3228 = vmatprep.subr.mxu0 0.0
    %3229 = vmatpush1.msra.mxu0 0.0
    %3230 = vmatprep.subr.mxu0 0.0
    %3231 = vmatpush1.msra.mxu0 0.0
    %3232 = vmatprep.subr.mxu0 0.0
    %3233 = vmatpush1.msra.mxu0 0.0
    %3234 = vmatprep.subr.mxu0 0.0
    %3235 = vmatpush1.msra.mxu0 0.0
    %3236 = vmatprep.subr.mxu0 0.0
    %3237 = vmatpush1.msra.mxu0 0.0
    %3238 = vmatprep.subr.mxu0 0.0
    %3239 = vmatpush1.msra.mxu0 0.0
    %3240 = vmatprep.subr.mxu0 0.0
    %3241 = vmatpush1.msra.mxu0 0.0
    %3242 = vmatprep.subr.mxu0 0.0
    %3243 = vmatpush1.msra.mxu0 0.0
    %3244 = vmatprep.subr.mxu0 0.0
    %3245 = vmatpush1.msra.mxu0 0.0
    %3246 = vmatprep.subr.mxu0 0.0
    %3247 = vmatpush1.msra.mxu0 0.0
    %3248 = vmatprep.subr.mxu0 0.0
    %3249 = vmatpush1.msra.mxu0 0.0
    %3250 = vmatprep.subr.mxu0 0.0
    %3251 = vmatpush1.msra.mxu0 0.0
    %3252 = vmatprep.subr.mxu0 0.0
    %3253 = vmatpush1.msra.mxu0 0.0
    %3254 = vmatprep.subr.mxu0 0.0
    %3255 = vmatpush1.msra.mxu0 0.0
    %3256 = vmatprep.subr.mxu0 0.0
    %3257 = vmatpush1.msra.mxu0 0.0
    %3258 = vmatprep.mubr.f32.mxu0 0.0
    %3259 = vmatmul.mubr.f32.gmra.mrb[0].mxu0 %v3192
    %v3260 = vpop.f32.mrb[0].mxu0
    %v3261 = vadd.f32 0.0, %v3260
    %v3262 = vpop.f32.mrb[0].mxu0
    %3263 = vdwg.mxu0
    %v3264 = vrcp.pop %v3261
    %3266 = vset.pattern.permute.xlu0 0
    %3267 = vperm.xlu0 %3266, %v3264
    %v3268 = vpop.permute.xlu0 %3267
    %v3270 = vmul.f32 %v3261, %v3268
    %3272 = vrot.lane.b32.xlu0 %v3270, 10
    %v3273 = vpop.permute.xlu0 %3272
    %v3275 = vadd.f32 %v3261, %v3273
    %v3276 = vld [vmem:[%s1 + $0x200] sm:$0xff]
    %v3277 = vld [vmem:[%s1 + $0x210] sm:$0x3]
    %v3278 = vld [vmem:[%s1 + $0x220] ss:$0 sm:$0xff]
    %3280 = vrot.lane.b32.xlu0 %v3275, 117
    %v3281 = vpop.permute.xlu0 %3280
    %v3282 = vsel %vm49, %v3281, 0
    %v3285 = vsel %vm65, %v3277, 0
    %3287 = vmatprep.subr.mxu0 0.0
    %3288 = vmatpush1.msra.mxu0 %v3276
    %3289 = vmatprep.subr.mxu0 0.0
    %3290 = vmatpush1.msra.mxu0 %v3285
    %3291 = vmatprep.subr.mxu0 0.0
    %3292 = vmatpush1.msra.mxu0 0.0
    %3293 = vmatprep.subr.mxu0 0.0
    %3294 = vmatpush1.msra.mxu0 0.0
    %3295 = vmatprep.subr.mxu0 0.0
    %3296 = vmatpush1.msra.mxu0 0.0
    %3297 = vmatprep.subr.mxu0 0.0
    %3298 = vmatpush1.msra.mxu0 0.0
    %3299 = vmatprep.subr.mxu0 0.0
    %3300 = vmatpush1.msra.mxu0 0.0
    %3301 = vmatprep.subr.mxu0 0.0
    %3302 = vmatpush1.msra.mxu0 0.0
    %3303 = vmatprep.subr.mxu0 0.0
    %3304 = vmatpush1.msra.mxu0 0.0
    %3305 = vmatprep.subr.mxu0 0.0
    %3306 = vmatpush1.msra.mxu0 0.0
    %3307 = vmatprep.subr.mxu0 0.0
    %3308 = vmatpush1.msra.mxu0 0.0
    %3309 = vmatprep.subr.mxu0 0.0
    %3310 = vmatpush1.msra.mxu0 0.0
    %3311 = vmatprep.subr.mxu0 0.0
    %3312 = vmatpush1.msra.mxu0 0.0
    %3313 = vmatprep.subr.mxu0 0.0
    %3314 = vmatpush1.msra.mxu0 0.0
    %3315 = vmatprep.subr.mxu0 0.0
    %3316 = vmatpush1.msra.mxu0 0.0
    %3317 = vmatprep.subr.mxu0 0.0
    %3318 = vmatpush1.msra.mxu0 0.0
    %3319 = vmatprep.subr.mxu0 0.0
    %3320 = vmatpush1.msra.mxu0 0.0
    %3321 = vmatprep.subr.mxu0 0.0
    %3322 = vmatpush1.msra.mxu0 0.0
    %3323 = vmatprep.subr.mxu0 0.0
    %3324 = vmatpush1.msra.mxu0 0.0
    %3325 = vmatprep.subr.mxu0 0.0
    %3326 = vmatpush1.msra.mxu0 0.0
    %3327 = vmatprep.subr.mxu0 0.0
    %3328 = vmatpush1.msra.mxu0 0.0
    %3329 = vmatprep.subr.mxu0 0.0
    %3330 = vmatpush1.msra.mxu0 0.0
    %3331 = vmatprep.subr.mxu0 0.0
    %3332 = vmatpush1.msra.mxu0 0.0
    %3333 = vmatprep.subr.mxu0 0.0
    %3334 = vmatpush1.msra.mxu0 0.0
    %3335 = vmatprep.subr.mxu0 0.0
    %3336 = vmatpush1.msra.mxu0 0.0
    %3337 = vmatprep.subr.mxu0 0.0
    %3338 = vmatpush1.msra.mxu0 0.0
    %3339 = vmatprep.subr.mxu0 0.0
    %3340 = vmatpush1.msra.mxu0 0.0
    %3341 = vmatprep.subr.mxu0 0.0
    %3342 = vmatpush1.msra.mxu0 0.0
    %3343 = vmatprep.subr.mxu0 0.0
    %3344 = vmatpush1.msra.mxu0 0.0
    %3345 = vmatprep.subr.mxu0 0.0
    %3346 = vmatpush1.msra.mxu0 0.0
    %3347 = vmatprep.subr.mxu0 0.0
    %3348 = vmatpush1.msra.mxu0 0.0
    %3349 = vmatprep.subr.mxu0 0.0
    %3350 = vmatpush1.msra.mxu0 0.0
    %3351 = vmatprep.mubr.f32.mxu0 0.0
    %3352 = vmatmul.mubr.f32.gmra.mrb[0].mxu0 %v3282
    %v3353 = vpop.f32.mrb[0].mxu0
    %v3354 = vadd.f32 %v3278, %v3353
    %v3355 = vpop.f32.mrb[0].mxu0
    %3356 = vdwg.mxu0
    %vm3357 = vcmask 74752
    %3358 = vst.msk [vmem:[#allocation2] sm:$0x3] %vm3357, %v3354
    // Predicated region
    $region10: #{tpu_custom_call.1} parent=1 // pred_check
      _
    $region11: #{tpu_custom_call.1} parent=1 // pred_check_branch
      %3360 = sbr.rel (0) target = $region13
    $region12: #{tpu_custom_call.1} parent=1 // pred_region
      %s3362 = ssub.s32 32, 32
      %3363 = vsyncadd [#allocation3], %s3362
      %s3365 = sshll.u32 [#allocation2], 4
      %s3366 = int_to_ptr.vmem [resolvable:$true] %s3365
      %3368 = dma.vmem_to_hbm [thread:$0]  %s3366, 32, %s2, [#allocation3]
    $region13: #{tpu_custom_call.1} parent=1 // pred_fallthru
      _
    // Predicated region
    $region14: #{tpu_custom_call.1} parent=1 // pred_check
      _
    $region15: #{tpu_custom_call.1} parent=1 // pred_check_branch
      %3370 = sbr.rel (0) target = $region17
    $region16: #{tpu_custom_call.1} parent=1 // pred_region
      %3371 = dma.done [#allocation3], 32
    $region17: #{tpu_custom_call.1} parent=1 // pred_fallthru
      _
    %3372 = vsyncpa [#allocation3], 1

</llo_original>
